<compile_context>
chip_gen: v6e
topology: v6e:2x2x1
jax: 0.10.0
libtpu: 0.0.40
codegen_flags: <defaults>
</compile_context>

<pallas_src>
import jax
import jax.numpy as jnp
from jax import lax
from jax.experimental import pallas as pl
from jax.experimental.pallas import tpu as pltpu

DIM = 32
EPS_BN = 1e-5
EPS_NORM = 1e-12


# ----------------------------- Pallas kernels ------------------------------

def _convt_bn_relu_kernel(p_ref, w_ref, scale_ref, shift_ref, o_ref):
    # (tm, 4*Cin) bf16 @ (4*Cin, 4*Cout) bf16 on the MXU (f32 accumulate),
    # fused per-column BN affine + ReLU epilogue in f32.
    acc = jnp.dot(p_ref[...], w_ref[...], preferred_element_type=jnp.float32)
    y = acc * scale_ref[...] + shift_ref[...]
    o_ref[...] = jnp.maximum(y, 0.0).astype(o_ref.dtype)


def _convt_bn_relu_conv1x1_l2norm_kernel(p_ref, w_ref, scale_ref, shift_ref,
                                         w1_ref, b1_ref, mask_ref, o_ref):
    # Layer-3 ConvT + BN + ReLU fused with the 1x1-conv head and the
    # per-location (per 32-lane group) L2 normalization.
    acc = jnp.dot(p_ref[...], w_ref[...], preferred_element_type=jnp.float32)
    h = jnp.maximum(acc * scale_ref[...] + shift_ref[...], 0.0)
    # Block-diagonal (4C, 4C) head weight: each 32-lane group is one spatial
    # location's 32-channel vector -> 1x1 conv per group.  Kept in f32 so the
    # unit-norm property of the output holds to f32 precision.
    y = jnp.dot(h, w1_ref[...], preferred_element_type=jnp.float32) + b1_ref[...]
    # Per-group sum of squares via a block-diagonal ones mask matmul (avoids
    # cross-lane reshapes); normalize with rsqrt on the EUP.
    ss = jnp.dot(y * y, mask_ref[...], preferred_element_type=jnp.float32)
    inv = lax.rsqrt(jnp.maximum(ss, EPS_NORM * EPS_NORM))
    o_ref[...] = (y * inv).astype(o_ref.dtype)


# ----------------------------- launch helpers ------------------------------

def _round_up(x, m):
    return ((x + m - 1) // m) * m


def _cdiv(a, b):
    return (a + b - 1) // b


def _grid_and_tile(m, max_tm=1024):
    # At least 2 grid steps (megacore 'parallel' axes shard across cores),
    # tile a multiple of 16 (safe for bf16 (16,128) packing and f32 (8,128)).
    g = max(2, _cdiv(m, max_tm))
    tm = _round_up(_cdiv(m, g), 16)
    return g, tm, g * tm


def matmul_bn_relu(patches, w_mat, scale, shift):
    m, k = patches.shape
    nc = w_mat.shape[1]
    g, tm, m_pad = _grid_and_tile(m)
    if m_pad != m:
        patches = jnp.pad(patches, ((0, m_pad - m), (0, 0)))
    const = lambda i: (0, 0)
    out = pl.pallas_call(
        _convt_bn_relu_kernel,
        out_shape=jax.ShapeDtypeStruct((m_pad, nc), jnp.float32),
        grid_spec=pltpu.PrefetchScalarGridSpec(
            num_scalar_prefetch=0,
            grid=(g,),
            in_specs=[
                pl.BlockSpec((tm, k), lambda i: (i, 0)),
                pl.BlockSpec((k, nc), const),
                pl.BlockSpec((1, nc), const),
                pl.BlockSpec((1, nc), const),
            ],
            out_specs=pl.BlockSpec((tm, nc), lambda i: (i, 0)),
        ),
        compiler_params=pltpu.CompilerParams(
            dimension_semantics=("parallel",),
            vmem_limit_bytes=32 * 1024 * 1024),
    )(patches.astype(jnp.bfloat16), w_mat.astype(jnp.bfloat16),
      scale.astype(jnp.float32), shift.astype(jnp.float32))
    return out[:m]


def matmul_bn_relu_conv1x1_l2norm(patches, w_mat, scale, shift, w1_bd, b1, mask):
    m, k = patches.shape
    nc = w_mat.shape[1]
    g, tm, m_pad = _grid_and_tile(m)
    if m_pad != m:
        patches = jnp.pad(patches, ((0, m_pad - m), (0, 0)))
    const = lambda i: (0, 0)
    out = pl.pallas_call(
        _convt_bn_relu_conv1x1_l2norm_kernel,
        out_shape=jax.ShapeDtypeStruct((m_pad, nc), jnp.float32),
        grid_spec=pltpu.PrefetchScalarGridSpec(
            num_scalar_prefetch=0,
            grid=(g,),
            in_specs=[
                pl.BlockSpec((tm, k), lambda i: (i, 0)),
                pl.BlockSpec((k, nc), const),
                pl.BlockSpec((1, nc), const),
                pl.BlockSpec((1, nc), const),
                pl.BlockSpec((nc, nc), const),
                pl.BlockSpec((1, nc), const),
                pl.BlockSpec((nc, nc), const),
            ],
            out_specs=pl.BlockSpec((tm, nc), lambda i: (i, 0)),
        ),
        compiler_params=pltpu.CompilerParams(
            dimension_semantics=("parallel",),
            vmem_limit_bytes=32 * 1024 * 1024),
    )(patches.astype(jnp.bfloat16), w_mat.astype(jnp.bfloat16),
      scale.astype(jnp.float32), shift.astype(jnp.float32),
      w1_bd.astype(jnp.float32), b1.astype(jnp.float32),
      mask.astype(jnp.float32))
    return out[:m]


# ------------------------ JAX glue (sub-pixel im2col) -----------------------

def subpixel_patches(x_nhwc):
    """Patch matrix for the sub-pixel formulation of ConvTranspose2d(4,2,1).

    Patch-grid location (p, q) (p in [0,H], q in [0,W]) holds the 2x2 window
    x[p-1:p+1, q-1:q+1] (zero padded).  Returns (N*(H+1)*(W+1), 4*C) in bf16
    with row-channel ordering (dy, dx, cin)."""
    n, h, w, c = x_nhwc.shape
    xp = jnp.pad(x_nhwc.astype(jnp.bfloat16), ((0, 0), (1, 1), (1, 1), (0, 0)))
    gp, gq = h + 1, w + 1
    taps = [xp[:, dy:dy + gp, dx:dx + gq, :] for dy in range(2) for dx in range(2)]
    patches = jnp.concatenate(taps, axis=-1)                 # (N, gp, gq, 4*C)
    return patches.reshape(n * gp * gq, 4 * c), (n, gp, gq)


def convtranspose_subpixel_weight(w_t):
    """PyTorch ConvTranspose2d weight (Cin, Cout, 4, 4) -> (4*Cin, 4*Cout).

    Rows ordered (dy, dx, cin) to match subpixel_patches; columns ordered
    (ry, rx, cout) = the 4 output parities packed along the channel axis.
    Tap selection: output parity (ry,rx) at (a,b) uses input (a-1+ry+dy,
    b-1+rx+dx) with kernel index ky = 3 - ry - 2*dy (and likewise kx)."""
    rows = []
    for dy in range(2):
        for dx in range(2):
            cols = []
            for ry in range(2):
                for rx in range(2):
                    cols.append(w_t[:, :, 3 - ry - 2 * dy, 3 - rx - 2 * dx])
            rows.append(jnp.concatenate(cols, axis=1))       # (Cin, 4*Cout)
    return jnp.concatenate(rows, axis=0)                     # (4*Cin, 4*Cout)


def pixel_shuffle(y_flat, n, gp, gq, c):
    """(N*gp*gq, 4*C) with channel groups (ry, rx, cout) -> NHWC ConvT output
    of shape (N, 2*(gp-1), 2*(gq-1), C).  Border patch-grid rows that do not
    map to a valid output for a given parity are discarded.  Implemented with
    slices + stack + transpose + reshape (no scatter .at[].set)."""
    y = y_flat.reshape(n, gp, gq, 2, 2, c)
    h, w = gp - 1, gq - 1
    # slabs[ry, rx, n, i, j, c] = y[n, i+ry, j+rx, ry, rx, c]
    slabs = jnp.stack([
        jnp.stack([y[:, ry:ry + h, rx:rx + w, ry, rx, :] for rx in range(2)],
                  axis=0)
        for ry in range(2)], axis=0)                          # (2, 2, N, H, W, C)
    out = jnp.transpose(slabs, (2, 3, 0, 4, 1, 5))            # (N, H, 2, W, 2, C)
    return out.reshape(n, 2 * h, 2 * w, c)


# ----------------------------- Model ---------------------------------------

def init_params(key, dim=DIM):
    keys = jax.random.split(key, 20)
    ki = 0
    layers = []
    for _ in range(3):
        w = 0.1 * jax.random.normal(keys[ki], (dim, dim, 4, 4), jnp.float32); ki += 1
        b = 0.1 * jax.random.normal(keys[ki], (dim,), jnp.float32); ki += 1
        gamma = 1.0 + 0.1 * jax.random.normal(keys[ki], (dim,), jnp.float32); ki += 1
        beta = 0.1 * jax.random.normal(keys[ki], (dim,), jnp.float32); ki += 1
        mean = 0.05 * jax.random.normal(keys[ki], (dim,), jnp.float32); ki += 1
        var = 0.5 + jnp.abs(jax.random.normal(keys[ki], (dim,), jnp.float32)); ki += 1
        layers.append((w, b, gamma, beta, mean, var))
    w1 = 0.1 * jax.random.normal(keys[ki], (dim, dim, 1, 1), jnp.float32); ki += 1
    b1 = 0.1 * jax.random.normal(keys[ki], (dim,), jnp.float32); ki += 1
    return {"layers": layers, "head": (w1, b1)}


def projection_head_forward(x_nchw, params):
    x = jnp.transpose(x_nchw, (0, 2, 3, 1)).astype(jnp.float32)    # NHWC
    c = x.shape[-1]
    layers = params["layers"]
    w1, b1 = params["head"]

    def bn_affine(b, gamma, beta, mean, var):
        scale = gamma / jnp.sqrt(var + EPS_BN)                     # eval-mode BN
        shift = (b - mean) * scale + beta                          # conv bias folded
        return (jnp.tile(scale, 4).reshape(1, 4 * c),
                jnp.tile(shift, 4).reshape(1, 4 * c))

    # Layers 1-2: ConvTranspose + BN + ReLU.
    for (w_t, b, gamma, beta, mean, var) in layers[:2]:
        patches, (n, gp, gq) = subpixel_patches(x)
        scale4, shift4 = bn_affine(b, gamma, beta, mean, var)
        y = matmul_bn_relu(patches, convtranspose_subpixel_weight(w_t),
                           scale4, shift4)
        x = pixel_shuffle(y, n, gp, gq, c)

    # Layer 3: ConvTranspose + BN + ReLU fused with 1x1-conv head + L2 norm.
    (w_t, b, gamma, beta, mean, var) = layers[2]
    patches, (n, gp, gq) = subpixel_patches(x)
    scale4, shift4 = bn_affine(b, gamma, beta, mean, var)
    w1_mat = jnp.transpose(w1[:, :, 0, 0], (1, 0))                 # (Cin, Cout)
    w1_bd = jnp.kron(jnp.eye(4, dtype=jnp.float32), w1_mat)        # block-diag
    b1_4 = jnp.tile(b1, 4).reshape(1, 4 * c)
    mask = jnp.kron(jnp.eye(4, dtype=jnp.float32),
                    jnp.ones((c, c), jnp.float32))                 # group sum-sq
    y = matmul_bn_relu_conv1x1_l2norm(
        patches, convtranspose_subpixel_weight(w_t), scale4, shift4,
        w1_bd, b1_4, mask)
    out = pixel_shuffle(y, n, gp, gq, c)                           # (N, 2H, 2W, C)
    return jnp.transpose(out, (0, 3, 1, 2))                        # back to NCHW


# ----------------------------- Pure-JAX reference ---------------------------

def ref_forward(x_nchw, params):
    y = x_nchw.astype(jnp.float32)
    for (w_t, b, gamma, beta, mean, var) in params["layers"]:
        w_conv = jnp.transpose(w_t, (1, 0, 2, 3))[:, :, ::-1, ::-1]
        y = jax.lax.conv_general_dilated(
            y, w_conv, window_strides=(1, 1), padding=((2, 2), (2, 2)),
            lhs_dilation=(2, 2), dimension_numbers=("NCHW", "OIHW", "NCHW"))
        y = y + b[None, :, None, None]
        scale = (gamma / jnp.sqrt(var + EPS_BN))[None, :, None, None]
        y = (y - mean[None, :, None, None]) * scale + beta[None, :, None, None]
        y = jnp.maximum(y, 0.0)
    w1, b1 = params["head"]
    y = jax.lax.conv_general_dilated(
        y, w1, (1, 1), ((0, 0), (0, 0)),
        dimension_numbers=("NCHW", "OIHW", "NCHW")) + b1[None, :, None, None]
    nrm = jnp.sqrt(jnp.sum(y * y, axis=1, keepdims=True))
    return y / jnp.maximum(nrm, EPS_NORM)


if __name__ == "__main__":
    key = jax.random.PRNGKey(0)
    pkey, xkey = jax.random.split(key)
    params = init_params(pkey, DIM)
    x = jax.random.normal(xkey, (2, DIM, 8, 8), jnp.float32)       # NCHW input

    forward = jax.jit(projection_head_forward)
    out = forward(x, params)
    out = jax.block_until_ready(out)

    assert out.shape == (2, DIM, 64, 64), out.shape
    # Every spatial location should be unit-norm across channels.
    norms = jnp.sqrt(jnp.sum(out * out, axis=1))
    assert bool(jnp.allclose(norms, 1.0, atol=1e-3)), "L2 norm check failed"
    # Check against pure-JAX f32 reference (tolerance absorbs bf16 operands).
    ref = ref_forward(x, params)
    assert bool(jnp.allclose(out, ref, atol=3e-2, rtol=3e-2)), \
        float(jnp.max(jnp.abs(out - ref)))

    print("KERNEL_OK")
</pallas_src>

<mosaic_0001>
module attributes {stable_mosaic.version = 11 : i64} {
  func.func @_convt_bn_relu_kernel(%arg0: i32, %arg1: memref<96x128xbf16, #tpu.memory_space<vmem>>, %arg2: memref<128x128xbf16, #tpu.memory_space<vmem>>, %arg3: memref<1x128xf32, #tpu.memory_space<vmem>>, %arg4: memref<1x128xf32, #tpu.memory_space<vmem>>, %arg5: memref<96x128xf32, #tpu.memory_space<vmem>>) attributes {dimension_semantics = [#tpu.dimension_semantics<parallel>], iteration_bounds = array<i64: 2>, scalar_prefetch = 0 : i64, scratch_operands = 0 : i64, tpu.core_type = #tpu.core_type<tc>, window_params = [{transform_indices = @transform_0, window_bounds = array<i64: 96, 128>}, {pipeline_mode = #tpu.pipeline_mode<synchronous>, transform_indices = @transform_1, window_bounds = array<i64: 128, 128>}, {pipeline_mode = #tpu.pipeline_mode<synchronous>, transform_indices = @transform_2, window_bounds = array<i64: 1, 128>}, {pipeline_mode = #tpu.pipeline_mode<synchronous>, transform_indices = @transform_3, window_bounds = array<i64: 1, 128>}, {transform_indices = @transform_4, window_bounds = array<i64: 96, 128>}]} {
    %c0 = arith.constant 0 : index
    %c0_0 = arith.constant 0 : index
    %0 = vector.load %arg1[%c0, %c0_0] : memref<96x128xbf16, #tpu.memory_space<vmem>>, vector<96x128xbf16>
    %c0_1 = arith.constant 0 : index
    %c0_2 = arith.constant 0 : index
    %1 = vector.load %arg2[%c0_1, %c0_2] : memref<128x128xbf16, #tpu.memory_space<vmem>>, vector<128x128xbf16>
    %cst = arith.constant dense<0.000000e+00> : vector<96x128xf32>
    %2 = tpu.matmul %0, %1, %cst {dimension_numbers = #tpu.dot_dimension_numbers<[1], [0], [0], [1], [0, 0, 1, 1], [], []>} : vector<96x128xbf16>, vector<128x128xbf16>, vector<96x128xf32> -> vector<96x128xf32>
    %c0_3 = arith.constant 0 : index
    %c0_4 = arith.constant 0 : index
    %3 = vector.load %arg3[%c0_3, %c0_4] : memref<1x128xf32, #tpu.memory_space<vmem>>, vector<1x128xf32>
    %4 = vector.broadcast %3 : vector<1x128xf32> to vector<96x128xf32>
    %5 = arith.mulf %2, %4 : vector<96x128xf32>
    %c0_5 = arith.constant 0 : index
    %c0_6 = arith.constant 0 : index
    %6 = vector.load %arg4[%c0_5, %c0_6] : memref<1x128xf32, #tpu.memory_space<vmem>>, vector<1x128xf32>
    %7 = vector.broadcast %6 : vector<1x128xf32> to vector<96x128xf32>
    %8 = arith.addf %5, %7 : vector<96x128xf32>
    %cst_7 = arith.constant 0.000000e+00 : f32
    %9 = vector.broadcast %cst_7 : f32 to vector<96x128xf32>
    %10 = arith.maximumf %8, %9 : vector<96x128xf32>
    %c0_8 = arith.constant 0 : index
    %c0_9 = arith.constant 0 : index
    %11 = vector.load %arg5[%c0_8, %c0_9] : memref<96x128xf32, #tpu.memory_space<vmem>>, vector<96x128xf32>
    tpu.vector_store %arg5[%c0_8, %c0_9], %10 {strides = array<i32>} : memref<96x128xf32, #tpu.memory_space<vmem>>, vector<96x128xf32>,
    return
  }
  func.func @transform_0(%arg0: i32) -> (i32, i32) {
    %c0_i32 = arith.constant 0 : i32
    %c0_i32_0 = arith.constant 0 : i32
    return %arg0, %c0_i32 : i32, i32
  }
  func.func @transform_1(%arg0: i32) -> (i32, i32) {
    %c0_i32 = arith.constant 0 : i32
    %c0_i32_0 = arith.constant 0 : i32
    %c0_i32_1 = arith.constant 0 : i32
    return %c0_i32, %c0_i32_0 : i32, i32
  }
  func.func @transform_2(%arg0: i32) -> (i32, i32) {
    %c0_i32 = arith.constant 0 : i32
    %c0_i32_0 = arith.constant 0 : i32
    %c0_i32_1 = arith.constant 0 : i32
    return %c0_i32, %c0_i32_0 : i32, i32
  }
  func.func @transform_3(%arg0: i32) -> (i32, i32) {
    %c0_i32 = arith.constant 0 : i32
    %c0_i32_0 = arith.constant 0 : i32
    %c0_i32_1 = arith.constant 0 : i32
    return %c0_i32, %c0_i32_0 : i32, i32
  }
  func.func @transform_4(%arg0: i32) -> (i32, i32) {
    %c0_i32 = arith.constant 0 : i32
    %c0_i32_0 = arith.constant 0 : i32
    return %arg0, %c0_i32 : i32, i32
  }
}

module attributes {stable_mosaic.version = 11 : i64} {
  func.func @_convt_bn_relu_kernel(%arg0: i32, %arg1: memref<304x128xbf16, #tpu.memory_space<vmem>>, %arg2: memref<128x128xbf16, #tpu.memory_space<vmem>>, %arg3: memref<1x128xf32, #tpu.memory_space<vmem>>, %arg4: memref<1x128xf32, #tpu.memory_space<vmem>>, %arg5: memref<304x128xf32, #tpu.memory_space<vmem>>) attributes {dimension_semantics = [#tpu.dimension_semantics<parallel>], iteration_bounds = array<i64: 2>, scalar_prefetch = 0 : i64, scratch_operands = 0 : i64, tpu.core_type = #tpu.core_type<tc>, window_params = [{transform_indices = @transform_0, window_bounds = array<i64: 304, 128>}, {pipeline_mode = #tpu.pipeline_mode<synchronous>, transform_indices = @transform_1, window_bounds = array<i64: 128, 128>}, {pipeline_mode = #tpu.pipeline_mode<synchronous>, transform_indices = @transform_2, window_bounds = array<i64: 1, 128>}, {pipeline_mode = #tpu.pipeline_mode<synchronous>, transform_indices = @transform_3, window_bounds = array<i64: 1, 128>}, {transform_indices = @transform_4, window_bounds = array<i64: 304, 128>}]} {
    %c0 = arith.constant 0 : index
    %c0_0 = arith.constant 0 : index
    %0 = vector.load %arg1[%c0, %c0_0] : memref<304x128xbf16, #tpu.memory_space<vmem>>, vector<304x128xbf16>
    %c0_1 = arith.constant 0 : index
    %c0_2 = arith.constant 0 : index
    %1 = vector.load %arg2[%c0_1, %c0_2] : memref<128x128xbf16, #tpu.memory_space<vmem>>, vector<128x128xbf16>
    %cst = arith.constant dense<0.000000e+00> : vector<304x128xf32>
    %2 = tpu.matmul %0, %1, %cst {dimension_numbers = #tpu.dot_dimension_numbers<[1], [0], [0], [1], [0, 0, 1, 1], [], []>} : vector<304x128xbf16>, vector<128x128xbf16>, vector<304x128xf32> -> vector<304x128xf32>
    %c0_3 = arith.constant 0 : index
    %c0_4 = arith.constant 0 : index
    %3 = vector.load %arg3[%c0_3, %c0_4] : memref<1x128xf32, #tpu.memory_space<vmem>>, vector<1x128xf32>
    %4 = vector.broadcast %3 : vector<1x128xf32> to vector<304x128xf32>
    %5 = arith.mulf %2, %4 : vector<304x128xf32>
    %c0_5 = arith.constant 0 : index
    %c0_6 = arith.constant 0 : index
    %6 = vector.load %arg4[%c0_5, %c0_6] : memref<1x128xf32, #tpu.memory_space<vmem>>, vector<1x128xf32>
    %7 = vector.broadcast %6 : vector<1x128xf32> to vector<304x128xf32>
    %8 = arith.addf %5, %7 : vector<304x128xf32>
    %cst_7 = arith.constant 0.000000e+00 : f32
    %9 = vector.broadcast %cst_7 : f32 to vector<304x128xf32>
    %10 = arith.maximumf %8, %9 : vector<304x128xf32>
    %c0_8 = arith.constant 0 : index
    %c0_9 = arith.constant 0 : index
    %11 = vector.load %arg5[%c0_8, %c0_9] : memref<304x128xf32, #tpu.memory_space<vmem>>, vector<304x128xf32>
    tpu.vector_store %arg5[%c0_8, %c0_9], %10 {strides = array<i32>} : memref<304x128xf32, #tpu.memory_space<vmem>>, vector<304x128xf32>,
    return
  }
  func.func @transform_0(%arg0: i32) -> (i32, i32) {
    %c0_i32 = arith.constant 0 : i32
    %c0_i32_0 = arith.constant 0 : i32
    return %arg0, %c0_i32 : i32, i32
  }
  func.func @transform_1(%arg0: i32) -> (i32, i32) {
    %c0_i32 = arith.constant 0 : i32
    %c0_i32_0 = arith.constant 0 : i32
    %c0_i32_1 = arith.constant 0 : i32
    return %c0_i32, %c0_i32_0 : i32, i32
  }
  func.func @transform_2(%arg0: i32) -> (i32, i32) {
    %c0_i32 = arith.constant 0 : i32
    %c0_i32_0 = arith.constant 0 : i32
    %c0_i32_1 = arith.constant 0 : i32
    return %c0_i32, %c0_i32_0 : i32, i32
  }
  func.func @transform_3(%arg0: i32) -> (i32, i32) {
    %c0_i32 = arith.constant 0 : i32
    %c0_i32_0 = arith.constant 0 : i32
    %c0_i32_1 = arith.constant 0 : i32
    return %c0_i32, %c0_i32_0 : i32, i32
  }
  func.func @transform_4(%arg0: i32) -> (i32, i32) {
    %c0_i32 = arith.constant 0 : i32
    %c0_i32_0 = arith.constant 0 : i32
    return %arg0, %c0_i32 : i32, i32
  }
}

module attributes {stable_mosaic.version = 11 : i64} {
  func.func @_convt_bn_relu_conv1x1_l2norm_kernel(%arg0: i32, %arg1: memref<736x128xbf16, #tpu.memory_space<vmem>>, %arg2: memref<128x128xbf16, #tpu.memory_space<vmem>>, %arg3: memref<1x128xf32, #tpu.memory_space<vmem>>, %arg4: memref<1x128xf32, #tpu.memory_space<vmem>>, %arg5: memref<128x128xf32, #tpu.memory_space<vmem>>, %arg6: memref<1x128xf32, #tpu.memory_space<vmem>>, %arg7: memref<128x128xf32, #tpu.memory_space<vmem>>, %arg8: memref<736x128xf32, #tpu.memory_space<vmem>>) attributes {dimension_semantics = [#tpu.dimension_semantics<parallel>], iteration_bounds = array<i64: 3>, scalar_prefetch = 0 : i64, scratch_operands = 0 : i64, tpu.core_type = #tpu.core_type<tc>, window_params = [{transform_indices = @transform_0, window_bounds = array<i64: 736, 128>}, {pipeline_mode = #tpu.pipeline_mode<synchronous>, transform_indices = @transform_1, window_bounds = array<i64: 128, 128>}, {pipeline_mode = #tpu.pipeline_mode<synchronous>, transform_indices = @transform_2, window_bounds = array<i64: 1, 128>}, {pipeline_mode = #tpu.pipeline_mode<synchronous>, transform_indices = @transform_3, window_bounds = array<i64: 1, 128>}, {pipeline_mode = #tpu.pipeline_mode<synchronous>, transform_indices = @transform_4, window_bounds = array<i64: 128, 128>}, {pipeline_mode = #tpu.pipeline_mode<synchronous>, transform_indices = @transform_5, window_bounds = array<i64: 1, 128>}, {pipeline_mode = #tpu.pipeline_mode<synchronous>, transform_indices = @transform_6, window_bounds = array<i64: 128, 128>}, {transform_indices = @transform_7, window_bounds = array<i64: 736, 128>}]} {
    %c0 = arith.constant 0 : index
    %c0_0 = arith.constant 0 : index
    %0 = vector.load %arg1[%c0, %c0_0] : memref<736x128xbf16, #tpu.memory_space<vmem>>, vector<736x128xbf16>
    %c0_1 = arith.constant 0 : index
    %c0_2 = arith.constant 0 : index
    %1 = vector.load %arg2[%c0_1, %c0_2] : memref<128x128xbf16, #tpu.memory_space<vmem>>, vector<128x128xbf16>
    %cst = arith.constant dense<0.000000e+00> : vector<736x128xf32>
    %2 = tpu.matmul %0, %1, %cst {dimension_numbers = #tpu.dot_dimension_numbers<[1], [0], [0], [1], [0, 0, 1, 1], [], []>} : vector<736x128xbf16>, vector<128x128xbf16>, vector<736x128xf32> -> vector<736x128xf32>
    %c0_3 = arith.constant 0 : index
    %c0_4 = arith.constant 0 : index
    %3 = vector.load %arg3[%c0_3, %c0_4] : memref<1x128xf32, #tpu.memory_space<vmem>>, vector<1x128xf32>
    %4 = vector.broadcast %3 : vector<1x128xf32> to vector<736x128xf32>
    %5 = arith.mulf %2, %4 : vector<736x128xf32>
    %c0_5 = arith.constant 0 : index
    %c0_6 = arith.constant 0 : index
    %6 = vector.load %arg4[%c0_5, %c0_6] : memref<1x128xf32, #tpu.memory_space<vmem>>, vector<1x128xf32>
    %7 = vector.broadcast %6 : vector<1x128xf32> to vector<736x128xf32>
    %8 = arith.addf %5, %7 : vector<736x128xf32>
    %cst_7 = arith.constant 0.000000e+00 : f32
    %9 = vector.broadcast %cst_7 : f32 to vector<736x128xf32>
    %10 = arith.maximumf %8, %9 : vector<736x128xf32>
    %c0_8 = arith.constant 0 : index
    %c0_9 = arith.constant 0 : index
    %11 = vector.load %arg5[%c0_8, %c0_9] : memref<128x128xf32, #tpu.memory_space<vmem>>, vector<128x128xf32>
    %cst_10 = arith.constant dense<0.000000e+00> : vector<736x128xf32>
    %12 = tpu.matmul %10, %11, %cst_10 {dimension_numbers = #tpu.dot_dimension_numbers<[1], [0], [0], [1], [0, 0, 1, 1], [], []>} : vector<736x128xf32>, vector<128x128xf32>, vector<736x128xf32> -> vector<736x128xf32>
    %c0_11 = arith.constant 0 : index
    %c0_12 = arith.constant 0 : index
    %13 = vector.load %arg6[%c0_11, %c0_12] : memref<1x128xf32, #tpu.memory_space<vmem>>, vector<1x128xf32>
    %14 = vector.broadcast %13 : vector<1x128xf32> to vector<736x128xf32>
    %15 = arith.addf %12, %14 : vector<736x128xf32>
    %16 = arith.mulf %15, %15 : vector<736x128xf32>
    %c0_13 = arith.constant 0 : index
    %c0_14 = arith.constant 0 : index
    %17 = vector.load %arg7[%c0_13, %c0_14] : memref<128x128xf32, #tpu.memory_space<vmem>>, vector<128x128xf32>
    %cst_15 = arith.constant dense<0.000000e+00> : vector<736x128xf32>
    %18 = tpu.matmul %16, %17, %cst_15 {dimension_numbers = #tpu.dot_dimension_numbers<[1], [0], [0], [1], [0, 0, 1, 1], [], []>} : vector<736x128xf32>, vector<128x128xf32>, vector<736x128xf32> -> vector<736x128xf32>
    %cst_16 = arith.constant 1.000000e-24 : f32
    %19 = vector.broadcast %cst_16 : f32 to vector<736x128xf32>
    %20 = arith.maximumf %18, %19 : vector<736x128xf32>
    %21 = math.rsqrt %20 : vector<736x128xf32>
    %22 = arith.mulf %15, %21 : vector<736x128xf32>
    %c0_17 = arith.constant 0 : index
    %c0_18 = arith.constant 0 : index
    %23 = vector.load %arg8[%c0_17, %c0_18] : memref<736x128xf32, #tpu.memory_space<vmem>>, vector<736x128xf32>
    tpu.vector_store %arg8[%c0_17, %c0_18], %22 {strides = array<i32>} : memref<736x128xf32, #tpu.memory_space<vmem>>, vector<736x128xf32>,
    return
  }
  func.func @transform_0(%arg0: i32) -> (i32, i32) {
    %c0_i32 = arith.constant 0 : i32
    %c0_i32_0 = arith.constant 0 : i32
    return %arg0, %c0_i32 : i32, i32
  }
  func.func @transform_1(%arg0: i32) -> (i32, i32) {
    %c0_i32 = arith.constant 0 : i32
    %c0_i32_0 = arith.constant 0 : i32
    %c0_i32_1 = arith.constant 0 : i32
    return %c0_i32, %c0_i32_0 : i32, i32
  }
  func.func @transform_2(%arg0: i32) -> (i32, i32) {
    %c0_i32 = arith.constant 0 : i32
    %c0_i32_0 = arith.constant 0 : i32
    %c0_i32_1 = arith.constant 0 : i32
    return %c0_i32, %c0_i32_0 : i32, i32
  }
  func.func @transform_3(%arg0: i32) -> (i32, i32) {
    %c0_i32 = arith.constant 0 : i32
    %c0_i32_0 = arith.constant 0 : i32
    %c0_i32_1 = arith.constant 0 : i32
    return %c0_i32, %c0_i32_0 : i32, i32
  }
  func.func @transform_4(%arg0: i32) -> (i32, i32) {
    %c0_i32 = arith.constant 0 : i32
    %c0_i32_0 = arith.constant 0 : i32
    %c0_i32_1 = arith.constant 0 : i32
    return %c0_i32, %c0_i32_0 : i32, i32
  }
  func.func @transform_5(%arg0: i32) -> (i32, i32) {
    %c0_i32 = arith.constant 0 : i32
    %c0_i32_0 = arith.constant 0 : i32
    %c0_i32_1 = arith.constant 0 : i32
    return %c0_i32, %c0_i32_0 : i32, i32
  }
  func.func @transform_6(%arg0: i32) -> (i32, i32) {
    %c0_i32 = arith.constant 0 : i32
    %c0_i32_0 = arith.constant 0 : i32
    %c0_i32_1 = arith.constant 0 : i32
    return %c0_i32, %c0_i32_0 : i32, i32
  }
  func.func @transform_7(%arg0: i32) -> (i32, i32) {
    %c0_i32 = arith.constant 0 : i32
    %c0_i32_0 = arith.constant 0 : i32
    return %arg0, %c0_i32 : i32, i32
  }
}

</mosaic_0001>

<llo_original>
// kernel: tile.68
$region0: #{tile.68}
  #allocation2 [shape = 's32[1]{0}', space=sflag, size = 0x4, scoped, tag = 'scoped memory for tile.68']
  %s0 = inlined_call_operand.hbm [shape: f32[32], index: 0, kind: input, shape index: {}]
  %s1 = inlined_call_operand.vmem [shape: f32[4,32], index: 1, kind: output, shape index: {}]
  $region1: #{tile.68} parent=0
    #allocation0 [shape = 'u8[512]{0}', space=vmem, size = 0x400, scoped, tag = 'operand span for operand 0']
    #allocation1 [shape = 's32[1]{0}', space=sflag, size = 0x4, scoped, tag = 'scoped memory for tile.68']
    %2 = vsyncpa [#allocation1], 0
    // Predicated region
    $region2: #{tile.68} parent=1 // pred_check
      _
    $region3: #{tile.68} parent=1 // pred_check_branch
      %4 = sbr.rel (0) target = $region5
    $region4: #{tile.68} parent=1 // pred_region
      %s6 = ssub.s32 16, 16
      %7 = vsyncadd [#allocation1], %s6
      %s9 = sshll.u32 [#allocation0], 4
      %s10 = int_to_ptr.vmem [resolvable:$true] %s9
      %12 = dma.hbm_to_vmem [thread:$0]  %s0, 16, %s10, [#allocation1]
    $region5: #{tile.68} parent=1 // pred_fallthru
      _
    // Predicated region
    $region6: #{tile.68} parent=1 // pred_check
      _
    $region7: #{tile.68} parent=1 // pred_check_branch
      %14 = sbr.rel (0) target = $region9
    $region8: #{tile.68} parent=1 // pred_region
      %15 = dma.done [#allocation1], 16
    $region9: #{tile.68} parent=1 // pred_fallthru
      _
    %v16 = vld [vmem:[#allocation0] ss:$0 sm:$0xff]
    %17 = vst [vmem:[%s1] sm:$0xf] %v16
    %18 = vsyncpa [#allocation1], 1

// kernel: tile.63
$region0: #{tile.63}
  #allocation0 [shape = 's32[1]{0}', space=sflag, size = 0x4, scoped, tag = 'scoped memory for tile.63']
  %s0 = inlined_call_operand.vmem [shape: f32[32], index: 0, kind: input, shape index: {}]
  %s1 = inlined_call_operand.vmem [shape: f32[4,32], index: 1, kind: output, shape index: {}]
  // Predicated region
  $region2: #{tile.63} parent=0 // pred_check
    _
  $region3: #{tile.63} parent=0 // pred_check_branch
    %3 = sbr.rel (0) target = $region5
  $region4: #{tile.63} parent=0 // pred_region
    _
  $region5: #{tile.63} parent=0 // pred_fallthru
    _
  %v4 = vld [vmem:[%s0] ss:$0 sm:$0xff]
  %5 = vst [vmem:[%s1] sm:$0xf] %v4

// kernel: tile.64
$region0: #{tile.64}
  %s0 = inlined_call_operand.vmem [shape: f32[4,32], index: 0, kind: input, shape index: {}]
  %s1 = inlined_call_operand.vmem [shape: f32[1,128], index: 1, kind: output, shape index: {}]
  $region1: #{tile.64} parent=0
    #allocation0 [shape = 'u8[4096]{0}', space=vmem, size = 0x1000, scoped, tag = 'scoped mem for output reshape']
    #allocation1 [shape = 'u8[4096]{0}', space=vmem, size = 0x1000, scoped, tag = 'scoped mem for input reshape']
    %s3 = sshll.u32 1, 4
    %s4 = ssub.s32 %s3, 1
    %v5 = vld [vmem:[%s0] sm:%s4]
    %6 = vst [vmem:[#allocation1] sm:%s4] %v5
    %v7 = vld [vmem:[#allocation1] sm:$0x1]
    %vm8 = vcmask 261120
    %9 = vst.msk [vmem:[#allocation0] sm:$0x1] %vm8, %v7
    %s10 = scalar_lea.vmem [#allocation1], 3
    %v11 = vld [vmem:[%s10] sm:$0x1]
    %12 = vrot.lane.b32.xlu0 %v11, 96
    %v13 = vpop.permute.xlu0 %12
    %vm14 = vcmask 1048320
    %15 = vst.msk [vmem:[#allocation0] sm:$0x1] %vm14, %v13
    %s16 = scalar_lea.vmem [#allocation1], 2
    %v17 = vld [vmem:[%s16] sm:$0x1]
    %18 = vrot.lane.b32.xlu0 %v17, 64
    %v19 = vpop.permute.xlu0 %18
    %vm20 = vcmask 785920
    %21 = vst.msk [vmem:[#allocation0] sm:$0x1] %vm20, %v19
    %s22 = scalar_lea.vmem [#allocation1], 1
    %v23 = vld [vmem:[%s22] sm:$0x1]
    %24 = vrot.lane.b32.xlu0 %v23, 32
    %v25 = vpop.permute.xlu0 %24
    %vm26 = vcmask 523520
    %27 = vst.msk [vmem:[#allocation0] sm:$0x1] %vm26, %v25
    %s29 = sshll.u32 1, 1
    %s30 = ssub.s32 %s29, 1
    %v32 = vld [vmem:[#allocation0] sm:%s30]
    %s33 = sshll.u32 1, 1
    %s34 = ssub.s32 %s33, 1
    %35 = vst [vmem:[%s1] sm:%s34] %v32

// kernel: mul.24
$region0: #{mul.24}
  #allocation0 [shape = 's32[1]{0}', space=sflag, size = 0x4, scoped, tag = 'scoped memory for mul.24']
  %s0 = inlined_call_operand.vmem [shape: f32[128,128], index: 0, kind: input, shape index: {}]
  %s1 = inlined_call_operand.vmem [shape: f32[128,128], index: 1, kind: input, shape index: {}]
  %s2 = inlined_call_operand.vmem [shape: f32[128,128], index: 2, kind: output, shape index: {}]
  %v3 = vld [vmem:[%s0] sm:$0xff]
  %v4 = vld [vmem:[%s1] sm:$0xff]
  %5 = xla_tuple %v3, %v4
  %6 = xla_tuple %5
  %v7 = vmul.f32 %v3, %v4
  %8 = xla_tuple %v7
  %9 = vst [vmem:[%s2] sm:$0xff] %v7
  %s10 = scalar_lea.vmem %s0, 8
  %v11 = vld [vmem:[%s10] sm:$0xff]
  %s12 = scalar_lea.vmem %s1, 8
  %v13 = vld [vmem:[%s12] sm:$0xff]
  %14 = xla_tuple %v11, %v13
  %15 = xla_tuple %14
  %v16 = vmul.f32 %v11, %v13
  %17 = xla_tuple %v16
  %s18 = scalar_lea.vmem %s2, 8
  %19 = vst [vmem:[%s18] sm:$0xff] %v16
  %s20 = scalar_lea.vmem %s0, 16
  %v21 = vld [vmem:[%s20] sm:$0xff]
  %s22 = scalar_lea.vmem %s1, 16
  %v23 = vld [vmem:[%s22] sm:$0xff]
  %24 = xla_tuple %v21, %v23
  %25 = xla_tuple %24
  %v26 = vmul.f32 %v21, %v23
  %27 = xla_tuple %v26
  %s28 = scalar_lea.vmem %s2, 16
  %29 = vst [vmem:[%s28] sm:$0xff] %v26
  %s30 = scalar_lea.vmem %s0, 24
  %v31 = vld [vmem:[%s30] sm:$0xff]
  %s32 = scalar_lea.vmem %s1, 24
  %v33 = vld [vmem:[%s32] sm:$0xff]
  %34 = xla_tuple %v31, %v33
  %35 = xla_tuple %34
  %v36 = vmul.f32 %v31, %v33
  %37 = xla_tuple %v36
  %s38 = scalar_lea.vmem %s2, 24
  %39 = vst [vmem:[%s38] sm:$0xff] %v36
  %s40 = scalar_lea.vmem %s0, 32
  %v41 = vld [vmem:[%s40] sm:$0xff]
  %s42 = scalar_lea.vmem %s1, 32
  %v43 = vld [vmem:[%s42] sm:$0xff]
  %44 = xla_tuple %v41, %v43
  %45 = xla_tuple %44
  %v46 = vmul.f32 %v41, %v43
  %47 = xla_tuple %v46
  %s48 = scalar_lea.vmem %s2, 32
  %49 = vst [vmem:[%s48] sm:$0xff] %v46
  %s50 = scalar_lea.vmem %s0, 40
  %v51 = vld [vmem:[%s50] sm:$0xff]
  %s52 = scalar_lea.vmem %s1, 40
  %v53 = vld [vmem:[%s52] sm:$0xff]
  %54 = xla_tuple %v51, %v53
  %55 = xla_tuple %54
  %v56 = vmul.f32 %v51, %v53
  %57 = xla_tuple %v56
  %s58 = scalar_lea.vmem %s2, 40
  %59 = vst [vmem:[%s58] sm:$0xff] %v56
  %s60 = scalar_lea.vmem %s0, 48
  %v61 = vld [vmem:[%s60] sm:$0xff]
  %s62 = scalar_lea.vmem %s1, 48
  %v63 = vld [vmem:[%s62] sm:$0xff]
  %64 = xla_tuple %v61, %v63
  %65 = xla_tuple %64
  %v66 = vmul.f32 %v61, %v63
  %67 = xla_tuple %v66
  %s68 = scalar_lea.vmem %s2, 48
  %69 = vst [vmem:[%s68] sm:$0xff] %v66
  %s70 = scalar_lea.vmem %s0, 56
  %v71 = vld [vmem:[%s70] sm:$0xff]
  %s72 = scalar_lea.vmem %s1, 56
  %v73 = vld [vmem:[%s72] sm:$0xff]
  %74 = xla_tuple %v71, %v73
  %75 = xla_tuple %74
  %v76 = vmul.f32 %v71, %v73
  %77 = xla_tuple %v76
  %s78 = scalar_lea.vmem %s2, 56
  %79 = vst [vmem:[%s78] sm:$0xff] %v76
  %s80 = scalar_lea.vmem %s0, 64
  %v81 = vld [vmem:[%s80] sm:$0xff]
  %s82 = scalar_lea.vmem %s1, 64
  %v83 = vld [vmem:[%s82] sm:$0xff]
  %84 = xla_tuple %v81, %v83
  %85 = xla_tuple %84
  %v86 = vmul.f32 %v81, %v83
  %87 = xla_tuple %v86
  %s88 = scalar_lea.vmem %s2, 64
  %89 = vst [vmem:[%s88] sm:$0xff] %v86
  %s90 = scalar_lea.vmem %s0, 72
  %v91 = vld [vmem:[%s90] sm:$0xff]
  %s92 = scalar_lea.vmem %s1, 72
  %v93 = vld [vmem:[%s92] sm:$0xff]
  %94 = xla_tuple %v91, %v93
  %95 = xla_tuple %94
  %v96 = vmul.f32 %v91, %v93
  %97 = xla_tuple %v96
  %s98 = scalar_lea.vmem %s2, 72
  %99 = vst [vmem:[%s98] sm:$0xff] %v96
  %s100 = scalar_lea.vmem %s0, 80
  %v101 = vld [vmem:[%s100] sm:$0xff]
  %s102 = scalar_lea.vmem %s1, 80
  %v103 = vld [vmem:[%s102] sm:$0xff]
  %104 = xla_tuple %v101, %v103
  %105 = xla_tuple %104
  %v106 = vmul.f32 %v101, %v103
  %107 = xla_tuple %v106
  %s108 = scalar_lea.vmem %s2, 80
  %109 = vst [vmem:[%s108] sm:$0xff] %v106
  %s110 = scalar_lea.vmem %s0, 88
  %v111 = vld [vmem:[%s110] sm:$0xff]
  %s112 = scalar_lea.vmem %s1, 88
  %v113 = vld [vmem:[%s112] sm:$0xff]
  %114 = xla_tuple %v111, %v113
  %115 = xla_tuple %114
  %v116 = vmul.f32 %v111, %v113
  %117 = xla_tuple %v116
  %s118 = scalar_lea.vmem %s2, 88
  %119 = vst [vmem:[%s118] sm:$0xff] %v116
  %s120 = scalar_lea.vmem %s0, 96
  %v121 = vld [vmem:[%s120] sm:$0xff]
  %s122 = scalar_lea.vmem %s1, 96
  %v123 = vld [vmem:[%s122] sm:$0xff]
  %124 = xla_tuple %v121, %v123
  %125 = xla_tuple %124
  %v126 = vmul.f32 %v121, %v123
  %127 = xla_tuple %v126
  %s128 = scalar_lea.vmem %s2, 96
  %129 = vst [vmem:[%s128] sm:$0xff] %v126
  %s130 = scalar_lea.vmem %s0, 104
  %v131 = vld [vmem:[%s130] sm:$0xff]
  %s132 = scalar_lea.vmem %s1, 104
  %v133 = vld [vmem:[%s132] sm:$0xff]
  %134 = xla_tuple %v131, %v133
  %135 = xla_tuple %134
  %v136 = vmul.f32 %v131, %v133
  %137 = xla_tuple %v136
  %s138 = scalar_lea.vmem %s2, 104
  %139 = vst [vmem:[%s138] sm:$0xff] %v136
  %s140 = scalar_lea.vmem %s0, 112
  %v141 = vld [vmem:[%s140] sm:$0xff]
  %s142 = scalar_lea.vmem %s1, 112
  %v143 = vld [vmem:[%s142] sm:$0xff]
  %144 = xla_tuple %v141, %v143
  %145 = xla_tuple %144
  %v146 = vmul.f32 %v141, %v143
  %147 = xla_tuple %v146
  %s148 = scalar_lea.vmem %s2, 112
  %149 = vst [vmem:[%s148] sm:$0xff] %v146
  %s150 = scalar_lea.vmem %s0, 120
  %v151 = vld [vmem:[%s150] sm:$0xff]
  %s152 = scalar_lea.vmem %s1, 120
  %v153 = vld [vmem:[%s152] sm:$0xff]
  %154 = xla_tuple %v151, %v153
  %155 = xla_tuple %154
  %v156 = vmul.f32 %v151, %v153
  %157 = xla_tuple %v156
  %s158 = scalar_lea.vmem %s2, 120
  %159 = vst [vmem:[%s158] sm:$0xff] %v156

// kernel: projection_head_forward.3
$region0: #{projection_head_forward.3}
  #allocation0 [shape = 'u32[]', space=smem, size = 0x4, offset = 0x4, fixed_abs, tag = 'smem constant byte address 0x4 - core index']
  #allocation1 [shape = 'u32[144,128]{1,0:T(1,128)}', space=vmem, size = 0x12000, scoped, tag = 'internal scratch']
  %s0 = inlined_call_operand.vmem [shape: bf16[192,128], index: 0, kind: input, shape index: {}]
  %s1 = inlined_call_operand.vmem [shape: bf16[128,128], index: 1, kind: input, shape index: {}]
  %s2 = inlined_call_operand.vmem [shape: f32[1,128], index: 2, kind: input, shape index: {}]
  %s3 = inlined_call_operand.vmem [shape: f32[1,128], index: 3, kind: input, shape index: {}]
  %s4 = inlined_call_operand.vmem [shape: f32[192,128], index: 4, kind: output, shape index: {}]
  %s5 = sld [smem:[#allocation0]]
  $region49: #{projection_head_forward.3} parent=0
    _
  %s7 = ssub.s32 1, %s5
  %s8 = scalar_select 0, %s7, %s5
  loop: start=0, step=1, limit=4
  $region2: #{projection_head_forward.3} parent=0 // loop_pre_header
    _
  $region3: #{projection_head_forward.3} parent=0 // loop_header
    %s10 = sphi 0, %s14
    %p11 = scmp.ge.s32.totalorder %s10, 4
    %s20 = sphi 0, %s22
    %s23 = sphi 0, %s20
    %s24 = sphi 0, %s23
    %s40 = sphi 0, %s24
    %s44 = sphi 0, %s44
    %s46 = sphi 0, %s44
    %s47 = sphi 0, %s46
    %s61 = sphi 0, %s47
    %s65 = sphi 0, %s65
    %s67 = sphi 0, %s65
    %s68 = sphi 0, %s67
    %s82 = sphi 0, %s68
    %s86 = sphi 0, %s86
    %s88 = sphi 0, %s86
    %s89 = sphi 0, %s88
    %s103 = sphi 0, %s89
    %s109 = sphi 0, %s111
    %s112 = sphi 0, %s109
    %s113 = sphi 0, %s112
    %s129 = sphi 0, %s113
  $region4: #{projection_head_forward.3} parent=0 // loop_header_branch
    %13 = sbr.rel (%p11) target = $region8
  $region5: #{projection_head_forward.3} parent=0 // loop_body
    %s15 = ssub.s32 %s10, 1
    %s16 = ssub.s32 %s10, 2
    %s17 = sadd.s32 %s10, 1
    %s18 = ssub.s32 %s10, %s17
    %p19 = scmp.eq.s32.totalorder %s18, 0
    %s21 = sadd.s32 %s20, 1
    %s22 = scalar_select %p19, %s20, %s21
    %p25 = pneg %p19
    %p26 = scmp.eq.s32.totalorder %s10, 1
    %p27 = por %p25, %p26
    %p28 = scmp.ne.s32.totalorder %s20, %s23
    %p29 = scmp.eq.s32.totalorder %s10, 0
    %p30 = por %p28, %p29
    %p31 = scmp.ne.s32.totalorder %s20, %s23
    %p32 = scmp.eq.s32.totalorder %s15, 1
    %p33 = por %p31, %p32
    %p34 = scmp.ne.s32.totalorder %s23, %s24
    %p35 = scmp.eq.s32.totalorder %s15, 0
    %p36 = por %p34, %p35
    %p37 = scmp.ne.s32.totalorder %s23, %s24
    %p38 = scmp.eq.s32.totalorder %s16, 1
    %p39 = por %p37, %p38
    %p41 = scmp.ne.s32.totalorder %s24, %s40
    %p42 = scmp.eq.s32.totalorder %s16, 0
    %p43 = por %p41, %p42
    %s45 = sadd.s32 %s44, 1
    %p48 = scmp.eq.s32.totalorder %s10, 1
    %p49 = scmp.ne.s32.totalorder %s44, %s46
    %p50 = scmp.eq.s32.totalorder %s10, 0
    %p51 = por %p49, %p50
    %p52 = scmp.ne.s32.totalorder %s44, %s46
    %p53 = scmp.eq.s32.totalorder %s15, 1
    %p54 = por %p52, %p53
    %p55 = scmp.ne.s32.totalorder %s46, %s47
    %p56 = scmp.eq.s32.totalorder %s15, 0
    %p57 = por %p55, %p56
    %p58 = scmp.ne.s32.totalorder %s46, %s47
    %p59 = scmp.eq.s32.totalorder %s16, 1
    %p60 = por %p58, %p59
    %p62 = scmp.ne.s32.totalorder %s47, %s61
    %p63 = scmp.eq.s32.totalorder %s16, 0
    %p64 = por %p62, %p63
    %s66 = sadd.s32 %s65, 1
    %p69 = scmp.eq.s32.totalorder %s10, 1
    %p70 = scmp.ne.s32.totalorder %s65, %s67
    %p71 = scmp.eq.s32.totalorder %s10, 0
    %p72 = por %p70, %p71
    %p73 = scmp.ne.s32.totalorder %s65, %s67
    %p74 = scmp.eq.s32.totalorder %s15, 1
    %p75 = por %p73, %p74
    %p76 = scmp.ne.s32.totalorder %s67, %s68
    %p77 = scmp.eq.s32.totalorder %s15, 0
    %p78 = por %p76, %p77
    %p79 = scmp.ne.s32.totalorder %s67, %s68
    %p80 = scmp.eq.s32.totalorder %s16, 1
    %p81 = por %p79, %p80
    %p83 = scmp.ne.s32.totalorder %s68, %s82
    %p84 = scmp.eq.s32.totalorder %s16, 0
    %p85 = por %p83, %p84
    %s87 = sadd.s32 %s86, 1
    %p90 = scmp.eq.s32.totalorder %s10, 1
    %p91 = scmp.ne.s32.totalorder %s86, %s88
    %p92 = scmp.eq.s32.totalorder %s10, 0
    %p93 = por %p91, %p92
    %p94 = scmp.ne.s32.totalorder %s86, %s88
    %p95 = scmp.eq.s32.totalorder %s15, 1
    %p96 = por %p94, %p95
    %p97 = scmp.ne.s32.totalorder %s88, %s89
    %p98 = scmp.eq.s32.totalorder %s15, 0
    %p99 = por %p97, %p98
    %p100 = scmp.ne.s32.totalorder %s88, %s89
    %p101 = scmp.eq.s32.totalorder %s16, 1
    %p102 = por %p100, %p101
    %p104 = scmp.ne.s32.totalorder %s89, %s103
    %p105 = scmp.eq.s32.totalorder %s16, 0
    %p106 = por %p104, %p105
    %s107 = ssub.s32 %s10, %s17
    %p108 = scmp.eq.s32.totalorder %s107, 0
    %s110 = sadd.s32 %s109, 1
    %s111 = scalar_select %p108, %s109, %s110
    %p114 = pneg %p108
    %p115 = scmp.eq.s32.totalorder %s10, 1
    %p116 = por %p114, %p115
    %p117 = scmp.ne.s32.totalorder %s109, %s112
    %p118 = scmp.eq.s32.totalorder %s10, 0
    %p119 = por %p117, %p118
    %p120 = scmp.ne.s32.totalorder %s109, %s112
    %p121 = scmp.eq.s32.totalorder %s15, 1
    %p122 = por %p120, %p121
    %p123 = scmp.ne.s32.totalorder %s112, %s113
    %p124 = scmp.eq.s32.totalorder %s15, 0
    %p125 = por %p123, %p124
    %p126 = scmp.ne.s32.totalorder %s112, %s113
    %p127 = scmp.eq.s32.totalorder %s16, 1
    %p128 = por %p126, %p127
    %p130 = scmp.ne.s32.totalorder %s113, %s129
    %p131 = scmp.eq.s32.totalorder %s16, 0
    %p132 = por %p130, %p131
    %p133 = scmp.le.s32.totalorder 1, %s10
    %p134 = scmp.lt.s32.totalorder %s10, 3
    %p135 = pnand %p133, %p134
    %p136 = pneg %p135
    // Predicated region
    $region9: #{projection_head_forward.3} parent=5 // pred_check
      _
    $region10: #{projection_head_forward.3} parent=5 // pred_check_branch
      %138 = sbr.rel (%p135) target = $region12
    $region11: #{projection_head_forward.3} parent=5 // pred_region
      %s139 = ssub.s32 %s10, 1
      // Predicated region
      $region13: #{projection_head_forward.3} parent=11 // pred_check
        %p140 = pneg %p57
      $region14: #{projection_head_forward.3} parent=11 // pred_check_branch
        %142 = sbr.rel (%p140) target = $region16
      $region15: #{projection_head_forward.3} parent=11 // pred_region
        _
      $region16: #{projection_head_forward.3} parent=11 // pred_fallthru
        _
      // Predicated region
      $region17: #{projection_head_forward.3} parent=11 // pred_check
        %p143 = pneg %p78
      $region18: #{projection_head_forward.3} parent=11 // pred_check_branch
        %145 = sbr.rel (%p143) target = $region20
      $region19: #{projection_head_forward.3} parent=11 // pred_region
        _
      $region20: #{projection_head_forward.3} parent=11 // pred_fallthru
        _
      // Predicated region
      $region21: #{projection_head_forward.3} parent=11 // pred_check
        %p146 = pneg %p99
      $region22: #{projection_head_forward.3} parent=11 // pred_check_branch
        %148 = sbr.rel (%p146) target = $region24
      $region23: #{projection_head_forward.3} parent=11 // pred_region
        _
      $region24: #{projection_head_forward.3} parent=11 // pred_fallthru
        _
    $region12: #{projection_head_forward.3} parent=5 // pred_fallthru
      _
    %p149 = scmp.lt.s32.totalorder %s10, 2
    // Predicated region
    $region25: #{projection_head_forward.3} parent=5 // pred_check
      %p150 = pneg %p149
    $region26: #{projection_head_forward.3} parent=5 // pred_check_branch
      %152 = sbr.rel (%p150) target = $region28
    $region27: #{projection_head_forward.3} parent=5 // pred_region
      // Predicated region
      $region29: #{projection_head_forward.3} parent=27 // pred_check
        %p153 = pneg %p30
      $region30: #{projection_head_forward.3} parent=27 // pred_check_branch
        %155 = sbr.rel (%p153) target = $region32
      $region31: #{projection_head_forward.3} parent=27 // pred_region
        %s156 = smul.u32 12, %s10
        %p157 = scmp.lt.s32.totalorder %s156, 23
        %s158 = scalar_select %p157, %s156, 23
        %s159 = smul.addr %s158, 4
        %s160 = scalar_lea.vmem %s0, %s159
        %s161 = smul.u32 12, %s10
      $region32: #{projection_head_forward.3} parent=27 // pred_fallthru
        _
    $region28: #{projection_head_forward.3} parent=5 // pred_fallthru
      _
    %p162 = scmp.le.s32.totalorder 1, %s10
    %p163 = scmp.lt.s32.totalorder %s10, 3
    %p164 = pnand %p162, %p163
    %p165 = pneg %p164
    // Predicated region
    $region33: #{projection_head_forward.3} parent=5 // pred_check
      _
    $region34: #{projection_head_forward.3} parent=5 // pred_check_branch
      %167 = sbr.rel (%p164) target = $region36
    $region35: #{projection_head_forward.3} parent=5 // pred_region
      %s168 = ssub.s32 %s10, 1
      %s169 = smul.u32 12, %s15
      %p170 = scmp.lt.s32.totalorder %s169, 23
      %s171 = scalar_select %p170, %s169, 23
      %s172 = smul.addr %s171, 4
      %s173 = scalar_lea.vmem %s0, %s172
      %p174 = pneg %p36
      %p175 = pneg %p33
      %p176 = pneg %p57
      %p177 = pneg %p54
      %p178 = pneg %p78
      %p179 = pneg %p75
      %p180 = pneg %p99
      %p181 = pneg %p96
      %p182 = pneg %p125
      %p183 = pneg %p122
      %s184 = smul.u32 12, %s15
      %p185 = scmp.lt.s32.totalorder %s184, 23
      %s186 = scalar_select %p185, %s184, 23
      %s187 = smul.addr %s186, 8
      %s188 = scalar_lea.vmem %s4, %s187
      %s189 = smul.u32 12, %s15
      %p190 = scmp.lt.s32.totalorder %s189, 23
      %s191 = scalar_select %p190, %s189, 23
      %s192 = smul.addr %s191, 4
      %s193 = scalar_lea.vmem %s0, %s192
      %s194 = smul.u32 12, %s15
      %s195 = smul.u32 12, %s15
      %p196 = scmp.lt.s32.totalorder %s195, 23
      %s197 = scalar_select %p196, %s195, 23
      %s198 = smul.addr %s197, 8
      %s199 = scalar_lea.vmem %s4, %s198
      %s200 = smul.u32 12, %s15
      %v202 = vld [vmem:[%s193] sm:$0xf]
      %v203 = vld [vmem:[%s193 + $0x4] sm:$0xf]
      %v204 = vld [vmem:[%s193 + $0x8] sm:$0xf]
      %v205 = vld [vmem:[%s193 + $0xc] sm:$0xf]
      %v206 = vld [vmem:[%s193 + $0x10] sm:$0xf]
      %v207 = vld [vmem:[%s193 + $0x14] sm:$0xf]
      %v208 = vld [vmem:[%s193 + $0x18] sm:$0xf]
      %v209 = vld [vmem:[%s193 + $0x1c] sm:$0xf]
      %v210 = vld [vmem:[%s193 + $0x20] sm:$0xf]
      %v211 = vld [vmem:[%s193 + $0x24] sm:$0xf]
      %v212 = vld [vmem:[%s193 + $0x28] sm:$0xf]
      %v213 = vld [vmem:[%s193 + $0x2c] sm:$0xf]
      %v214 = vld [vmem:[%s1] sm:$0xf]
      %v215 = vld [vmem:[%s1 + $0x4] sm:$0xf]
      %v216 = vld [vmem:[%s1 + $0x8] sm:$0xf]
      %v217 = vld [vmem:[%s1 + $0xc] sm:$0xf]
      %v218 = vld [vmem:[%s1 + $0x10] sm:$0xf]
      %v219 = vld [vmem:[%s1 + $0x14] sm:$0xf]
      %v220 = vld [vmem:[%s1 + $0x18] sm:$0xf]
      %v221 = vld [vmem:[%s1 + $0x1c] sm:$0xf]
      %v222 = vld [vmem:[%s1 + $0x20] sm:$0xf]
      %v223 = vld [vmem:[%s1 + $0x24] sm:$0xf]
      %v224 = vld [vmem:[%s1 + $0x28] sm:$0xf]
      %v225 = vld [vmem:[%s1 + $0x2c] sm:$0xf]
      %v226 = vld [vmem:[%s1 + $0x30] sm:$0xf]
      %v227 = vld [vmem:[%s1 + $0x34] sm:$0xf]
      %v228 = vld [vmem:[%s1 + $0x38] sm:$0xf]
      %v229 = vld [vmem:[%s1 + $0x3c] sm:$0xf]
      %v242 = vunpack.c.l.b16 %v202
      %v243 = vunpack.c.l.b16 %v203
      %v244 = vunpack.c.l.b16 %v204
      %v245 = vunpack.c.l.b16 %v205
      %v246 = vunpack.c.l.b16 %v206
      %v247 = vunpack.c.l.b16 %v207
      %v248 = vunpack.c.l.b16 %v208
      %v249 = vunpack.c.l.b16 %v209
      %v250 = vunpack.c.l.b16 %v210
      %v251 = vunpack.c.l.b16 %v211
      %v252 = vunpack.c.l.b16 %v212
      %v253 = vunpack.c.l.b16 %v213
      %v254 = vpack.c.b16 %v243, %v242
      %v255 = vpack.c.b16 %v245, %v244
      %v256 = vpack.c.b16 %v247, %v246
      %v257 = vpack.c.b16 %v249, %v248
      %v258 = vpack.c.b16 %v251, %v250
      %v259 = vpack.c.b16 %v253, %v252
      %v282 = vunpack.c.l.b16 %v214
      %v283 = vunpack.c.l.b16 %v215
      %v284 = vunpack.c.l.b16 %v216
      %v285 = vunpack.c.l.b16 %v217
      %v286 = vunpack.c.l.b16 %v218
      %v287 = vunpack.c.l.b16 %v219
      %v288 = vunpack.c.l.b16 %v220
      %v289 = vunpack.c.l.b16 %v221
      %v290 = vunpack.c.l.b16 %v222
      %v291 = vunpack.c.l.b16 %v223
      %v292 = vunpack.c.l.b16 %v224
      %v293 = vunpack.c.l.b16 %v225
      %v294 = vunpack.c.l.b16 %v226
      %v295 = vunpack.c.l.b16 %v227
      %v296 = vunpack.c.l.b16 %v228
      %v297 = vunpack.c.l.b16 %v229
      %v298 = vpack.c.b16 %v283, %v282
      %v299 = vpack.c.b16 %v285, %v284
      %v300 = vpack.c.b16 %v287, %v286
      %v301 = vpack.c.b16 %v289, %v288
      %v302 = vpack.c.b16 %v291, %v290
      %v303 = vpack.c.b16 %v293, %v292
      %v304 = vpack.c.b16 %v295, %v294
      %v305 = vpack.c.b16 %v297, %v296
      %314 = vmatprep.subr.bf16.mxu0 0
      %315 = vmatpush1.bf16.msra.mxu0 %v305
      %316 = vmatprep.subr.bf16.mxu0 0
      %317 = vmatpush1.bf16.msra.mxu0 %v304
      %318 = vmatprep.subr.bf16.mxu0 0
      %319 = vmatpush1.bf16.msra.mxu0 %v303
      %320 = vmatprep.subr.bf16.mxu0 0
      %321 = vmatpush1.bf16.msra.mxu0 %v302
      %322 = vmatprep.subr.bf16.mxu0 0
      %323 = vmatpush1.bf16.msra.mxu0 %v301
      %324 = vmatprep.subr.bf16.mxu0 0
      %325 = vmatpush1.bf16.msra.mxu0 %v300
      %326 = vmatprep.subr.bf16.mxu0 0
      %327 = vmatpush1.bf16.msra.mxu0 %v299
      %328 = vmatprep.subr.bf16.mxu0 0
      %329 = vmatpush1.bf16.msra.mxu0 %v298
      %330 = vmatprep.subr.bf16.mxu0 0
      %331 = vmatpush2.bf16.msra.mxu0 0
      %332 = vmatprep.subr.bf16.mxu0 0
      %333 = vmatpush2.bf16.msra.mxu0 0
      %334 = vmatprep.subr.bf16.mxu0 0
      %335 = vmatpush2.bf16.msra.mxu0 0
      %336 = vmatprep.subr.bf16.mxu0 0
      %337 = vmatpush2.bf16.msra.mxu0 0
      %338 = vmatprep.subr.bf16.mxu0 0
      %339 = vmatpush2.bf16.msra.mxu0 0
      %340 = vmatprep.subr.bf16.mxu0 0
      %341 = vmatpush2.bf16.msra.mxu0 0
      %342 = vmatprep.subr.bf16.mxu0 0
      %343 = vmatpush2.bf16.msra.mxu0 0
      %344 = vmatprep.subr.bf16.mxu0 0
      %345 = vmatpush2.bf16.msra.mxu0 0
      %346 = vmatprep.mubr.bf16.mxu0 0
      %347 = vmatmul.mubr.bf16.gmra.mxu0 %v254
      %v348 = vpop.f32.mrf.mxu0
      %v349 = vadd.f32 0.0, %v348
      %v350 = vpop.f32.mrf.mxu0
      %v351 = vpop.f32.mrf.mxu0
      %v352 = vadd.f32 0.0, %v351
      %v353 = vpop.f32.mrf.mxu0
      %354 = vmatprep.mubr.bf16.mxu0 0
      %355 = vmatmul.mubr.bf16.gmra.mxu0 %v255
      %v356 = vpop.f32.mrf.mxu0
      %v357 = vadd.f32 0.0, %v356
      %v358 = vpop.f32.mrf.mxu0
      %v359 = vpop.f32.mrf.mxu0
      %v360 = vadd.f32 0.0, %v359
      %v361 = vpop.f32.mrf.mxu0
      %362 = vmatprep.mubr.bf16.mxu0 0
      %363 = vmatmul.mubr.bf16.gmra.mxu0 %v256
      %v364 = vpop.f32.mrf.mxu0
      %v365 = vadd.f32 0.0, %v364
      %v366 = vpop.f32.mrf.mxu0
      %v367 = vpop.f32.mrf.mxu0
      %v368 = vadd.f32 0.0, %v367
      %v369 = vpop.f32.mrf.mxu0
      %370 = vmatprep.mubr.bf16.mxu0 0
      %371 = vmatmul.mubr.bf16.gmra.mxu0 %v257
      %v372 = vpop.f32.mrf.mxu0
      %v373 = vadd.f32 0.0, %v372
      %v374 = vpop.f32.mrf.mxu0
      %v375 = vpop.f32.mrf.mxu0
      %v376 = vadd.f32 0.0, %v375
      %v377 = vpop.f32.mrf.mxu0
      %378 = vmatprep.mubr.bf16.mxu0 0
      %379 = vmatmul.mubr.bf16.gmra.mxu0 %v258
      %v380 = vpop.f32.mrf.mxu0
      %v381 = vadd.f32 0.0, %v380
      %v382 = vpop.f32.mrf.mxu0
      %v383 = vpop.f32.mrf.mxu0
      %v384 = vadd.f32 0.0, %v383
      %v385 = vpop.f32.mrf.mxu0
      %386 = vmatprep.mubr.bf16.mxu0 0
      %387 = vmatmul.mubr.bf16.gmra.mxu0 %v259
      %v388 = vpop.f32.mrf.mxu0
      %v389 = vadd.f32 0.0, %v388
      %v390 = vpop.f32.mrf.mxu0
      %v391 = vpop.f32.mrf.mxu0
      %v392 = vadd.f32 0.0, %v391
      %v393 = vpop.f32.mrf.mxu0
      %394 = vdwg.mxu0
      %v395 = vld [vmem:[%s2] sm:$0x1]
      %v397 = vlaneseq
      %v398 = vshrl.u32 %v397, 7
      %v399 = vsub.s32 0, %v398
      %v400 = vrot.slane %v395, %v399
      %v402 = vmul.f32 %v349, %v400
      %v403 = vmul.f32 %v352, %v400
      %v404 = vmul.f32 %v357, %v400
      %v405 = vmul.f32 %v360, %v400
      %v406 = vmul.f32 %v365, %v400
      %v407 = vmul.f32 %v368, %v400
      %v408 = vmul.f32 %v373, %v400
      %v409 = vmul.f32 %v376, %v400
      %v410 = vmul.f32 %v381, %v400
      %v411 = vmul.f32 %v384, %v400
      %v412 = vmul.f32 %v389, %v400
      %v413 = vmul.f32 %v392, %v400
      %v414 = vld [vmem:[%s3] sm:$0x1]
      %v416 = vlaneseq
      %v417 = vshrl.u32 %v416, 7
      %v418 = vsub.s32 0, %v417
      %v419 = vrot.slane %v414, %v418
      %v421 = vadd.f32 %v402, %v419
      %v422 = vadd.f32 %v403, %v419
      %v423 = vadd.f32 %v404, %v419
      %v424 = vadd.f32 %v405, %v419
      %v425 = vadd.f32 %v406, %v419
      %v426 = vadd.f32 %v407, %v419
      %v427 = vadd.f32 %v408, %v419
      %v428 = vadd.f32 %v409, %v419
      %v429 = vadd.f32 %v410, %v419
      %v430 = vadd.f32 %v411, %v419
      %v431 = vadd.f32 %v412, %v419
      %v432 = vadd.f32 %v413, %v419
      %v433 = vmax.f32 %v421, 0.0
      %v434 = vmax.f32 %v422, 0.0
      %v435 = vmax.f32 %v423, 0.0
      %v436 = vmax.f32 %v424, 0.0
      %v437 = vmax.f32 %v425, 0.0
      %v438 = vmax.f32 %v426, 0.0
      %v439 = vmax.f32 %v427, 0.0
      %v440 = vmax.f32 %v428, 0.0
      %v441 = vmax.f32 %v429, 0.0
      %v442 = vmax.f32 %v430, 0.0
      %v443 = vmax.f32 %v431, 0.0
      %v444 = vmax.f32 %v432, 0.0
      %445 = vst [vmem:[%s199] sm:$0xff] %v433
      %446 = vst [vmem:[%s199 + $0x8] sm:$0xff] %v434
      %447 = vst [vmem:[%s199 + $0x10] sm:$0xff] %v435
      %448 = vst [vmem:[%s199 + $0x18] sm:$0xff] %v436
      %449 = vst [vmem:[%s199 + $0x20] sm:$0xff] %v437
      %450 = vst [vmem:[%s199 + $0x28] sm:$0xff] %v438
      %451 = vst [vmem:[%s199 + $0x30] sm:$0xff] %v439
      %452 = vst [vmem:[%s199 + $0x38] sm:$0xff] %v440
      %453 = vst [vmem:[%s199 + $0x40] sm:$0xff] %v441
      %454 = vst [vmem:[%s199 + $0x48] sm:$0xff] %v442
      %455 = vst [vmem:[%s199 + $0x50] sm:$0xff] %v443
      %456 = vst [vmem:[%s199 + $0x58] sm:$0xff] %v444
      %s457 = smul.u32 12, %s15
      %p458 = scmp.lt.s32.totalorder %s457, 23
      %s459 = scalar_select %p458, %s457, 23
      %s460 = smul.addr %s459, 8
      %s461 = scalar_lea.vmem %s4, %s460
      // Predicated region
      $region37: #{projection_head_forward.3} parent=35 // pred_check
        %p462 = pneg %p122
      $region38: #{projection_head_forward.3} parent=35 // pred_check_branch
        %464 = sbr.rel (%p462) target = $region40
      $region39: #{projection_head_forward.3} parent=35 // pred_region
        %s465 = smul.u32 12, %s15
      $region40: #{projection_head_forward.3} parent=35 // pred_fallthru
        _
    $region36: #{projection_head_forward.3} parent=5 // pred_fallthru
      _
    %p466 = scmp.le.s32.totalorder 2, %s10
    // Predicated region
    $region41: #{projection_head_forward.3} parent=5 // pred_check
      %p467 = pneg %p466
    $region42: #{projection_head_forward.3} parent=5 // pred_check_branch
      %469 = sbr.rel (%p467) target = $region44
    $region43: #{projection_head_forward.3} parent=5 // pred_region
      %s470 = ssub.s32 %s10, 2
      // Predicated region
      $region45: #{projection_head_forward.3} parent=43 // pred_check
        %p471 = pneg %p128
      $region46: #{projection_head_forward.3} parent=43 // pred_check_branch
        %473 = sbr.rel (%p471) target = $region48
      $region47: #{projection_head_forward.3} parent=43 // pred_region
        %s474 = smul.u32 12, %s16
        %p475 = scmp.lt.s32.totalorder %s474, 23
        %s476 = scalar_select %p475, %s474, 23
        %s477 = smul.addr %s476, 8
        %s478 = scalar_lea.vmem %s4, %s477
      $region48: #{projection_head_forward.3} parent=43 // pred_fallthru
        _
    $region44: #{projection_head_forward.3} parent=5 // pred_fallthru
      _
  $region6: #{projection_head_forward.3} parent=0 // loop_footer
    %s14 = sadd.s32 1, %s10
  $region7: #{projection_head_forward.3} parent=0 // loop_footer_branch
    %9 = sbr.rel target = $region3
  $region8: #{projection_head_forward.3} parent=0 // loop_exit
    _

// kernel: projection_head_forward.4
$region0: #{projection_head_forward.4}
  #allocation0 [shape = 'u32[]', space=smem, size = 0x4, offset = 0x4, fixed_abs, tag = 'smem constant byte address 0x4 - core index']
  #allocation1 [shape = 'u32[144,128]{1,0:T(1,128)}', space=vmem, size = 0x12000, scoped, tag = 'internal scratch']
  %s0 = inlined_call_operand.vmem [shape: bf16[608,128], index: 0, kind: input, shape index: {}]
  %s1 = inlined_call_operand.vmem [shape: bf16[128,128], index: 1, kind: input, shape index: {}]
  %s2 = inlined_call_operand.vmem [shape: f32[1,128], index: 2, kind: input, shape index: {}]
  %s3 = inlined_call_operand.vmem [shape: f32[1,128], index: 3, kind: input, shape index: {}]
  %s4 = inlined_call_operand.vmem [shape: f32[608,128], index: 4, kind: output, shape index: {}]
  %s5 = sld [smem:[#allocation0]]
  $region49: #{projection_head_forward.4} parent=0
    _
  %s7 = ssub.s32 1, %s5
  %s8 = scalar_select 0, %s7, %s5
  loop: start=0, step=1, limit=4
  $region2: #{projection_head_forward.4} parent=0 // loop_pre_header
    _
  $region3: #{projection_head_forward.4} parent=0 // loop_header
    %s10 = sphi 0, %s14
    %p11 = scmp.ge.s32.totalorder %s10, 4
    %s20 = sphi 0, %s22
    %s23 = sphi 0, %s20
    %s24 = sphi 0, %s23
    %s40 = sphi 0, %s24
    %s44 = sphi 0, %s44
    %s46 = sphi 0, %s44
    %s47 = sphi 0, %s46
    %s61 = sphi 0, %s47
    %s65 = sphi 0, %s65
    %s67 = sphi 0, %s65
    %s68 = sphi 0, %s67
    %s82 = sphi 0, %s68
    %s86 = sphi 0, %s86
    %s88 = sphi 0, %s86
    %s89 = sphi 0, %s88
    %s103 = sphi 0, %s89
    %s109 = sphi 0, %s111
    %s112 = sphi 0, %s109
    %s113 = sphi 0, %s112
    %s129 = sphi 0, %s113
  $region4: #{projection_head_forward.4} parent=0 // loop_header_branch
    %13 = sbr.rel (%p11) target = $region8
  $region5: #{projection_head_forward.4} parent=0 // loop_body
    %s15 = ssub.s32 %s10, 1
    %s16 = ssub.s32 %s10, 2
    %s17 = sadd.s32 %s10, 1
    %s18 = ssub.s32 %s10, %s17
    %p19 = scmp.eq.s32.totalorder %s18, 0
    %s21 = sadd.s32 %s20, 1
    %s22 = scalar_select %p19, %s20, %s21
    %p25 = pneg %p19
    %p26 = scmp.eq.s32.totalorder %s10, 1
    %p27 = por %p25, %p26
    %p28 = scmp.ne.s32.totalorder %s20, %s23
    %p29 = scmp.eq.s32.totalorder %s10, 0
    %p30 = por %p28, %p29
    %p31 = scmp.ne.s32.totalorder %s20, %s23
    %p32 = scmp.eq.s32.totalorder %s15, 1
    %p33 = por %p31, %p32
    %p34 = scmp.ne.s32.totalorder %s23, %s24
    %p35 = scmp.eq.s32.totalorder %s15, 0
    %p36 = por %p34, %p35
    %p37 = scmp.ne.s32.totalorder %s23, %s24
    %p38 = scmp.eq.s32.totalorder %s16, 1
    %p39 = por %p37, %p38
    %p41 = scmp.ne.s32.totalorder %s24, %s40
    %p42 = scmp.eq.s32.totalorder %s16, 0
    %p43 = por %p41, %p42
    %s45 = sadd.s32 %s44, 1
    %p48 = scmp.eq.s32.totalorder %s10, 1
    %p49 = scmp.ne.s32.totalorder %s44, %s46
    %p50 = scmp.eq.s32.totalorder %s10, 0
    %p51 = por %p49, %p50
    %p52 = scmp.ne.s32.totalorder %s44, %s46
    %p53 = scmp.eq.s32.totalorder %s15, 1
    %p54 = por %p52, %p53
    %p55 = scmp.ne.s32.totalorder %s46, %s47
    %p56 = scmp.eq.s32.totalorder %s15, 0
    %p57 = por %p55, %p56
    %p58 = scmp.ne.s32.totalorder %s46, %s47
    %p59 = scmp.eq.s32.totalorder %s16, 1
    %p60 = por %p58, %p59
    %p62 = scmp.ne.s32.totalorder %s47, %s61
    %p63 = scmp.eq.s32.totalorder %s16, 0
    %p64 = por %p62, %p63
    %s66 = sadd.s32 %s65, 1
    %p69 = scmp.eq.s32.totalorder %s10, 1
    %p70 = scmp.ne.s32.totalorder %s65, %s67
    %p71 = scmp.eq.s32.totalorder %s10, 0
    %p72 = por %p70, %p71
    %p73 = scmp.ne.s32.totalorder %s65, %s67
    %p74 = scmp.eq.s32.totalorder %s15, 1
    %p75 = por %p73, %p74
    %p76 = scmp.ne.s32.totalorder %s67, %s68
    %p77 = scmp.eq.s32.totalorder %s15, 0
    %p78 = por %p76, %p77
    %p79 = scmp.ne.s32.totalorder %s67, %s68
    %p80 = scmp.eq.s32.totalorder %s16, 1
    %p81 = por %p79, %p80
    %p83 = scmp.ne.s32.totalorder %s68, %s82
    %p84 = scmp.eq.s32.totalorder %s16, 0
    %p85 = por %p83, %p84
    %s87 = sadd.s32 %s86, 1
    %p90 = scmp.eq.s32.totalorder %s10, 1
    %p91 = scmp.ne.s32.totalorder %s86, %s88
    %p92 = scmp.eq.s32.totalorder %s10, 0
    %p93 = por %p91, %p92
    %p94 = scmp.ne.s32.totalorder %s86, %s88
    %p95 = scmp.eq.s32.totalorder %s15, 1
    %p96 = por %p94, %p95
    %p97 = scmp.ne.s32.totalorder %s88, %s89
    %p98 = scmp.eq.s32.totalorder %s15, 0
    %p99 = por %p97, %p98
    %p100 = scmp.ne.s32.totalorder %s88, %s89
    %p101 = scmp.eq.s32.totalorder %s16, 1
    %p102 = por %p100, %p101
    %p104 = scmp.ne.s32.totalorder %s89, %s103
    %p105 = scmp.eq.s32.totalorder %s16, 0
    %p106 = por %p104, %p105
    %s107 = ssub.s32 %s10, %s17
    %p108 = scmp.eq.s32.totalorder %s107, 0
    %s110 = sadd.s32 %s109, 1
    %s111 = scalar_select %p108, %s109, %s110
    %p114 = pneg %p108
    %p115 = scmp.eq.s32.totalorder %s10, 1
    %p116 = por %p114, %p115
    %p117 = scmp.ne.s32.totalorder %s109, %s112
    %p118 = scmp.eq.s32.totalorder %s10, 0
    %p119 = por %p117, %p118
    %p120 = scmp.ne.s32.totalorder %s109, %s112
    %p121 = scmp.eq.s32.totalorder %s15, 1
    %p122 = por %p120, %p121
    %p123 = scmp.ne.s32.totalorder %s112, %s113
    %p124 = scmp.eq.s32.totalorder %s15, 0
    %p125 = por %p123, %p124
    %p126 = scmp.ne.s32.totalorder %s112, %s113
    %p127 = scmp.eq.s32.totalorder %s16, 1
    %p128 = por %p126, %p127
    %p130 = scmp.ne.s32.totalorder %s113, %s129
    %p131 = scmp.eq.s32.totalorder %s16, 0
    %p132 = por %p130, %p131
    %p133 = scmp.le.s32.totalorder 1, %s10
    %p134 = scmp.lt.s32.totalorder %s10, 3
    %p135 = pnand %p133, %p134
    %p136 = pneg %p135
    // Predicated region
    $region9: #{projection_head_forward.4} parent=5 // pred_check
      _
    $region10: #{projection_head_forward.4} parent=5 // pred_check_branch
      %138 = sbr.rel (%p135) target = $region12
    $region11: #{projection_head_forward.4} parent=5 // pred_region
      %s139 = ssub.s32 %s10, 1
      // Predicated region
      $region13: #{projection_head_forward.4} parent=11 // pred_check
        %p140 = pneg %p57
      $region14: #{projection_head_forward.4} parent=11 // pred_check_branch
        %142 = sbr.rel (%p140) target = $region16
      $region15: #{projection_head_forward.4} parent=11 // pred_region
        _
      $region16: #{projection_head_forward.4} parent=11 // pred_fallthru
        _
      // Predicated region
      $region17: #{projection_head_forward.4} parent=11 // pred_check
        %p143 = pneg %p78
      $region18: #{projection_head_forward.4} parent=11 // pred_check_branch
        %145 = sbr.rel (%p143) target = $region20
      $region19: #{projection_head_forward.4} parent=11 // pred_region
        _
      $region20: #{projection_head_forward.4} parent=11 // pred_fallthru
        _
      // Predicated region
      $region21: #{projection_head_forward.4} parent=11 // pred_check
        %p146 = pneg %p99
      $region22: #{projection_head_forward.4} parent=11 // pred_check_branch
        %148 = sbr.rel (%p146) target = $region24
      $region23: #{projection_head_forward.4} parent=11 // pred_region
        _
      $region24: #{projection_head_forward.4} parent=11 // pred_fallthru
        _
    $region12: #{projection_head_forward.4} parent=5 // pred_fallthru
      _
    %p149 = scmp.lt.s32.totalorder %s10, 2
    // Predicated region
    $region25: #{projection_head_forward.4} parent=5 // pred_check
      %p150 = pneg %p149
    $region26: #{projection_head_forward.4} parent=5 // pred_check_branch
      %152 = sbr.rel (%p150) target = $region28
    $region27: #{projection_head_forward.4} parent=5 // pred_region
      // Predicated region
      $region29: #{projection_head_forward.4} parent=27 // pred_check
        %p153 = pneg %p30
      $region30: #{projection_head_forward.4} parent=27 // pred_check_branch
        %155 = sbr.rel (%p153) target = $region32
      $region31: #{projection_head_forward.4} parent=27 // pred_region
        %s156 = smul.u32 38, %s10
        %p157 = scmp.lt.s32.totalorder %s156, 75
        %s158 = scalar_select %p157, %s156, 75
        %s159 = smul.addr %s158, 4
        %s160 = scalar_lea.vmem %s0, %s159
        %s161 = smul.u32 38, %s10
      $region32: #{projection_head_forward.4} parent=27 // pred_fallthru
        _
    $region28: #{projection_head_forward.4} parent=5 // pred_fallthru
      _
    %p162 = scmp.le.s32.totalorder 1, %s10
    %p163 = scmp.lt.s32.totalorder %s10, 3
    %p164 = pnand %p162, %p163
    %p165 = pneg %p164
    // Predicated region
    $region33: #{projection_head_forward.4} parent=5 // pred_check
      _
    $region34: #{projection_head_forward.4} parent=5 // pred_check_branch
      %167 = sbr.rel (%p164) target = $region36
    $region35: #{projection_head_forward.4} parent=5 // pred_region
      %s168 = ssub.s32 %s10, 1
      %s169 = smul.u32 38, %s15
      %p170 = scmp.lt.s32.totalorder %s169, 75
      %s171 = scalar_select %p170, %s169, 75
      %s172 = smul.addr %s171, 4
      %s173 = scalar_lea.vmem %s0, %s172
      %p174 = pneg %p36
      %p175 = pneg %p33
      %p176 = pneg %p57
      %p177 = pneg %p54
      %p178 = pneg %p78
      %p179 = pneg %p75
      %p180 = pneg %p99
      %p181 = pneg %p96
      %p182 = pneg %p125
      %p183 = pneg %p122
      %s184 = smul.u32 38, %s15
      %p185 = scmp.lt.s32.totalorder %s184, 75
      %s186 = scalar_select %p185, %s184, 75
      %s187 = smul.addr %s186, 8
      %s188 = scalar_lea.vmem %s4, %s187
      %s189 = smul.u32 38, %s15
      %p190 = scmp.lt.s32.totalorder %s189, 75
      %s191 = scalar_select %p190, %s189, 75
      %s192 = smul.addr %s191, 4
      %s193 = scalar_lea.vmem %s0, %s192
      %s194 = smul.u32 38, %s15
      %s195 = smul.u32 38, %s15
      %p196 = scmp.lt.s32.totalorder %s195, 75
      %s197 = scalar_select %p196, %s195, 75
      %s198 = smul.addr %s197, 8
      %s199 = scalar_lea.vmem %s4, %s198
      %s200 = smul.u32 38, %s15
      %v202 = vld [vmem:[%s193] sm:$0xf]
      %v203 = vld [vmem:[%s193 + $0x4] sm:$0xf]
      %v204 = vld [vmem:[%s193 + $0x8] sm:$0xf]
      %v205 = vld [vmem:[%s193 + $0xc] sm:$0xf]
      %v206 = vld [vmem:[%s193 + $0x10] sm:$0xf]
      %v207 = vld [vmem:[%s193 + $0x14] sm:$0xf]
      %v208 = vld [vmem:[%s193 + $0x18] sm:$0xf]
      %v209 = vld [vmem:[%s193 + $0x1c] sm:$0xf]
      %v210 = vld [vmem:[%s193 + $0x20] sm:$0xf]
      %v211 = vld [vmem:[%s193 + $0x24] sm:$0xf]
      %v212 = vld [vmem:[%s193 + $0x28] sm:$0xf]
      %v213 = vld [vmem:[%s193 + $0x2c] sm:$0xf]
      %v214 = vld [vmem:[%s193 + $0x30] sm:$0xf]
      %v215 = vld [vmem:[%s193 + $0x34] sm:$0xf]
      %v216 = vld [vmem:[%s193 + $0x38] sm:$0xf]
      %v217 = vld [vmem:[%s193 + $0x3c] sm:$0xf]
      %v218 = vld [vmem:[%s193 + $0x40] sm:$0xf]
      %v219 = vld [vmem:[%s193 + $0x44] sm:$0xf]
      %v220 = vld [vmem:[%s193 + $0x48] sm:$0xf]
      %v221 = vld [vmem:[%s193 + $0x4c] sm:$0xf]
      %v222 = vld [vmem:[%s193 + $0x50] sm:$0xf]
      %v223 = vld [vmem:[%s193 + $0x54] sm:$0xf]
      %v224 = vld [vmem:[%s193 + $0x58] sm:$0xf]
      %v225 = vld [vmem:[%s193 + $0x5c] sm:$0xf]
      %v226 = vld [vmem:[%s193 + $0x60] sm:$0xf]
      %v227 = vld [vmem:[%s193 + $0x64] sm:$0xf]
      %v228 = vld [vmem:[%s193 + $0x68] sm:$0xf]
      %v229 = vld [vmem:[%s193 + $0x6c] sm:$0xf]
      %v230 = vld [vmem:[%s193 + $0x70] sm:$0xf]
      %v231 = vld [vmem:[%s193 + $0x74] sm:$0xf]
      %v232 = vld [vmem:[%s193 + $0x78] sm:$0xf]
      %v233 = vld [vmem:[%s193 + $0x7c] sm:$0xf]
      %v234 = vld [vmem:[%s193 + $0x80] sm:$0xf]
      %v235 = vld [vmem:[%s193 + $0x84] sm:$0xf]
      %v236 = vld [vmem:[%s193 + $0x88] sm:$0xf]
      %v237 = vld [vmem:[%s193 + $0x8c] sm:$0xf]
      %v238 = vld [vmem:[%s193 + $0x90] sm:$0xf]
      %v239 = vld [vmem:[%s193 + $0x94] sm:$0xf]
      %v240 = vld [vmem:[%s1] sm:$0xf]
      %v241 = vld [vmem:[%s1 + $0x4] sm:$0xf]
      %v242 = vld [vmem:[%s1 + $0x8] sm:$0xf]
      %v243 = vld [vmem:[%s1 + $0xc] sm:$0xf]
      %v244 = vld [vmem:[%s1 + $0x10] sm:$0xf]
      %v245 = vld [vmem:[%s1 + $0x14] sm:$0xf]
      %v246 = vld [vmem:[%s1 + $0x18] sm:$0xf]
      %v247 = vld [vmem:[%s1 + $0x1c] sm:$0xf]
      %v248 = vld [vmem:[%s1 + $0x20] sm:$0xf]
      %v249 = vld [vmem:[%s1 + $0x24] sm:$0xf]
      %v250 = vld [vmem:[%s1 + $0x28] sm:$0xf]
      %v251 = vld [vmem:[%s1 + $0x2c] sm:$0xf]
      %v252 = vld [vmem:[%s1 + $0x30] sm:$0xf]
      %v253 = vld [vmem:[%s1 + $0x34] sm:$0xf]
      %v254 = vld [vmem:[%s1 + $0x38] sm:$0xf]
      %v255 = vld [vmem:[%s1 + $0x3c] sm:$0xf]
      %v294 = vunpack.c.l.b16 %v202
      %v295 = vunpack.c.l.b16 %v203
      %v296 = vunpack.c.l.b16 %v204
      %v297 = vunpack.c.l.b16 %v205
      %v298 = vunpack.c.l.b16 %v206
      %v299 = vunpack.c.l.b16 %v207
      %v300 = vunpack.c.l.b16 %v208
      %v301 = vunpack.c.l.b16 %v209
      %v302 = vunpack.c.l.b16 %v210
      %v303 = vunpack.c.l.b16 %v211
      %v304 = vunpack.c.l.b16 %v212
      %v305 = vunpack.c.l.b16 %v213
      %v306 = vunpack.c.l.b16 %v214
      %v307 = vunpack.c.l.b16 %v215
      %v308 = vunpack.c.l.b16 %v216
      %v309 = vunpack.c.l.b16 %v217
      %v310 = vunpack.c.l.b16 %v218
      %v311 = vunpack.c.l.b16 %v219
      %v312 = vunpack.c.l.b16 %v220
      %v313 = vunpack.c.l.b16 %v221
      %v314 = vunpack.c.l.b16 %v222
      %v315 = vunpack.c.l.b16 %v223
      %v316 = vunpack.c.l.b16 %v224
      %v317 = vunpack.c.l.b16 %v225
      %v318 = vunpack.c.l.b16 %v226
      %v319 = vunpack.c.l.b16 %v227
      %v320 = vunpack.c.l.b16 %v228
      %v321 = vunpack.c.l.b16 %v229
      %v322 = vunpack.c.l.b16 %v230
      %v323 = vunpack.c.l.b16 %v231
      %v324 = vunpack.c.l.b16 %v232
      %v325 = vunpack.c.l.b16 %v233
      %v326 = vunpack.c.l.b16 %v234
      %v327 = vunpack.c.l.b16 %v235
      %v328 = vunpack.c.l.b16 %v236
      %v329 = vunpack.c.l.b16 %v237
      %v330 = vunpack.c.l.b16 %v238
      %v331 = vunpack.c.l.b16 %v239
      %v332 = vpack.c.b16 %v295, %v294
      %v333 = vpack.c.b16 %v297, %v296
      %v334 = vpack.c.b16 %v299, %v298
      %v335 = vpack.c.b16 %v301, %v300
      %v336 = vpack.c.b16 %v303, %v302
      %v337 = vpack.c.b16 %v305, %v304
      %v338 = vpack.c.b16 %v307, %v306
      %v339 = vpack.c.b16 %v309, %v308
      %v340 = vpack.c.b16 %v311, %v310
      %v341 = vpack.c.b16 %v313, %v312
      %v342 = vpack.c.b16 %v315, %v314
      %v343 = vpack.c.b16 %v317, %v316
      %v344 = vpack.c.b16 %v319, %v318
      %v345 = vpack.c.b16 %v321, %v320
      %v346 = vpack.c.b16 %v323, %v322
      %v347 = vpack.c.b16 %v325, %v324
      %v348 = vpack.c.b16 %v327, %v326
      %v349 = vpack.c.b16 %v329, %v328
      %v350 = vpack.c.b16 %v331, %v330
      %v386 = vunpack.c.l.b16 %v240
      %v387 = vunpack.c.l.b16 %v241
      %v388 = vunpack.c.l.b16 %v242
      %v389 = vunpack.c.l.b16 %v243
      %v390 = vunpack.c.l.b16 %v244
      %v391 = vunpack.c.l.b16 %v245
      %v392 = vunpack.c.l.b16 %v246
      %v393 = vunpack.c.l.b16 %v247
      %v394 = vunpack.c.l.b16 %v248
      %v395 = vunpack.c.l.b16 %v249
      %v396 = vunpack.c.l.b16 %v250
      %v397 = vunpack.c.l.b16 %v251
      %v398 = vunpack.c.l.b16 %v252
      %v399 = vunpack.c.l.b16 %v253
      %v400 = vunpack.c.l.b16 %v254
      %v401 = vunpack.c.l.b16 %v255
      %v402 = vpack.c.b16 %v387, %v386
      %v403 = vpack.c.b16 %v389, %v388
      %v404 = vpack.c.b16 %v391, %v390
      %v405 = vpack.c.b16 %v393, %v392
      %v406 = vpack.c.b16 %v395, %v394
      %v407 = vpack.c.b16 %v397, %v396
      %v408 = vpack.c.b16 %v399, %v398
      %v409 = vpack.c.b16 %v401, %v400
      %418 = vmatprep.subr.bf16.mxu0 0
      %419 = vmatpush1.bf16.msra.mxu0 %v409
      %420 = vmatprep.subr.bf16.mxu0 0
      %421 = vmatpush1.bf16.msra.mxu0 %v408
      %422 = vmatprep.subr.bf16.mxu0 0
      %423 = vmatpush1.bf16.msra.mxu0 %v407
      %424 = vmatprep.subr.bf16.mxu0 0
      %425 = vmatpush1.bf16.msra.mxu0 %v406
      %426 = vmatprep.subr.bf16.mxu0 0
      %427 = vmatpush1.bf16.msra.mxu0 %v405
      %428 = vmatprep.subr.bf16.mxu0 0
      %429 = vmatpush1.bf16.msra.mxu0 %v404
      %430 = vmatprep.subr.bf16.mxu0 0
      %431 = vmatpush1.bf16.msra.mxu0 %v403
      %432 = vmatprep.subr.bf16.mxu0 0
      %433 = vmatpush1.bf16.msra.mxu0 %v402
      %434 = vmatprep.subr.bf16.mxu0 0
      %435 = vmatpush2.bf16.msra.mxu0 0
      %436 = vmatprep.subr.bf16.mxu0 0
      %437 = vmatpush2.bf16.msra.mxu0 0
      %438 = vmatprep.subr.bf16.mxu0 0
      %439 = vmatpush2.bf16.msra.mxu0 0
      %440 = vmatprep.subr.bf16.mxu0 0
      %441 = vmatpush2.bf16.msra.mxu0 0
      %442 = vmatprep.subr.bf16.mxu0 0
      %443 = vmatpush2.bf16.msra.mxu0 0
      %444 = vmatprep.subr.bf16.mxu0 0
      %445 = vmatpush2.bf16.msra.mxu0 0
      %446 = vmatprep.subr.bf16.mxu0 0
      %447 = vmatpush2.bf16.msra.mxu0 0
      %448 = vmatprep.subr.bf16.mxu0 0
      %449 = vmatpush2.bf16.msra.mxu0 0
      %450 = vmatprep.mubr.bf16.mxu0 0
      %451 = vmatmul.mubr.bf16.gmra.mxu0 %v332
      %v452 = vpop.f32.mrf.mxu0
      %v453 = vadd.f32 0.0, %v452
      %v454 = vpop.f32.mrf.mxu0
      %v455 = vpop.f32.mrf.mxu0
      %v456 = vadd.f32 0.0, %v455
      %v457 = vpop.f32.mrf.mxu0
      %458 = vmatprep.mubr.bf16.mxu0 0
      %459 = vmatmul.mubr.bf16.gmra.mxu0 %v333
      %v460 = vpop.f32.mrf.mxu0
      %v461 = vadd.f32 0.0, %v460
      %v462 = vpop.f32.mrf.mxu0
      %v463 = vpop.f32.mrf.mxu0
      %v464 = vadd.f32 0.0, %v463
      %v465 = vpop.f32.mrf.mxu0
      %466 = vmatprep.mubr.bf16.mxu0 0
      %467 = vmatmul.mubr.bf16.gmra.mxu0 %v334
      %v468 = vpop.f32.mrf.mxu0
      %v469 = vadd.f32 0.0, %v468
      %v470 = vpop.f32.mrf.mxu0
      %v471 = vpop.f32.mrf.mxu0
      %v472 = vadd.f32 0.0, %v471
      %v473 = vpop.f32.mrf.mxu0
      %474 = vmatprep.mubr.bf16.mxu0 0
      %475 = vmatmul.mubr.bf16.gmra.mxu0 %v335
      %v476 = vpop.f32.mrf.mxu0
      %v477 = vadd.f32 0.0, %v476
      %v478 = vpop.f32.mrf.mxu0
      %v479 = vpop.f32.mrf.mxu0
      %v480 = vadd.f32 0.0, %v479
      %v481 = vpop.f32.mrf.mxu0
      %482 = vmatprep.mubr.bf16.mxu0 0
      %483 = vmatmul.mubr.bf16.gmra.mxu0 %v336
      %v484 = vpop.f32.mrf.mxu0
      %v485 = vadd.f32 0.0, %v484
      %v486 = vpop.f32.mrf.mxu0
      %v487 = vpop.f32.mrf.mxu0
      %v488 = vadd.f32 0.0, %v487
      %v489 = vpop.f32.mrf.mxu0
      %490 = vmatprep.mubr.bf16.mxu0 0
      %491 = vmatmul.mubr.bf16.gmra.mxu0 %v337
      %v492 = vpop.f32.mrf.mxu0
      %v493 = vadd.f32 0.0, %v492
      %v494 = vpop.f32.mrf.mxu0
      %v495 = vpop.f32.mrf.mxu0
      %v496 = vadd.f32 0.0, %v495
      %v497 = vpop.f32.mrf.mxu0
      %498 = vmatprep.mubr.bf16.mxu0 0
      %499 = vmatmul.mubr.bf16.gmra.mxu0 %v338
      %v500 = vpop.f32.mrf.mxu0
      %v501 = vadd.f32 0.0, %v500
      %v502 = vpop.f32.mrf.mxu0
      %v503 = vpop.f32.mrf.mxu0
      %v504 = vadd.f32 0.0, %v503
      %v505 = vpop.f32.mrf.mxu0
      %506 = vmatprep.mubr.bf16.mxu0 0
      %507 = vmatmul.mubr.bf16.gmra.mxu0 %v339
      %v508 = vpop.f32.mrf.mxu0
      %v509 = vadd.f32 0.0, %v508
      %v510 = vpop.f32.mrf.mxu0
      %v511 = vpop.f32.mrf.mxu0
      %v512 = vadd.f32 0.0, %v511
      %v513 = vpop.f32.mrf.mxu0
      %514 = vmatprep.mubr.bf16.mxu0 0
      %515 = vmatmul.mubr.bf16.gmra.mxu0 %v340
      %v516 = vpop.f32.mrf.mxu0
      %v517 = vadd.f32 0.0, %v516
      %v518 = vpop.f32.mrf.mxu0
      %v519 = vpop.f32.mrf.mxu0
      %v520 = vadd.f32 0.0, %v519
      %v521 = vpop.f32.mrf.mxu0
      %522 = vmatprep.mubr.bf16.mxu0 0
      %523 = vmatmul.mubr.bf16.gmra.mxu0 %v341
      %v524 = vpop.f32.mrf.mxu0
      %v525 = vadd.f32 0.0, %v524
      %v526 = vpop.f32.mrf.mxu0
      %v527 = vpop.f32.mrf.mxu0
      %v528 = vadd.f32 0.0, %v527
      %v529 = vpop.f32.mrf.mxu0
      %530 = vmatprep.mubr.bf16.mxu0 0
      %531 = vmatmul.mubr.bf16.gmra.mxu0 %v342
      %v532 = vpop.f32.mrf.mxu0
      %v533 = vadd.f32 0.0, %v532
      %v534 = vpop.f32.mrf.mxu0
      %v535 = vpop.f32.mrf.mxu0
      %v536 = vadd.f32 0.0, %v535
      %v537 = vpop.f32.mrf.mxu0
      %538 = vmatprep.mubr.bf16.mxu0 0
      %539 = vmatmul.mubr.bf16.gmra.mxu0 %v343
      %v540 = vpop.f32.mrf.mxu0
      %v541 = vadd.f32 0.0, %v540
      %v542 = vpop.f32.mrf.mxu0
      %v543 = vpop.f32.mrf.mxu0
      %v544 = vadd.f32 0.0, %v543
      %v545 = vpop.f32.mrf.mxu0
      %546 = vmatprep.mubr.bf16.mxu0 0
      %547 = vmatmul.mubr.bf16.gmra.mxu0 %v344
      %v548 = vpop.f32.mrf.mxu0
      %v549 = vadd.f32 0.0, %v548
      %v550 = vpop.f32.mrf.mxu0
      %v551 = vpop.f32.mrf.mxu0
      %v552 = vadd.f32 0.0, %v551
      %v553 = vpop.f32.mrf.mxu0
      %554 = vmatprep.mubr.bf16.mxu0 0
      %555 = vmatmul.mubr.bf16.gmra.mxu0 %v345
      %v556 = vpop.f32.mrf.mxu0
      %v557 = vadd.f32 0.0, %v556
      %v558 = vpop.f32.mrf.mxu0
      %v559 = vpop.f32.mrf.mxu0
      %v560 = vadd.f32 0.0, %v559
      %v561 = vpop.f32.mrf.mxu0
      %562 = vmatprep.mubr.bf16.mxu0 0
      %563 = vmatmul.mubr.bf16.gmra.mxu0 %v346
      %v564 = vpop.f32.mrf.mxu0
      %v565 = vadd.f32 0.0, %v564
      %v566 = vpop.f32.mrf.mxu0
      %v567 = vpop.f32.mrf.mxu0
      %v568 = vadd.f32 0.0, %v567
      %v569 = vpop.f32.mrf.mxu0
      %570 = vmatprep.mubr.bf16.mxu0 0
      %571 = vmatmul.mubr.bf16.gmra.mxu0 %v347
      %v572 = vpop.f32.mrf.mxu0
      %v573 = vadd.f32 0.0, %v572
      %v574 = vpop.f32.mrf.mxu0
      %v575 = vpop.f32.mrf.mxu0
      %v576 = vadd.f32 0.0, %v575
      %v577 = vpop.f32.mrf.mxu0
      %578 = vmatprep.mubr.bf16.mxu0 0
      %579 = vmatmul.mubr.bf16.gmra.mxu0 %v348
      %v580 = vpop.f32.mrf.mxu0
      %v581 = vadd.f32 0.0, %v580
      %v582 = vpop.f32.mrf.mxu0
      %v583 = vpop.f32.mrf.mxu0
      %v584 = vadd.f32 0.0, %v583
      %v585 = vpop.f32.mrf.mxu0
      %586 = vmatprep.mubr.bf16.mxu0 0
      %587 = vmatmul.mubr.bf16.gmra.mxu0 %v349
      %v588 = vpop.f32.mrf.mxu0
      %v589 = vadd.f32 0.0, %v588
      %v590 = vpop.f32.mrf.mxu0
      %v591 = vpop.f32.mrf.mxu0
      %v592 = vadd.f32 0.0, %v591
      %v593 = vpop.f32.mrf.mxu0
      %594 = vmatprep.mubr.bf16.mxu0 0
      %595 = vmatmul.mubr.bf16.gmra.mxu0 %v350
      %v596 = vpop.f32.mrf.mxu0
      %v597 = vadd.f32 0.0, %v596
      %v598 = vpop.f32.mrf.mxu0
      %v599 = vpop.f32.mrf.mxu0
      %v600 = vadd.f32 0.0, %v599
      %v601 = vpop.f32.mrf.mxu0
      %602 = vdwg.mxu0
      %v603 = vld [vmem:[%s2] sm:$0x1]
      %v605 = vlaneseq
      %v606 = vshrl.u32 %v605, 7
      %v607 = vsub.s32 0, %v606
      %v608 = vrot.slane %v603, %v607
      %v610 = vmul.f32 %v453, %v608
      %v611 = vmul.f32 %v456, %v608
      %v612 = vmul.f32 %v461, %v608
      %v613 = vmul.f32 %v464, %v608
      %v614 = vmul.f32 %v469, %v608
      %v615 = vmul.f32 %v472, %v608
      %v616 = vmul.f32 %v477, %v608
      %v617 = vmul.f32 %v480, %v608
      %v618 = vmul.f32 %v485, %v608
      %v619 = vmul.f32 %v488, %v608
      %v620 = vmul.f32 %v493, %v608
      %v621 = vmul.f32 %v496, %v608
      %v622 = vmul.f32 %v501, %v608
      %v623 = vmul.f32 %v504, %v608
      %v624 = vmul.f32 %v509, %v608
      %v625 = vmul.f32 %v512, %v608
      %v626 = vmul.f32 %v517, %v608
      %v627 = vmul.f32 %v520, %v608
      %v628 = vmul.f32 %v525, %v608
      %v629 = vmul.f32 %v528, %v608
      %v630 = vmul.f32 %v533, %v608
      %v631 = vmul.f32 %v536, %v608
      %v632 = vmul.f32 %v541, %v608
      %v633 = vmul.f32 %v544, %v608
      %v634 = vmul.f32 %v549, %v608
      %v635 = vmul.f32 %v552, %v608
      %v636 = vmul.f32 %v557, %v608
      %v637 = vmul.f32 %v560, %v608
      %v638 = vmul.f32 %v565, %v608
      %v639 = vmul.f32 %v568, %v608
      %v640 = vmul.f32 %v573, %v608
      %v641 = vmul.f32 %v576, %v608
      %v642 = vmul.f32 %v581, %v608
      %v643 = vmul.f32 %v584, %v608
      %v644 = vmul.f32 %v589, %v608
      %v645 = vmul.f32 %v592, %v608
      %v646 = vmul.f32 %v597, %v608
      %v647 = vmul.f32 %v600, %v608
      %v648 = vld [vmem:[%s3] sm:$0x1]
      %v650 = vlaneseq
      %v651 = vshrl.u32 %v650, 7
      %v652 = vsub.s32 0, %v651
      %v653 = vrot.slane %v648, %v652
      %v655 = vadd.f32 %v610, %v653
      %v656 = vadd.f32 %v611, %v653
      %v657 = vadd.f32 %v612, %v653
      %v658 = vadd.f32 %v613, %v653
      %v659 = vadd.f32 %v614, %v653
      %v660 = vadd.f32 %v615, %v653
      %v661 = vadd.f32 %v616, %v653
      %v662 = vadd.f32 %v617, %v653
      %v663 = vadd.f32 %v618, %v653
      %v664 = vadd.f32 %v619, %v653
      %v665 = vadd.f32 %v620, %v653
      %v666 = vadd.f32 %v621, %v653
      %v667 = vadd.f32 %v622, %v653
      %v668 = vadd.f32 %v623, %v653
      %v669 = vadd.f32 %v624, %v653
      %v670 = vadd.f32 %v625, %v653
      %v671 = vadd.f32 %v626, %v653
      %v672 = vadd.f32 %v627, %v653
      %v673 = vadd.f32 %v628, %v653
      %v674 = vadd.f32 %v629, %v653
      %v675 = vadd.f32 %v630, %v653
      %v676 = vadd.f32 %v631, %v653
      %v677 = vadd.f32 %v632, %v653
      %v678 = vadd.f32 %v633, %v653
      %v679 = vadd.f32 %v634, %v653
      %v680 = vadd.f32 %v635, %v653
      %v681 = vadd.f32 %v636, %v653
      %v682 = vadd.f32 %v637, %v653
      %v683 = vadd.f32 %v638, %v653
      %v684 = vadd.f32 %v639, %v653
      %v685 = vadd.f32 %v640, %v653
      %v686 = vadd.f32 %v641, %v653
      %v687 = vadd.f32 %v642, %v653
      %v688 = vadd.f32 %v643, %v653
      %v689 = vadd.f32 %v644, %v653
      %v690 = vadd.f32 %v645, %v653
      %v691 = vadd.f32 %v646, %v653
      %v692 = vadd.f32 %v647, %v653
      %v693 = vmax.f32 %v655, 0.0
      %v694 = vmax.f32 %v656, 0.0
      %v695 = vmax.f32 %v657, 0.0
      %v696 = vmax.f32 %v658, 0.0
      %v697 = vmax.f32 %v659, 0.0
      %v698 = vmax.f32 %v660, 0.0
      %v699 = vmax.f32 %v661, 0.0
      %v700 = vmax.f32 %v662, 0.0
      %v701 = vmax.f32 %v663, 0.0
      %v702 = vmax.f32 %v664, 0.0
      %v703 = vmax.f32 %v665, 0.0
      %v704 = vmax.f32 %v666, 0.0
      %v705 = vmax.f32 %v667, 0.0
      %v706 = vmax.f32 %v668, 0.0
      %v707 = vmax.f32 %v669, 0.0
      %v708 = vmax.f32 %v670, 0.0
      %v709 = vmax.f32 %v671, 0.0
      %v710 = vmax.f32 %v672, 0.0
      %v711 = vmax.f32 %v673, 0.0
      %v712 = vmax.f32 %v674, 0.0
      %v713 = vmax.f32 %v675, 0.0
      %v714 = vmax.f32 %v676, 0.0
      %v715 = vmax.f32 %v677, 0.0
      %v716 = vmax.f32 %v678, 0.0
      %v717 = vmax.f32 %v679, 0.0
      %v718 = vmax.f32 %v680, 0.0
      %v719 = vmax.f32 %v681, 0.0
      %v720 = vmax.f32 %v682, 0.0
      %v721 = vmax.f32 %v683, 0.0
      %v722 = vmax.f32 %v684, 0.0
      %v723 = vmax.f32 %v685, 0.0
      %v724 = vmax.f32 %v686, 0.0
      %v725 = vmax.f32 %v687, 0.0
      %v726 = vmax.f32 %v688, 0.0
      %v727 = vmax.f32 %v689, 0.0
      %v728 = vmax.f32 %v690, 0.0
      %v729 = vmax.f32 %v691, 0.0
      %v730 = vmax.f32 %v692, 0.0
      %731 = vst [vmem:[%s199] sm:$0xff] %v693
      %732 = vst [vmem:[%s199 + $0x8] sm:$0xff] %v694
      %733 = vst [vmem:[%s199 + $0x10] sm:$0xff] %v695
      %734 = vst [vmem:[%s199 + $0x18] sm:$0xff] %v696
      %735 = vst [vmem:[%s199 + $0x20] sm:$0xff] %v697
      %736 = vst [vmem:[%s199 + $0x28] sm:$0xff] %v698
      %737 = vst [vmem:[%s199 + $0x30] sm:$0xff] %v699
      %738 = vst [vmem:[%s199 + $0x38] sm:$0xff] %v700
      %739 = vst [vmem:[%s199 + $0x40] sm:$0xff] %v701
      %740 = vst [vmem:[%s199 + $0x48] sm:$0xff] %v702
      %741 = vst [vmem:[%s199 + $0x50] sm:$0xff] %v703
      %742 = vst [vmem:[%s199 + $0x58] sm:$0xff] %v704
      %743 = vst [vmem:[%s199 + $0x60] sm:$0xff] %v705
      %744 = vst [vmem:[%s199 + $0x68] sm:$0xff] %v706
      %745 = vst [vmem:[%s199 + $0x70] sm:$0xff] %v707
      %746 = vst [vmem:[%s199 + $0x78] sm:$0xff] %v708
      %747 = vst [vmem:[%s199 + $0x80] sm:$0xff] %v709
      %748 = vst [vmem:[%s199 + $0x88] sm:$0xff] %v710
      %749 = vst [vmem:[%s199 + $0x90] sm:$0xff] %v711
      %750 = vst [vmem:[%s199 + $0x98] sm:$0xff] %v712
      %751 = vst [vmem:[%s199 + $0xa0] sm:$0xff] %v713
      %752 = vst [vmem:[%s199 + $0xa8] sm:$0xff] %v714
      %753 = vst [vmem:[%s199 + $0xb0] sm:$0xff] %v715
      %754 = vst [vmem:[%s199 + $0xb8] sm:$0xff] %v716
      %755 = vst [vmem:[%s199 + $0xc0] sm:$0xff] %v717
      %756 = vst [vmem:[%s199 + $0xc8] sm:$0xff] %v718
      %757 = vst [vmem:[%s199 + $0xd0] sm:$0xff] %v719
      %758 = vst [vmem:[%s199 + $0xd8] sm:$0xff] %v720
      %759 = vst [vmem:[%s199 + $0xe0] sm:$0xff] %v721
      %760 = vst [vmem:[%s199 + $0xe8] sm:$0xff] %v722
      %761 = vst [vmem:[%s199 + $0xf0] sm:$0xff] %v723
      %762 = vst [vmem:[%s199 + $0xf8] sm:$0xff] %v724
      %763 = vst [vmem:[%s199 + $0x100] sm:$0xff] %v725
      %764 = vst [vmem:[%s199 + $0x108] sm:$0xff] %v726
      %765 = vst [vmem:[%s199 + $0x110] sm:$0xff] %v727
      %766 = vst [vmem:[%s199 + $0x118] sm:$0xff] %v728
      %767 = vst [vmem:[%s199 + $0x120] sm:$0xff] %v729
      %768 = vst [vmem:[%s199 + $0x128] sm:$0xff] %v730
      %s769 = smul.u32 38, %s15
      %p770 = scmp.lt.s32.totalorder %s769, 75
      %s771 = scalar_select %p770, %s769, 75
      %s772 = smul.addr %s771, 8
      %s773 = scalar_lea.vmem %s4, %s772
      // Predicated region
      $region37: #{projection_head_forward.4} parent=35 // pred_check
        %p774 = pneg %p122
      $region38: #{projection_head_forward.4} parent=35 // pred_check_branch
        %776 = sbr.rel (%p774) target = $region40
      $region39: #{projection_head_forward.4} parent=35 // pred_region
        %s777 = smul.u32 38, %s15
      $region40: #{projection_head_forward.4} parent=35 // pred_fallthru
        _
    $region36: #{projection_head_forward.4} parent=5 // pred_fallthru
      _
    %p778 = scmp.le.s32.totalorder 2, %s10
    // Predicated region
    $region41: #{projection_head_forward.4} parent=5 // pred_check
      %p779 = pneg %p778
    $region42: #{projection_head_forward.4} parent=5 // pred_check_branch
      %781 = sbr.rel (%p779) target = $region44
    $region43: #{projection_head_forward.4} parent=5 // pred_region
      %s782 = ssub.s32 %s10, 2
      // Predicated region
      $region45: #{projection_head_forward.4} parent=43 // pred_check
        %p783 = pneg %p128
      $region46: #{projection_head_forward.4} parent=43 // pred_check_branch
        %785 = sbr.rel (%p783) target = $region48
      $region47: #{projection_head_forward.4} parent=43 // pred_region
        %s786 = smul.u32 38, %s16
        %p787 = scmp.lt.s32.totalorder %s786, 75
        %s788 = scalar_select %p787, %s786, 75
        %s789 = smul.addr %s788, 8
        %s790 = scalar_lea.vmem %s4, %s789
      $region48: #{projection_head_forward.4} parent=43 // pred_fallthru
        _
    $region44: #{projection_head_forward.4} parent=5 // pred_fallthru
      _
  $region6: #{projection_head_forward.4} parent=0 // loop_footer
    %s14 = sadd.s32 1, %s10
  $region7: #{projection_head_forward.4} parent=0 // loop_footer_branch
    %9 = sbr.rel target = $region3
  $region8: #{projection_head_forward.4} parent=0 // loop_exit
    _

// kernel: projection_head_forward.5
$region0: #{projection_head_forward.5}
  #allocation0 [shape = 'u32[]', space=smem, size = 0x4, offset = 0x4, fixed_abs, tag = 'smem constant byte address 0x4 - core index']
  #allocation1 [shape = 'u32[144,128]{1,0:T(1,128)}', space=vmem, size = 0x12000, scoped, tag = 'internal scratch']
  %s0 = inlined_call_operand.vmem [shape: bf16[2208,128], index: 0, kind: input, shape index: {}]
  %s1 = inlined_call_operand.vmem [shape: bf16[128,128], index: 1, kind: input, shape index: {}]
  %s2 = inlined_call_operand.vmem [shape: f32[1,128], index: 2, kind: input, shape index: {}]
  %s3 = inlined_call_operand.vmem [shape: f32[1,128], index: 3, kind: input, shape index: {}]
  %s4 = inlined_call_operand.vmem [shape: f32[128,128], index: 4, kind: input, shape index: {}]
  %s5 = inlined_call_operand.vmem [shape: f32[1,128], index: 5, kind: input, shape index: {}]
  %s6 = inlined_call_operand.vmem [shape: f32[128,128], index: 6, kind: input, shape index: {}]
  %s7 = inlined_call_operand.vmem [shape: f32[2208,128], index: 7, kind: output, shape index: {}]
  %s8 = sld [smem:[#allocation0]]
  $region61: #{projection_head_forward.5} parent=0
    _
  %s10 = ssub.s32 1, %s8
  %s11 = scalar_select 0, %s10, %s8
  loop: start=0, step=1, limit=5
  $region2: #{projection_head_forward.5} parent=0 // loop_pre_header
    _
  $region3: #{projection_head_forward.5} parent=0 // loop_header
    %s13 = sphi 0, %s17
    %p14 = scmp.ge.s32.totalorder %s13, 5
    %s23 = sphi 0, %s25
    %s26 = sphi 0, %s23
    %s27 = sphi 0, %s26
    %s43 = sphi 0, %s27
    %s47 = sphi 0, %s47
    %s49 = sphi 0, %s47
    %s50 = sphi 0, %s49
    %s64 = sphi 0, %s50
    %s68 = sphi 0, %s68
    %s70 = sphi 0, %s68
    %s71 = sphi 0, %s70
    %s85 = sphi 0, %s71
    %s89 = sphi 0, %s89
    %s91 = sphi 0, %s89
    %s92 = sphi 0, %s91
    %s106 = sphi 0, %s92
    %s110 = sphi 0, %s110
    %s112 = sphi 0, %s110
    %s113 = sphi 0, %s112
    %s127 = sphi 0, %s113
    %s131 = sphi 0, %s131
    %s133 = sphi 0, %s131
    %s134 = sphi 0, %s133
    %s148 = sphi 0, %s134
    %s152 = sphi 0, %s152
    %s154 = sphi 0, %s152
    %s155 = sphi 0, %s154
    %s169 = sphi 0, %s155
    %s175 = sphi 0, %s177
    %s178 = sphi 0, %s175
    %s179 = sphi 0, %s178
    %s195 = sphi 0, %s179
  $region4: #{projection_head_forward.5} parent=0 // loop_header_branch
    %16 = sbr.rel (%p14) target = $region8
  $region5: #{projection_head_forward.5} parent=0 // loop_body
    %s18 = ssub.s32 %s13, 1
    %s19 = ssub.s32 %s13, 2
    %s20 = sadd.s32 %s13, 1
    %s21 = ssub.s32 %s13, %s20
    %p22 = scmp.eq.s32.totalorder %s21, 0
    %s24 = sadd.s32 %s23, 1
    %s25 = scalar_select %p22, %s23, %s24
    %p28 = pneg %p22
    %p29 = scmp.eq.s32.totalorder %s13, 2
    %p30 = por %p28, %p29
    %p31 = scmp.ne.s32.totalorder %s23, %s26
    %p32 = scmp.eq.s32.totalorder %s13, 0
    %p33 = por %p31, %p32
    %p34 = scmp.ne.s32.totalorder %s23, %s26
    %p35 = scmp.eq.s32.totalorder %s18, 2
    %p36 = por %p34, %p35
    %p37 = scmp.ne.s32.totalorder %s26, %s27
    %p38 = scmp.eq.s32.totalorder %s18, 0
    %p39 = por %p37, %p38
    %p40 = scmp.ne.s32.totalorder %s26, %s27
    %p41 = scmp.eq.s32.totalorder %s19, 2
    %p42 = por %p40, %p41
    %p44 = scmp.ne.s32.totalorder %s27, %s43
    %p45 = scmp.eq.s32.totalorder %s19, 0
    %p46 = por %p44, %p45
    %s48 = sadd.s32 %s47, 1
    %p51 = scmp.eq.s32.totalorder %s13, 2
    %p52 = scmp.ne.s32.totalorder %s47, %s49
    %p53 = scmp.eq.s32.totalorder %s13, 0
    %p54 = por %p52, %p53
    %p55 = scmp.ne.s32.totalorder %s47, %s49
    %p56 = scmp.eq.s32.totalorder %s18, 2
    %p57 = por %p55, %p56
    %p58 = scmp.ne.s32.totalorder %s49, %s50
    %p59 = scmp.eq.s32.totalorder %s18, 0
    %p60 = por %p58, %p59
    %p61 = scmp.ne.s32.totalorder %s49, %s50
    %p62 = scmp.eq.s32.totalorder %s19, 2
    %p63 = por %p61, %p62
    %p65 = scmp.ne.s32.totalorder %s50, %s64
    %p66 = scmp.eq.s32.totalorder %s19, 0
    %p67 = por %p65, %p66
    %s69 = sadd.s32 %s68, 1
    %p72 = scmp.eq.s32.totalorder %s13, 2
    %p73 = scmp.ne.s32.totalorder %s68, %s70
    %p74 = scmp.eq.s32.totalorder %s13, 0
    %p75 = por %p73, %p74
    %p76 = scmp.ne.s32.totalorder %s68, %s70
    %p77 = scmp.eq.s32.totalorder %s18, 2
    %p78 = por %p76, %p77
    %p79 = scmp.ne.s32.totalorder %s70, %s71
    %p80 = scmp.eq.s32.totalorder %s18, 0
    %p81 = por %p79, %p80
    %p82 = scmp.ne.s32.totalorder %s70, %s71
    %p83 = scmp.eq.s32.totalorder %s19, 2
    %p84 = por %p82, %p83
    %p86 = scmp.ne.s32.totalorder %s71, %s85
    %p87 = scmp.eq.s32.totalorder %s19, 0
    %p88 = por %p86, %p87
    %s90 = sadd.s32 %s89, 1
    %p93 = scmp.eq.s32.totalorder %s13, 2
    %p94 = scmp.ne.s32.totalorder %s89, %s91
    %p95 = scmp.eq.s32.totalorder %s13, 0
    %p96 = por %p94, %p95
    %p97 = scmp.ne.s32.totalorder %s89, %s91
    %p98 = scmp.eq.s32.totalorder %s18, 2
    %p99 = por %p97, %p98
    %p100 = scmp.ne.s32.totalorder %s91, %s92
    %p101 = scmp.eq.s32.totalorder %s18, 0
    %p102 = por %p100, %p101
    %p103 = scmp.ne.s32.totalorder %s91, %s92
    %p104 = scmp.eq.s32.totalorder %s19, 2
    %p105 = por %p103, %p104
    %p107 = scmp.ne.s32.totalorder %s92, %s106
    %p108 = scmp.eq.s32.totalorder %s19, 0
    %p109 = por %p107, %p108
    %s111 = sadd.s32 %s110, 1
    %p114 = scmp.eq.s32.totalorder %s13, 2
    %p115 = scmp.ne.s32.totalorder %s110, %s112
    %p116 = scmp.eq.s32.totalorder %s13, 0
    %p117 = por %p115, %p116
    %p118 = scmp.ne.s32.totalorder %s110, %s112
    %p119 = scmp.eq.s32.totalorder %s18, 2
    %p120 = por %p118, %p119
    %p121 = scmp.ne.s32.totalorder %s112, %s113
    %p122 = scmp.eq.s32.totalorder %s18, 0
    %p123 = por %p121, %p122
    %p124 = scmp.ne.s32.totalorder %s112, %s113
    %p125 = scmp.eq.s32.totalorder %s19, 2
    %p126 = por %p124, %p125
    %p128 = scmp.ne.s32.totalorder %s113, %s127
    %p129 = scmp.eq.s32.totalorder %s19, 0
    %p130 = por %p128, %p129
    %s132 = sadd.s32 %s131, 1
    %p135 = scmp.eq.s32.totalorder %s13, 2
    %p136 = scmp.ne.s32.totalorder %s131, %s133
    %p137 = scmp.eq.s32.totalorder %s13, 0
    %p138 = por %p136, %p137
    %p139 = scmp.ne.s32.totalorder %s131, %s133
    %p140 = scmp.eq.s32.totalorder %s18, 2
    %p141 = por %p139, %p140
    %p142 = scmp.ne.s32.totalorder %s133, %s134
    %p143 = scmp.eq.s32.totalorder %s18, 0
    %p144 = por %p142, %p143
    %p145 = scmp.ne.s32.totalorder %s133, %s134
    %p146 = scmp.eq.s32.totalorder %s19, 2
    %p147 = por %p145, %p146
    %p149 = scmp.ne.s32.totalorder %s134, %s148
    %p150 = scmp.eq.s32.totalorder %s19, 0
    %p151 = por %p149, %p150
    %s153 = sadd.s32 %s152, 1
    %p156 = scmp.eq.s32.totalorder %s13, 2
    %p157 = scmp.ne.s32.totalorder %s152, %s154
    %p158 = scmp.eq.s32.totalorder %s13, 0
    %p159 = por %p157, %p158
    %p160 = scmp.ne.s32.totalorder %s152, %s154
    %p161 = scmp.eq.s32.totalorder %s18, 2
    %p162 = por %p160, %p161
    %p163 = scmp.ne.s32.totalorder %s154, %s155
    %p164 = scmp.eq.s32.totalorder %s18, 0
    %p165 = por %p163, %p164
    %p166 = scmp.ne.s32.totalorder %s154, %s155
    %p167 = scmp.eq.s32.totalorder %s19, 2
    %p168 = por %p166, %p167
    %p170 = scmp.ne.s32.totalorder %s155, %s169
    %p171 = scmp.eq.s32.totalorder %s19, 0
    %p172 = por %p170, %p171
    %s173 = ssub.s32 %s13, %s20
    %p174 = scmp.eq.s32.totalorder %s173, 0
    %s176 = sadd.s32 %s175, 1
    %s177 = scalar_select %p174, %s175, %s176
    %p180 = pneg %p174
    %p181 = scmp.eq.s32.totalorder %s13, 2
    %p182 = por %p180, %p181
    %p183 = scmp.ne.s32.totalorder %s175, %s178
    %p184 = scmp.eq.s32.totalorder %s13, 0
    %p185 = por %p183, %p184
    %p186 = scmp.ne.s32.totalorder %s175, %s178
    %p187 = scmp.eq.s32.totalorder %s18, 2
    %p188 = por %p186, %p187
    %p189 = scmp.ne.s32.totalorder %s178, %s179
    %p190 = scmp.eq.s32.totalorder %s18, 0
    %p191 = por %p189, %p190
    %p192 = scmp.ne.s32.totalorder %s178, %s179
    %p193 = scmp.eq.s32.totalorder %s19, 2
    %p194 = por %p192, %p193
    %p196 = scmp.ne.s32.totalorder %s179, %s195
    %p197 = scmp.eq.s32.totalorder %s19, 0
    %p198 = por %p196, %p197
    %p199 = scmp.le.s32.totalorder 1, %s13
    %p200 = scmp.lt.s32.totalorder %s13, 4
    %p201 = pnand %p199, %p200
    %p202 = pneg %p201
    // Predicated region
    $region9: #{projection_head_forward.5} parent=5 // pred_check
      _
    $region10: #{projection_head_forward.5} parent=5 // pred_check_branch
      %204 = sbr.rel (%p201) target = $region12
    $region11: #{projection_head_forward.5} parent=5 // pred_region
      %s205 = ssub.s32 %s13, 1
      // Predicated region
      $region13: #{projection_head_forward.5} parent=11 // pred_check
        %p206 = pneg %p60
      $region14: #{projection_head_forward.5} parent=11 // pred_check_branch
        %208 = sbr.rel (%p206) target = $region16
      $region15: #{projection_head_forward.5} parent=11 // pred_region
        _
      $region16: #{projection_head_forward.5} parent=11 // pred_fallthru
        _
      // Predicated region
      $region17: #{projection_head_forward.5} parent=11 // pred_check
        %p209 = pneg %p81
      $region18: #{projection_head_forward.5} parent=11 // pred_check_branch
        %211 = sbr.rel (%p209) target = $region20
      $region19: #{projection_head_forward.5} parent=11 // pred_region
        _
      $region20: #{projection_head_forward.5} parent=11 // pred_fallthru
        _
      // Predicated region
      $region21: #{projection_head_forward.5} parent=11 // pred_check
        %p212 = pneg %p102
      $region22: #{projection_head_forward.5} parent=11 // pred_check_branch
        %214 = sbr.rel (%p212) target = $region24
      $region23: #{projection_head_forward.5} parent=11 // pred_region
        _
      $region24: #{projection_head_forward.5} parent=11 // pred_fallthru
        _
      // Predicated region
      $region25: #{projection_head_forward.5} parent=11 // pred_check
        %p215 = pneg %p123
      $region26: #{projection_head_forward.5} parent=11 // pred_check_branch
        %217 = sbr.rel (%p215) target = $region28
      $region27: #{projection_head_forward.5} parent=11 // pred_region
        _
      $region28: #{projection_head_forward.5} parent=11 // pred_fallthru
        _
      // Predicated region
      $region29: #{projection_head_forward.5} parent=11 // pred_check
        %p218 = pneg %p144
      $region30: #{projection_head_forward.5} parent=11 // pred_check_branch
        %220 = sbr.rel (%p218) target = $region32
      $region31: #{projection_head_forward.5} parent=11 // pred_region
        _
      $region32: #{projection_head_forward.5} parent=11 // pred_fallthru
        _
      // Predicated region
      $region33: #{projection_head_forward.5} parent=11 // pred_check
        %p221 = pneg %p165
      $region34: #{projection_head_forward.5} parent=11 // pred_check_branch
        %223 = sbr.rel (%p221) target = $region36
      $region35: #{projection_head_forward.5} parent=11 // pred_region
        _
      $region36: #{projection_head_forward.5} parent=11 // pred_fallthru
        _
    $region12: #{projection_head_forward.5} parent=5 // pred_fallthru
      _
    %p224 = scmp.lt.s32.totalorder %s13, 3
    // Predicated region
    $region37: #{projection_head_forward.5} parent=5 // pred_check
      %p225 = pneg %p224
    $region38: #{projection_head_forward.5} parent=5 // pred_check_branch
      %227 = sbr.rel (%p225) target = $region40
    $region39: #{projection_head_forward.5} parent=5 // pred_region
      // Predicated region
      $region41: #{projection_head_forward.5} parent=39 // pred_check
        %p228 = pneg %p33
      $region42: #{projection_head_forward.5} parent=39 // pred_check_branch
        %230 = sbr.rel (%p228) target = $region44
      $region43: #{projection_head_forward.5} parent=39 // pred_region
        %s231 = smul.u32 92, %s13
        %p232 = scmp.lt.s32.totalorder %s231, 275
        %s233 = scalar_select %p232, %s231, 275
        %s234 = smul.addr %s233, 4
        %s235 = scalar_lea.vmem %s0, %s234
        %s236 = smul.u32 92, %s13
      $region44: #{projection_head_forward.5} parent=39 // pred_fallthru
        _
    $region40: #{projection_head_forward.5} parent=5 // pred_fallthru
      _
    %p237 = scmp.le.s32.totalorder 1, %s13
    %p238 = scmp.lt.s32.totalorder %s13, 4
    %p239 = pnand %p237, %p238
    %p240 = pneg %p239
    // Predicated region
    $region45: #{projection_head_forward.5} parent=5 // pred_check
      _
    $region46: #{projection_head_forward.5} parent=5 // pred_check_branch
      %242 = sbr.rel (%p239) target = $region48
    $region47: #{projection_head_forward.5} parent=5 // pred_region
      %s243 = ssub.s32 %s13, 1
      %s244 = smul.u32 92, %s18
      %p245 = scmp.lt.s32.totalorder %s244, 275
      %s246 = scalar_select %p245, %s244, 275
      %s247 = smul.addr %s246, 4
      %s248 = scalar_lea.vmem %s0, %s247
      %p249 = pneg %p39
      %p250 = pneg %p36
      %p251 = pneg %p60
      %p252 = pneg %p57
      %p253 = pneg %p81
      %p254 = pneg %p78
      %p255 = pneg %p102
      %p256 = pneg %p99
      %p257 = pneg %p123
      %p258 = pneg %p120
      %p259 = pneg %p144
      %p260 = pneg %p141
      %p261 = pneg %p165
      %p262 = pneg %p162
      %p263 = pneg %p191
      %p264 = pneg %p188
      %s265 = smul.u32 92, %s18
      %p266 = scmp.lt.s32.totalorder %s265, 275
      %s267 = scalar_select %p266, %s265, 275
      %s268 = smul.addr %s267, 8
      %s269 = scalar_lea.vmem %s7, %s268
      %s270 = smul.u32 92, %s18
      %p271 = scmp.lt.s32.totalorder %s270, 275
      %s272 = scalar_select %p271, %s270, 275
      %s273 = smul.addr %s272, 4
      %s274 = scalar_lea.vmem %s0, %s273
      %s275 = smul.u32 92, %s18
      %s276 = smul.u32 92, %s18
      %p277 = scmp.lt.s32.totalorder %s276, 275
      %s278 = scalar_select %p277, %s276, 275
      %s279 = smul.addr %s278, 8
      %s280 = scalar_lea.vmem %s7, %s279
      %s281 = smul.u32 92, %s18
      %v283 = vld [vmem:[%s274] sm:$0xf]
      %v284 = vld [vmem:[%s274 + $0x4] sm:$0xf]
      %v285 = vld [vmem:[%s274 + $0x8] sm:$0xf]
      %v286 = vld [vmem:[%s274 + $0xc] sm:$0xf]
      %v287 = vld [vmem:[%s274 + $0x10] sm:$0xf]
      %v288 = vld [vmem:[%s274 + $0x14] sm:$0xf]
      %v289 = vld [vmem:[%s274 + $0x18] sm:$0xf]
      %v290 = vld [vmem:[%s274 + $0x1c] sm:$0xf]
      %v291 = vld [vmem:[%s274 + $0x20] sm:$0xf]
      %v292 = vld [vmem:[%s274 + $0x24] sm:$0xf]
      %v293 = vld [vmem:[%s274 + $0x28] sm:$0xf]
      %v294 = vld [vmem:[%s274 + $0x2c] sm:$0xf]
      %v295 = vld [vmem:[%s274 + $0x30] sm:$0xf]
      %v296 = vld [vmem:[%s274 + $0x34] sm:$0xf]
      %v297 = vld [vmem:[%s274 + $0x38] sm:$0xf]
      %v298 = vld [vmem:[%s274 + $0x3c] sm:$0xf]
      %v299 = vld [vmem:[%s274 + $0x40] sm:$0xf]
      %v300 = vld [vmem:[%s274 + $0x44] sm:$0xf]
      %v301 = vld [vmem:[%s274 + $0x48] sm:$0xf]
      %v302 = vld [vmem:[%s274 + $0x4c] sm:$0xf]
      %v303 = vld [vmem:[%s274 + $0x50] sm:$0xf]
      %v304 = vld [vmem:[%s274 + $0x54] sm:$0xf]
      %v305 = vld [vmem:[%s274 + $0x58] sm:$0xf]
      %v306 = vld [vmem:[%s274 + $0x5c] sm:$0xf]
      %v307 = vld [vmem:[%s274 + $0x60] sm:$0xf]
      %v308 = vld [vmem:[%s274 + $0x64] sm:$0xf]
      %v309 = vld [vmem:[%s274 + $0x68] sm:$0xf]
      %v310 = vld [vmem:[%s274 + $0x6c] sm:$0xf]
      %v311 = vld [vmem:[%s274 + $0x70] sm:$0xf]
      %v312 = vld [vmem:[%s274 + $0x74] sm:$0xf]
      %v313 = vld [vmem:[%s274 + $0x78] sm:$0xf]
      %v314 = vld [vmem:[%s274 + $0x7c] sm:$0xf]
      %v315 = vld [vmem:[%s274 + $0x80] sm:$0xf]
      %v316 = vld [vmem:[%s274 + $0x84] sm:$0xf]
      %v317 = vld [vmem:[%s274 + $0x88] sm:$0xf]
      %v318 = vld [vmem:[%s274 + $0x8c] sm:$0xf]
      %v319 = vld [vmem:[%s274 + $0x90] sm:$0xf]
      %v320 = vld [vmem:[%s274 + $0x94] sm:$0xf]
      %v321 = vld [vmem:[%s274 + $0x98] sm:$0xf]
      %v322 = vld [vmem:[%s274 + $0x9c] sm:$0xf]
      %v323 = vld [vmem:[%s274 + $0xa0] sm:$0xf]
      %v324 = vld [vmem:[%s274 + $0xa4] sm:$0xf]
      %v325 = vld [vmem:[%s274 + $0xa8] sm:$0xf]
      %v326 = vld [vmem:[%s274 + $0xac] sm:$0xf]
      %v327 = vld [vmem:[%s274 + $0xb0] sm:$0xf]
      %v328 = vld [vmem:[%s274 + $0xb4] sm:$0xf]
      %v329 = vld [vmem:[%s274 + $0xb8] sm:$0xf]
      %v330 = vld [vmem:[%s274 + $0xbc] sm:$0xf]
      %v331 = vld [vmem:[%s274 + $0xc0] sm:$0xf]
      %v332 = vld [vmem:[%s274 + $0xc4] sm:$0xf]
      %v333 = vld [vmem:[%s274 + $0xc8] sm:$0xf]
      %v334 = vld [vmem:[%s274 + $0xcc] sm:$0xf]
      %v335 = vld [vmem:[%s274 + $0xd0] sm:$0xf]
      %v336 = vld [vmem:[%s274 + $0xd4] sm:$0xf]
      %v337 = vld [vmem:[%s274 + $0xd8] sm:$0xf]
      %v338 = vld [vmem:[%s274 + $0xdc] sm:$0xf]
      %v339 = vld [vmem:[%s274 + $0xe0] sm:$0xf]
      %v340 = vld [vmem:[%s274 + $0xe4] sm:$0xf]
      %v341 = vld [vmem:[%s274 + $0xe8] sm:$0xf]
      %v342 = vld [vmem:[%s274 + $0xec] sm:$0xf]
      %v343 = vld [vmem:[%s274 + $0xf0] sm:$0xf]
      %v344 = vld [vmem:[%s274 + $0xf4] sm:$0xf]
      %v345 = vld [vmem:[%s274 + $0xf8] sm:$0xf]
      %v346 = vld [vmem:[%s274 + $0xfc] sm:$0xf]
      %v347 = vld [vmem:[%s274 + $0x100] sm:$0xf]
      %v348 = vld [vmem:[%s274 + $0x104] sm:$0xf]
      %v349 = vld [vmem:[%s274 + $0x108] sm:$0xf]
      %v350 = vld [vmem:[%s274 + $0x10c] sm:$0xf]
      %v351 = vld [vmem:[%s274 + $0x110] sm:$0xf]
      %v352 = vld [vmem:[%s274 + $0x114] sm:$0xf]
      %v353 = vld [vmem:[%s274 + $0x118] sm:$0xf]
      %v354 = vld [vmem:[%s274 + $0x11c] sm:$0xf]
      %v355 = vld [vmem:[%s274 + $0x120] sm:$0xf]
      %v356 = vld [vmem:[%s274 + $0x124] sm:$0xf]
      %v357 = vld [vmem:[%s274 + $0x128] sm:$0xf]
      %v358 = vld [vmem:[%s274 + $0x12c] sm:$0xf]
      %v359 = vld [vmem:[%s274 + $0x130] sm:$0xf]
      %v360 = vld [vmem:[%s274 + $0x134] sm:$0xf]
      %v361 = vld [vmem:[%s274 + $0x138] sm:$0xf]
      %v362 = vld [vmem:[%s274 + $0x13c] sm:$0xf]
      %v363 = vld [vmem:[%s274 + $0x140] sm:$0xf]
      %v364 = vld [vmem:[%s274 + $0x144] sm:$0xf]
      %v365 = vld [vmem:[%s274 + $0x148] sm:$0xf]
      %v366 = vld [vmem:[%s274 + $0x14c] sm:$0xf]
      %v367 = vld [vmem:[%s274 + $0x150] sm:$0xf]
      %v368 = vld [vmem:[%s274 + $0x154] sm:$0xf]
      %v369 = vld [vmem:[%s274 + $0x158] sm:$0xf]
      %v370 = vld [vmem:[%s274 + $0x15c] sm:$0xf]
      %v371 = vld [vmem:[%s274 + $0x160] sm:$0xf]
      %v372 = vld [vmem:[%s274 + $0x164] sm:$0xf]
      %v373 = vld [vmem:[%s274 + $0x168] sm:$0xf]
      %v374 = vld [vmem:[%s274 + $0x16c] sm:$0xf]
      %v375 = vld [vmem:[%s1] sm:$0xf]
      %v376 = vld [vmem:[%s1 + $0x4] sm:$0xf]
      %v377 = vld [vmem:[%s1 + $0x8] sm:$0xf]
      %v378 = vld [vmem:[%s1 + $0xc] sm:$0xf]
      %v379 = vld [vmem:[%s1 + $0x10] sm:$0xf]
      %v380 = vld [vmem:[%s1 + $0x14] sm:$0xf]
      %v381 = vld [vmem:[%s1 + $0x18] sm:$0xf]
      %v382 = vld [vmem:[%s1 + $0x1c] sm:$0xf]
      %v383 = vld [vmem:[%s1 + $0x20] sm:$0xf]
      %v384 = vld [vmem:[%s1 + $0x24] sm:$0xf]
      %v385 = vld [vmem:[%s1 + $0x28] sm:$0xf]
      %v386 = vld [vmem:[%s1 + $0x2c] sm:$0xf]
      %v387 = vld [vmem:[%s1 + $0x30] sm:$0xf]
      %v388 = vld [vmem:[%s1 + $0x34] sm:$0xf]
      %v389 = vld [vmem:[%s1 + $0x38] sm:$0xf]
      %v390 = vld [vmem:[%s1 + $0x3c] sm:$0xf]
      %v483 = vunpack.c.l.b16 %v283
      %v484 = vunpack.c.l.b16 %v284
      %v485 = vunpack.c.l.b16 %v285
      %v486 = vunpack.c.l.b16 %v286
      %v487 = vunpack.c.l.b16 %v287
      %v488 = vunpack.c.l.b16 %v288
      %v489 = vunpack.c.l.b16 %v289
      %v490 = vunpack.c.l.b16 %v290
      %v491 = vunpack.c.l.b16 %v291
      %v492 = vunpack.c.l.b16 %v292
      %v493 = vunpack.c.l.b16 %v293
      %v494 = vunpack.c.l.b16 %v294
      %v495 = vunpack.c.l.b16 %v295
      %v496 = vunpack.c.l.b16 %v296
      %v497 = vunpack.c.l.b16 %v297
      %v498 = vunpack.c.l.b16 %v298
      %v499 = vunpack.c.l.b16 %v299
      %v500 = vunpack.c.l.b16 %v300
      %v501 = vunpack.c.l.b16 %v301
      %v502 = vunpack.c.l.b16 %v302
      %v503 = vunpack.c.l.b16 %v303
      %v504 = vunpack.c.l.b16 %v304
      %v505 = vunpack.c.l.b16 %v305
      %v506 = vunpack.c.l.b16 %v306
      %v507 = vunpack.c.l.b16 %v307
      %v508 = vunpack.c.l.b16 %v308
      %v509 = vunpack.c.l.b16 %v309
      %v510 = vunpack.c.l.b16 %v310
      %v511 = vunpack.c.l.b16 %v311
      %v512 = vunpack.c.l.b16 %v312
      %v513 = vunpack.c.l.b16 %v313
      %v514 = vunpack.c.l.b16 %v314
      %v515 = vunpack.c.l.b16 %v315
      %v516 = vunpack.c.l.b16 %v316
      %v517 = vunpack.c.l.b16 %v317
      %v518 = vunpack.c.l.b16 %v318
      %v519 = vunpack.c.l.b16 %v319
      %v520 = vunpack.c.l.b16 %v320
      %v521 = vunpack.c.l.b16 %v321
      %v522 = vunpack.c.l.b16 %v322
      %v523 = vunpack.c.l.b16 %v323
      %v524 = vunpack.c.l.b16 %v324
      %v525 = vunpack.c.l.b16 %v325
      %v526 = vunpack.c.l.b16 %v326
      %v527 = vunpack.c.l.b16 %v327
      %v528 = vunpack.c.l.b16 %v328
      %v529 = vunpack.c.l.b16 %v329
      %v530 = vunpack.c.l.b16 %v330
      %v531 = vunpack.c.l.b16 %v331
      %v532 = vunpack.c.l.b16 %v332
      %v533 = vunpack.c.l.b16 %v333
      %v534 = vunpack.c.l.b16 %v334
      %v535 = vunpack.c.l.b16 %v335
      %v536 = vunpack.c.l.b16 %v336
      %v537 = vunpack.c.l.b16 %v337
      %v538 = vunpack.c.l.b16 %v338
      %v539 = vunpack.c.l.b16 %v339
      %v540 = vunpack.c.l.b16 %v340
      %v541 = vunpack.c.l.b16 %v341
      %v542 = vunpack.c.l.b16 %v342
      %v543 = vunpack.c.l.b16 %v343
      %v544 = vunpack.c.l.b16 %v344
      %v545 = vunpack.c.l.b16 %v345
      %v546 = vunpack.c.l.b16 %v346
      %v547 = vunpack.c.l.b16 %v347
      %v548 = vunpack.c.l.b16 %v348
      %v549 = vunpack.c.l.b16 %v349
      %v550 = vunpack.c.l.b16 %v350
      %v551 = vunpack.c.l.b16 %v351
      %v552 = vunpack.c.l.b16 %v352
      %v553 = vunpack.c.l.b16 %v353
      %v554 = vunpack.c.l.b16 %v354
      %v555 = vunpack.c.l.b16 %v355
      %v556 = vunpack.c.l.b16 %v356
      %v557 = vunpack.c.l.b16 %v357
      %v558 = vunpack.c.l.b16 %v358
      %v559 = vunpack.c.l.b16 %v359
      %v560 = vunpack.c.l.b16 %v360
      %v561 = vunpack.c.l.b16 %v361
      %v562 = vunpack.c.l.b16 %v362
      %v563 = vunpack.c.l.b16 %v363
      %v564 = vunpack.c.l.b16 %v364
      %v565 = vunpack.c.l.b16 %v365
      %v566 = vunpack.c.l.b16 %v366
      %v567 = vunpack.c.l.b16 %v367
      %v568 = vunpack.c.l.b16 %v368
      %v569 = vunpack.c.l.b16 %v369
      %v570 = vunpack.c.l.b16 %v370
      %v571 = vunpack.c.l.b16 %v371
      %v572 = vunpack.c.l.b16 %v372
      %v573 = vunpack.c.l.b16 %v373
      %v574 = vunpack.c.l.b16 %v374
      %v575 = vpack.c.b16 %v484, %v483
      %v576 = vpack.c.b16 %v486, %v485
      %v577 = vpack.c.b16 %v488, %v487
      %v578 = vpack.c.b16 %v490, %v489
      %v579 = vpack.c.b16 %v492, %v491
      %v580 = vpack.c.b16 %v494, %v493
      %v581 = vpack.c.b16 %v496, %v495
      %v582 = vpack.c.b16 %v498, %v497
      %v583 = vpack.c.b16 %v500, %v499
      %v584 = vpack.c.b16 %v502, %v501
      %v585 = vpack.c.b16 %v504, %v503
      %v586 = vpack.c.b16 %v506, %v505
      %v587 = vpack.c.b16 %v508, %v507
      %v588 = vpack.c.b16 %v510, %v509
      %v589 = vpack.c.b16 %v512, %v511
      %v590 = vpack.c.b16 %v514, %v513
      %v591 = vpack.c.b16 %v516, %v515
      %v592 = vpack.c.b16 %v518, %v517
      %v593 = vpack.c.b16 %v520, %v519
      %v594 = vpack.c.b16 %v522, %v521
      %v595 = vpack.c.b16 %v524, %v523
      %v596 = vpack.c.b16 %v526, %v525
      %v597 = vpack.c.b16 %v528, %v527
      %v598 = vpack.c.b16 %v530, %v529
      %v599 = vpack.c.b16 %v532, %v531
      %v600 = vpack.c.b16 %v534, %v533
      %v601 = vpack.c.b16 %v536, %v535
      %v602 = vpack.c.b16 %v538, %v537
      %v603 = vpack.c.b16 %v540, %v539
      %v604 = vpack.c.b16 %v542, %v541
      %v605 = vpack.c.b16 %v544, %v543
      %v606 = vpack.c.b16 %v546, %v545
      %v607 = vpack.c.b16 %v548, %v547
      %v608 = vpack.c.b16 %v550, %v549
      %v609 = vpack.c.b16 %v552, %v551
      %v610 = vpack.c.b16 %v554, %v553
      %v611 = vpack.c.b16 %v556, %v555
      %v612 = vpack.c.b16 %v558, %v557
      %v613 = vpack.c.b16 %v560, %v559
      %v614 = vpack.c.b16 %v562, %v561
      %v615 = vpack.c.b16 %v564, %v563
      %v616 = vpack.c.b16 %v566, %v565
      %v617 = vpack.c.b16 %v568, %v567
      %v618 = vpack.c.b16 %v570, %v569
      %v619 = vpack.c.b16 %v572, %v571
      %v620 = vpack.c.b16 %v574, %v573
      %v683 = vunpack.c.l.b16 %v375
      %v684 = vunpack.c.l.b16 %v376
      %v685 = vunpack.c.l.b16 %v377
      %v686 = vunpack.c.l.b16 %v378
      %v687 = vunpack.c.l.b16 %v379
      %v688 = vunpack.c.l.b16 %v380
      %v689 = vunpack.c.l.b16 %v381
      %v690 = vunpack.c.l.b16 %v382
      %v691 = vunpack.c.l.b16 %v383
      %v692 = vunpack.c.l.b16 %v384
      %v693 = vunpack.c.l.b16 %v385
      %v694 = vunpack.c.l.b16 %v386
      %v695 = vunpack.c.l.b16 %v387
      %v696 = vunpack.c.l.b16 %v388
      %v697 = vunpack.c.l.b16 %v389
      %v698 = vunpack.c.l.b16 %v390
      %v699 = vpack.c.b16 %v684, %v683
      %v700 = vpack.c.b16 %v686, %v685
      %v701 = vpack.c.b16 %v688, %v687
      %v702 = vpack.c.b16 %v690, %v689
      %v703 = vpack.c.b16 %v692, %v691
      %v704 = vpack.c.b16 %v694, %v693
      %v705 = vpack.c.b16 %v696, %v695
      %v706 = vpack.c.b16 %v698, %v697
      %715 = vmatprep.subr.bf16.mxu0 0
      %716 = vmatpush1.bf16.msra.mxu0 %v706
      %717 = vmatprep.subr.bf16.mxu0 0
      %718 = vmatpush1.bf16.msra.mxu0 %v705
      %719 = vmatprep.subr.bf16.mxu0 0
      %720 = vmatpush1.bf16.msra.mxu0 %v704
      %721 = vmatprep.subr.bf16.mxu0 0
      %722 = vmatpush1.bf16.msra.mxu0 %v703
      %723 = vmatprep.subr.bf16.mxu0 0
      %724 = vmatpush1.bf16.msra.mxu0 %v702
      %725 = vmatprep.subr.bf16.mxu0 0
      %726 = vmatpush1.bf16.msra.mxu0 %v701
      %727 = vmatprep.subr.bf16.mxu0 0
      %728 = vmatpush1.bf16.msra.mxu0 %v700
      %729 = vmatprep.subr.bf16.mxu0 0
      %730 = vmatpush1.bf16.msra.mxu0 %v699
      %731 = vmatprep.subr.bf16.mxu0 0
      %732 = vmatpush2.bf16.msra.mxu0 0
      %733 = vmatprep.subr.bf16.mxu0 0
      %734 = vmatpush2.bf16.msra.mxu0 0
      %735 = vmatprep.subr.bf16.mxu0 0
      %736 = vmatpush2.bf16.msra.mxu0 0
      %737 = vmatprep.subr.bf16.mxu0 0
      %738 = vmatpush2.bf16.msra.mxu0 0
      %739 = vmatprep.subr.bf16.mxu0 0
      %740 = vmatpush2.bf16.msra.mxu0 0
      %741 = vmatprep.subr.bf16.mxu0 0
      %742 = vmatpush2.bf16.msra.mxu0 0
      %743 = vmatprep.subr.bf16.mxu0 0
      %744 = vmatpush2.bf16.msra.mxu0 0
      %745 = vmatprep.subr.bf16.mxu0 0
      %746 = vmatpush2.bf16.msra.mxu0 0
      %747 = vmatprep.mubr.bf16.mxu0 0
      %748 = vmatmul.mubr.bf16.gmra.mxu0 %v575
      %v749 = vpop.f32.mrf.mxu0
      %v750 = vadd.f32 0.0, %v749
      %v751 = vpop.f32.mrf.mxu0
      %v752 = vpop.f32.mrf.mxu0
      %v753 = vadd.f32 0.0, %v752
      %v754 = vpop.f32.mrf.mxu0
      %755 = vmatprep.mubr.bf16.mxu0 0
      %756 = vmatmul.mubr.bf16.gmra.mxu0 %v576
      %v757 = vpop.f32.mrf.mxu0
      %v758 = vadd.f32 0.0, %v757
      %v759 = vpop.f32.mrf.mxu0
      %v760 = vpop.f32.mrf.mxu0
      %v761 = vadd.f32 0.0, %v760
      %v762 = vpop.f32.mrf.mxu0
      %763 = vmatprep.mubr.bf16.mxu0 0
      %764 = vmatmul.mubr.bf16.gmra.mxu0 %v577
      %v765 = vpop.f32.mrf.mxu0
      %v766 = vadd.f32 0.0, %v765
      %v767 = vpop.f32.mrf.mxu0
      %v768 = vpop.f32.mrf.mxu0
      %v769 = vadd.f32 0.0, %v768
      %v770 = vpop.f32.mrf.mxu0
      %771 = vmatprep.mubr.bf16.mxu0 0
      %772 = vmatmul.mubr.bf16.gmra.mxu0 %v578
      %v773 = vpop.f32.mrf.mxu0
      %v774 = vadd.f32 0.0, %v773
      %v775 = vpop.f32.mrf.mxu0
      %v776 = vpop.f32.mrf.mxu0
      %v777 = vadd.f32 0.0, %v776
      %v778 = vpop.f32.mrf.mxu0
      %779 = vmatprep.mubr.bf16.mxu0 0
      %780 = vmatmul.mubr.bf16.gmra.mxu0 %v579
      %v781 = vpop.f32.mrf.mxu0
      %v782 = vadd.f32 0.0, %v781
      %v783 = vpop.f32.mrf.mxu0
      %v784 = vpop.f32.mrf.mxu0
      %v785 = vadd.f32 0.0, %v784
      %v786 = vpop.f32.mrf.mxu0
      %787 = vmatprep.mubr.bf16.mxu0 0
      %788 = vmatmul.mubr.bf16.gmra.mxu0 %v580
      %v789 = vpop.f32.mrf.mxu0
      %v790 = vadd.f32 0.0, %v789
      %v791 = vpop.f32.mrf.mxu0
      %v792 = vpop.f32.mrf.mxu0
      %v793 = vadd.f32 0.0, %v792
      %v794 = vpop.f32.mrf.mxu0
      %795 = vmatprep.mubr.bf16.mxu0 0
      %796 = vmatmul.mubr.bf16.gmra.mxu0 %v581
      %v797 = vpop.f32.mrf.mxu0
      %v798 = vadd.f32 0.0, %v797
      %v799 = vpop.f32.mrf.mxu0
      %v800 = vpop.f32.mrf.mxu0
      %v801 = vadd.f32 0.0, %v800
      %v802 = vpop.f32.mrf.mxu0
      %803 = vmatprep.mubr.bf16.mxu0 0
      %804 = vmatmul.mubr.bf16.gmra.mxu0 %v582
      %v805 = vpop.f32.mrf.mxu0
      %v806 = vadd.f32 0.0, %v805
      %v807 = vpop.f32.mrf.mxu0
      %v808 = vpop.f32.mrf.mxu0
      %v809 = vadd.f32 0.0, %v808
      %v810 = vpop.f32.mrf.mxu0
      %811 = vmatprep.mubr.bf16.mxu0 0
      %812 = vmatmul.mubr.bf16.gmra.mxu0 %v583
      %v813 = vpop.f32.mrf.mxu0
      %v814 = vadd.f32 0.0, %v813
      %v815 = vpop.f32.mrf.mxu0
      %v816 = vpop.f32.mrf.mxu0
      %v817 = vadd.f32 0.0, %v816
      %v818 = vpop.f32.mrf.mxu0
      %819 = vmatprep.mubr.bf16.mxu0 0
      %820 = vmatmul.mubr.bf16.gmra.mxu0 %v584
      %v821 = vpop.f32.mrf.mxu0
      %v822 = vadd.f32 0.0, %v821
      %v823 = vpop.f32.mrf.mxu0
      %v824 = vpop.f32.mrf.mxu0
      %v825 = vadd.f32 0.0, %v824
      %v826 = vpop.f32.mrf.mxu0
      %827 = vmatprep.mubr.bf16.mxu0 0
      %828 = vmatmul.mubr.bf16.gmra.mxu0 %v585
      %v829 = vpop.f32.mrf.mxu0
      %v830 = vadd.f32 0.0, %v829
      %v831 = vpop.f32.mrf.mxu0
      %v832 = vpop.f32.mrf.mxu0
      %v833 = vadd.f32 0.0, %v832
      %v834 = vpop.f32.mrf.mxu0
      %835 = vmatprep.mubr.bf16.mxu0 0
      %836 = vmatmul.mubr.bf16.gmra.mxu0 %v586
      %v837 = vpop.f32.mrf.mxu0
      %v838 = vadd.f32 0.0, %v837
      %v839 = vpop.f32.mrf.mxu0
      %v840 = vpop.f32.mrf.mxu0
      %v841 = vadd.f32 0.0, %v840
      %v842 = vpop.f32.mrf.mxu0
      %843 = vmatprep.mubr.bf16.mxu0 0
      %844 = vmatmul.mubr.bf16.gmra.mxu0 %v587
      %v845 = vpop.f32.mrf.mxu0
      %v846 = vadd.f32 0.0, %v845
      %v847 = vpop.f32.mrf.mxu0
      %v848 = vpop.f32.mrf.mxu0
      %v849 = vadd.f32 0.0, %v848
      %v850 = vpop.f32.mrf.mxu0
      %851 = vmatprep.mubr.bf16.mxu0 0
      %852 = vmatmul.mubr.bf16.gmra.mxu0 %v588
      %v853 = vpop.f32.mrf.mxu0
      %v854 = vadd.f32 0.0, %v853
      %v855 = vpop.f32.mrf.mxu0
      %v856 = vpop.f32.mrf.mxu0
      %v857 = vadd.f32 0.0, %v856
      %v858 = vpop.f32.mrf.mxu0
      %859 = vmatprep.mubr.bf16.mxu0 0
      %860 = vmatmul.mubr.bf16.gmra.mxu0 %v589
      %v861 = vpop.f32.mrf.mxu0
      %v862 = vadd.f32 0.0, %v861
      %v863 = vpop.f32.mrf.mxu0
      %v864 = vpop.f32.mrf.mxu0
      %v865 = vadd.f32 0.0, %v864
      %v866 = vpop.f32.mrf.mxu0
      %867 = vmatprep.mubr.bf16.mxu0 0
      %868 = vmatmul.mubr.bf16.gmra.mxu0 %v590
      %v869 = vpop.f32.mrf.mxu0
      %v870 = vadd.f32 0.0, %v869
      %v871 = vpop.f32.mrf.mxu0
      %v872 = vpop.f32.mrf.mxu0
      %v873 = vadd.f32 0.0, %v872
      %v874 = vpop.f32.mrf.mxu0
      %875 = vmatprep.mubr.bf16.mxu0 0
      %876 = vmatmul.mubr.bf16.gmra.mxu0 %v591
      %v877 = vpop.f32.mrf.mxu0
      %v878 = vadd.f32 0.0, %v877
      %v879 = vpop.f32.mrf.mxu0
      %v880 = vpop.f32.mrf.mxu0
      %v881 = vadd.f32 0.0, %v880
      %v882 = vpop.f32.mrf.mxu0
      %883 = vmatprep.mubr.bf16.mxu0 0
      %884 = vmatmul.mubr.bf16.gmra.mxu0 %v592
      %v885 = vpop.f32.mrf.mxu0
      %v886 = vadd.f32 0.0, %v885
      %v887 = vpop.f32.mrf.mxu0
      %v888 = vpop.f32.mrf.mxu0
      %v889 = vadd.f32 0.0, %v888
      %v890 = vpop.f32.mrf.mxu0
      %891 = vmatprep.mubr.bf16.mxu0 0
      %892 = vmatmul.mubr.bf16.gmra.mxu0 %v593
      %v893 = vpop.f32.mrf.mxu0
      %v894 = vadd.f32 0.0, %v893
      %v895 = vpop.f32.mrf.mxu0
      %v896 = vpop.f32.mrf.mxu0
      %v897 = vadd.f32 0.0, %v896
      %v898 = vpop.f32.mrf.mxu0
      %899 = vmatprep.mubr.bf16.mxu0 0
      %900 = vmatmul.mubr.bf16.gmra.mxu0 %v594
      %v901 = vpop.f32.mrf.mxu0
      %v902 = vadd.f32 0.0, %v901
      %v903 = vpop.f32.mrf.mxu0
      %v904 = vpop.f32.mrf.mxu0
      %v905 = vadd.f32 0.0, %v904
      %v906 = vpop.f32.mrf.mxu0
      %907 = vmatprep.mubr.bf16.mxu0 0
      %908 = vmatmul.mubr.bf16.gmra.mxu0 %v595
      %v909 = vpop.f32.mrf.mxu0
      %v910 = vadd.f32 0.0, %v909
      %v911 = vpop.f32.mrf.mxu0
      %v912 = vpop.f32.mrf.mxu0
      %v913 = vadd.f32 0.0, %v912
      %v914 = vpop.f32.mrf.mxu0
      %915 = vmatprep.mubr.bf16.mxu0 0
      %916 = vmatmul.mubr.bf16.gmra.mxu0 %v596
      %v917 = vpop.f32.mrf.mxu0
      %v918 = vadd.f32 0.0, %v917
      %v919 = vpop.f32.mrf.mxu0
      %v920 = vpop.f32.mrf.mxu0
      %v921 = vadd.f32 0.0, %v920
      %v922 = vpop.f32.mrf.mxu0
      %923 = vmatprep.mubr.bf16.mxu0 0
      %924 = vmatmul.mubr.bf16.gmra.mxu0 %v597
      %v925 = vpop.f32.mrf.mxu0
      %v926 = vadd.f32 0.0, %v925
      %v927 = vpop.f32.mrf.mxu0
      %v928 = vpop.f32.mrf.mxu0
      %v929 = vadd.f32 0.0, %v928
      %v930 = vpop.f32.mrf.mxu0
      %931 = vmatprep.mubr.bf16.mxu0 0
      %932 = vmatmul.mubr.bf16.gmra.mxu0 %v598
      %v933 = vpop.f32.mrf.mxu0
      %v934 = vadd.f32 0.0, %v933
      %v935 = vpop.f32.mrf.mxu0
      %v936 = vpop.f32.mrf.mxu0
      %v937 = vadd.f32 0.0, %v936
      %v938 = vpop.f32.mrf.mxu0
      %939 = vmatprep.mubr.bf16.mxu0 0
      %940 = vmatmul.mubr.bf16.gmra.mxu0 %v599
      %v941 = vpop.f32.mrf.mxu0
      %v942 = vadd.f32 0.0, %v941
      %v943 = vpop.f32.mrf.mxu0
      %v944 = vpop.f32.mrf.mxu0
      %v945 = vadd.f32 0.0, %v944
      %v946 = vpop.f32.mrf.mxu0
      %947 = vmatprep.mubr.bf16.mxu0 0
      %948 = vmatmul.mubr.bf16.gmra.mxu0 %v600
      %v949 = vpop.f32.mrf.mxu0
      %v950 = vadd.f32 0.0, %v949
      %v951 = vpop.f32.mrf.mxu0
      %v952 = vpop.f32.mrf.mxu0
      %v953 = vadd.f32 0.0, %v952
      %v954 = vpop.f32.mrf.mxu0
      %955 = vmatprep.mubr.bf16.mxu0 0
      %956 = vmatmul.mubr.bf16.gmra.mxu0 %v601
      %v957 = vpop.f32.mrf.mxu0
      %v958 = vadd.f32 0.0, %v957
      %v959 = vpop.f32.mrf.mxu0
      %v960 = vpop.f32.mrf.mxu0
      %v961 = vadd.f32 0.0, %v960
      %v962 = vpop.f32.mrf.mxu0
      %963 = vmatprep.mubr.bf16.mxu0 0
      %964 = vmatmul.mubr.bf16.gmra.mxu0 %v602
      %v965 = vpop.f32.mrf.mxu0
      %v966 = vadd.f32 0.0, %v965
      %v967 = vpop.f32.mrf.mxu0
      %v968 = vpop.f32.mrf.mxu0
      %v969 = vadd.f32 0.0, %v968
      %v970 = vpop.f32.mrf.mxu0
      %971 = vmatprep.mubr.bf16.mxu0 0
      %972 = vmatmul.mubr.bf16.gmra.mxu0 %v603
      %v973 = vpop.f32.mrf.mxu0
      %v974 = vadd.f32 0.0, %v973
      %v975 = vpop.f32.mrf.mxu0
      %v976 = vpop.f32.mrf.mxu0
      %v977 = vadd.f32 0.0, %v976
      %v978 = vpop.f32.mrf.mxu0
      %979 = vmatprep.mubr.bf16.mxu0 0
      %980 = vmatmul.mubr.bf16.gmra.mxu0 %v604
      %v981 = vpop.f32.mrf.mxu0
      %v982 = vadd.f32 0.0, %v981
      %v983 = vpop.f32.mrf.mxu0
      %v984 = vpop.f32.mrf.mxu0
      %v985 = vadd.f32 0.0, %v984
      %v986 = vpop.f32.mrf.mxu0
      %987 = vmatprep.mubr.bf16.mxu0 0
      %988 = vmatmul.mubr.bf16.gmra.mxu0 %v605
      %v989 = vpop.f32.mrf.mxu0
      %v990 = vadd.f32 0.0, %v989
      %v991 = vpop.f32.mrf.mxu0
      %v992 = vpop.f32.mrf.mxu0
      %v993 = vadd.f32 0.0, %v992
      %v994 = vpop.f32.mrf.mxu0
      %995 = vmatprep.mubr.bf16.mxu0 0
      %996 = vmatmul.mubr.bf16.gmra.mxu0 %v606
      %v997 = vpop.f32.mrf.mxu0
      %v998 = vadd.f32 0.0, %v997
      %v999 = vpop.f32.mrf.mxu0
      %v1000 = vpop.f32.mrf.mxu0
      %v1001 = vadd.f32 0.0, %v1000
      %v1002 = vpop.f32.mrf.mxu0
      %1003 = vmatprep.mubr.bf16.mxu0 0
      %1004 = vmatmul.mubr.bf16.gmra.mxu0 %v607
      %v1005 = vpop.f32.mrf.mxu0
      %v1006 = vadd.f32 0.0, %v1005
      %v1007 = vpop.f32.mrf.mxu0
      %v1008 = vpop.f32.mrf.mxu0
      %v1009 = vadd.f32 0.0, %v1008
      %v1010 = vpop.f32.mrf.mxu0
      %1011 = vmatprep.mubr.bf16.mxu0 0
      %1012 = vmatmul.mubr.bf16.gmra.mxu0 %v608
      %v1013 = vpop.f32.mrf.mxu0
      %v1014 = vadd.f32 0.0, %v1013
      %v1015 = vpop.f32.mrf.mxu0
      %v1016 = vpop.f32.mrf.mxu0
      %v1017 = vadd.f32 0.0, %v1016
      %v1018 = vpop.f32.mrf.mxu0
      %1019 = vmatprep.mubr.bf16.mxu0 0
      %1020 = vmatmul.mubr.bf16.gmra.mxu0 %v609
      %v1021 = vpop.f32.mrf.mxu0
      %v1022 = vadd.f32 0.0, %v1021
      %v1023 = vpop.f32.mrf.mxu0
      %v1024 = vpop.f32.mrf.mxu0
      %v1025 = vadd.f32 0.0, %v1024
      %v1026 = vpop.f32.mrf.mxu0
      %1027 = vmatprep.mubr.bf16.mxu0 0
      %1028 = vmatmul.mubr.bf16.gmra.mxu0 %v610
      %v1029 = vpop.f32.mrf.mxu0
      %v1030 = vadd.f32 0.0, %v1029
      %v1031 = vpop.f32.mrf.mxu0
      %v1032 = vpop.f32.mrf.mxu0
      %v1033 = vadd.f32 0.0, %v1032
      %v1034 = vpop.f32.mrf.mxu0
      %1035 = vmatprep.mubr.bf16.mxu0 0
      %1036 = vmatmul.mubr.bf16.gmra.mxu0 %v611
      %v1037 = vpop.f32.mrf.mxu0
      %v1038 = vadd.f32 0.0, %v1037
      %v1039 = vpop.f32.mrf.mxu0
      %v1040 = vpop.f32.mrf.mxu0
      %v1041 = vadd.f32 0.0, %v1040
      %v1042 = vpop.f32.mrf.mxu0
      %1043 = vmatprep.mubr.bf16.mxu0 0
      %1044 = vmatmul.mubr.bf16.gmra.mxu0 %v612
      %v1045 = vpop.f32.mrf.mxu0
      %v1046 = vadd.f32 0.0, %v1045
      %v1047 = vpop.f32.mrf.mxu0
      %v1048 = vpop.f32.mrf.mxu0
      %v1049 = vadd.f32 0.0, %v1048
      %v1050 = vpop.f32.mrf.mxu0
      %1051 = vmatprep.mubr.bf16.mxu0 0
      %1052 = vmatmul.mubr.bf16.gmra.mxu0 %v613
      %v1053 = vpop.f32.mrf.mxu0
      %v1054 = vadd.f32 0.0, %v1053
      %v1055 = vpop.f32.mrf.mxu0
      %v1056 = vpop.f32.mrf.mxu0
      %v1057 = vadd.f32 0.0, %v1056
      %v1058 = vpop.f32.mrf.mxu0
      %1059 = vmatprep.mubr.bf16.mxu0 0
      %1060 = vmatmul.mubr.bf16.gmra.mxu0 %v614
      %v1061 = vpop.f32.mrf.mxu0
      %v1062 = vadd.f32 0.0, %v1061
      %v1063 = vpop.f32.mrf.mxu0
      %v1064 = vpop.f32.mrf.mxu0
      %v1065 = vadd.f32 0.0, %v1064
      %v1066 = vpop.f32.mrf.mxu0
      %1067 = vmatprep.mubr.bf16.mxu0 0
      %1068 = vmatmul.mubr.bf16.gmra.mxu0 %v615
      %v1069 = vpop.f32.mrf.mxu0
      %v1070 = vadd.f32 0.0, %v1069
      %v1071 = vpop.f32.mrf.mxu0
      %v1072 = vpop.f32.mrf.mxu0
      %v1073 = vadd.f32 0.0, %v1072
      %v1074 = vpop.f32.mrf.mxu0
      %1075 = vmatprep.mubr.bf16.mxu0 0
      %1076 = vmatmul.mubr.bf16.gmra.mxu0 %v616
      %v1077 = vpop.f32.mrf.mxu0
      %v1078 = vadd.f32 0.0, %v1077
      %v1079 = vpop.f32.mrf.mxu0
      %v1080 = vpop.f32.mrf.mxu0
      %v1081 = vadd.f32 0.0, %v1080
      %v1082 = vpop.f32.mrf.mxu0
      %1083 = vmatprep.mubr.bf16.mxu0 0
      %1084 = vmatmul.mubr.bf16.gmra.mxu0 %v617
      %v1085 = vpop.f32.mrf.mxu0
      %v1086 = vadd.f32 0.0, %v1085
      %v1087 = vpop.f32.mrf.mxu0
      %v1088 = vpop.f32.mrf.mxu0
      %v1089 = vadd.f32 0.0, %v1088
      %v1090 = vpop.f32.mrf.mxu0
      %1091 = vmatprep.mubr.bf16.mxu0 0
      %1092 = vmatmul.mubr.bf16.gmra.mxu0 %v618
      %v1093 = vpop.f32.mrf.mxu0
      %v1094 = vadd.f32 0.0, %v1093
      %v1095 = vpop.f32.mrf.mxu0
      %v1096 = vpop.f32.mrf.mxu0
      %v1097 = vadd.f32 0.0, %v1096
      %v1098 = vpop.f32.mrf.mxu0
      %1099 = vmatprep.mubr.bf16.mxu0 0
      %1100 = vmatmul.mubr.bf16.gmra.mxu0 %v619
      %v1101 = vpop.f32.mrf.mxu0
      %v1102 = vadd.f32 0.0, %v1101
      %v1103 = vpop.f32.mrf.mxu0
      %v1104 = vpop.f32.mrf.mxu0
      %v1105 = vadd.f32 0.0, %v1104
      %v1106 = vpop.f32.mrf.mxu0
      %1107 = vmatprep.mubr.bf16.mxu0 0
      %1108 = vmatmul.mubr.bf16.gmra.mxu0 %v620
      %v1109 = vpop.f32.mrf.mxu0
      %v1110 = vadd.f32 0.0, %v1109
      %v1111 = vpop.f32.mrf.mxu0
      %v1112 = vpop.f32.mrf.mxu0
      %v1113 = vadd.f32 0.0, %v1112
      %v1114 = vpop.f32.mrf.mxu0
      %1115 = vdwg.mxu0
      %v1116 = vld [vmem:[%s2] sm:$0x1]
      %v1118 = vlaneseq
      %v1119 = vshrl.u32 %v1118, 7
      %v1120 = vsub.s32 0, %v1119
      %v1121 = vrot.slane %v1116, %v1120
      %v1123 = vmul.f32 %v750, %v1121
      %v1124 = vmul.f32 %v753, %v1121
      %v1125 = vmul.f32 %v758, %v1121
      %v1126 = vmul.f32 %v761, %v1121
      %v1127 = vmul.f32 %v766, %v1121
      %v1128 = vmul.f32 %v769, %v1121
      %v1129 = vmul.f32 %v774, %v1121
      %v1130 = vmul.f32 %v777, %v1121
      %v1131 = vmul.f32 %v782, %v1121
      %v1132 = vmul.f32 %v785, %v1121
      %v1133 = vmul.f32 %v790, %v1121
      %v1134 = vmul.f32 %v793, %v1121
      %v1135 = vmul.f32 %v798, %v1121
      %v1136 = vmul.f32 %v801, %v1121
      %v1137 = vmul.f32 %v806, %v1121
      %v1138 = vmul.f32 %v809, %v1121
      %v1139 = vmul.f32 %v814, %v1121
      %v1140 = vmul.f32 %v817, %v1121
      %v1141 = vmul.f32 %v822, %v1121
      %v1142 = vmul.f32 %v825, %v1121
      %v1143 = vmul.f32 %v830, %v1121
      %v1144 = vmul.f32 %v833, %v1121
      %v1145 = vmul.f32 %v838, %v1121
      %v1146 = vmul.f32 %v841, %v1121
      %v1147 = vmul.f32 %v846, %v1121
      %v1148 = vmul.f32 %v849, %v1121
      %v1149 = vmul.f32 %v854, %v1121
      %v1150 = vmul.f32 %v857, %v1121
      %v1151 = vmul.f32 %v862, %v1121
      %v1152 = vmul.f32 %v865, %v1121
      %v1153 = vmul.f32 %v870, %v1121
      %v1154 = vmul.f32 %v873, %v1121
      %v1155 = vmul.f32 %v878, %v1121
      %v1156 = vmul.f32 %v881, %v1121
      %v1157 = vmul.f32 %v886, %v1121
      %v1158 = vmul.f32 %v889, %v1121
      %v1159 = vmul.f32 %v894, %v1121
      %v1160 = vmul.f32 %v897, %v1121
      %v1161 = vmul.f32 %v902, %v1121
      %v1162 = vmul.f32 %v905, %v1121
      %v1163 = vmul.f32 %v910, %v1121
      %v1164 = vmul.f32 %v913, %v1121
      %v1165 = vmul.f32 %v918, %v1121
      %v1166 = vmul.f32 %v921, %v1121
      %v1167 = vmul.f32 %v926, %v1121
      %v1168 = vmul.f32 %v929, %v1121
      %v1169 = vmul.f32 %v934, %v1121
      %v1170 = vmul.f32 %v937, %v1121
      %v1171 = vmul.f32 %v942, %v1121
      %v1172 = vmul.f32 %v945, %v1121
      %v1173 = vmul.f32 %v950, %v1121
      %v1174 = vmul.f32 %v953, %v1121
      %v1175 = vmul.f32 %v958, %v1121
      %v1176 = vmul.f32 %v961, %v1121
      %v1177 = vmul.f32 %v966, %v1121
      %v1178 = vmul.f32 %v969, %v1121
      %v1179 = vmul.f32 %v974, %v1121
      %v1180 = vmul.f32 %v977, %v1121
      %v1181 = vmul.f32 %v982, %v1121
      %v1182 = vmul.f32 %v985, %v1121
      %v1183 = vmul.f32 %v990, %v1121
      %v1184 = vmul.f32 %v993, %v1121
      %v1185 = vmul.f32 %v998, %v1121
      %v1186 = vmul.f32 %v1001, %v1121
      %v1187 = vmul.f32 %v1006, %v1121
      %v1188 = vmul.f32 %v1009, %v1121
      %v1189 = vmul.f32 %v1014, %v1121
      %v1190 = vmul.f32 %v1017, %v1121
      %v1191 = vmul.f32 %v1022, %v1121
      %v1192 = vmul.f32 %v1025, %v1121
      %v1193 = vmul.f32 %v1030, %v1121
      %v1194 = vmul.f32 %v1033, %v1121
      %v1195 = vmul.f32 %v1038, %v1121
      %v1196 = vmul.f32 %v1041, %v1121
      %v1197 = vmul.f32 %v1046, %v1121
      %v1198 = vmul.f32 %v1049, %v1121
      %v1199 = vmul.f32 %v1054, %v1121
      %v1200 = vmul.f32 %v1057, %v1121
      %v1201 = vmul.f32 %v1062, %v1121
      %v1202 = vmul.f32 %v1065, %v1121
      %v1203 = vmul.f32 %v1070, %v1121
      %v1204 = vmul.f32 %v1073, %v1121
      %v1205 = vmul.f32 %v1078, %v1121
      %v1206 = vmul.f32 %v1081, %v1121
      %v1207 = vmul.f32 %v1086, %v1121
      %v1208 = vmul.f32 %v1089, %v1121
      %v1209 = vmul.f32 %v1094, %v1121
      %v1210 = vmul.f32 %v1097, %v1121
      %v1211 = vmul.f32 %v1102, %v1121
      %v1212 = vmul.f32 %v1105, %v1121
      %v1213 = vmul.f32 %v1110, %v1121
      %v1214 = vmul.f32 %v1113, %v1121
      %v1215 = vld [vmem:[%s3] sm:$0x1]
      %v1217 = vlaneseq
      %v1218 = vshrl.u32 %v1217, 7
      %v1219 = vsub.s32 0, %v1218
      %v1220 = vrot.slane %v1215, %v1219
      %v1222 = vadd.f32 %v1123, %v1220
      %v1223 = vadd.f32 %v1124, %v1220
      %v1224 = vadd.f32 %v1125, %v1220
      %v1225 = vadd.f32 %v1126, %v1220
      %v1226 = vadd.f32 %v1127, %v1220
      %v1227 = vadd.f32 %v1128, %v1220
      %v1228 = vadd.f32 %v1129, %v1220
      %v1229 = vadd.f32 %v1130, %v1220
      %v1230 = vadd.f32 %v1131, %v1220
      %v1231 = vadd.f32 %v1132, %v1220
      %v1232 = vadd.f32 %v1133, %v1220
      %v1233 = vadd.f32 %v1134, %v1220
      %v1234 = vadd.f32 %v1135, %v1220
      %v1235 = vadd.f32 %v1136, %v1220
      %v1236 = vadd.f32 %v1137, %v1220
      %v1237 = vadd.f32 %v1138, %v1220
      %v1238 = vadd.f32 %v1139, %v1220
      %v1239 = vadd.f32 %v1140, %v1220
      %v1240 = vadd.f32 %v1141, %v1220
      %v1241 = vadd.f32 %v1142, %v1220
      %v1242 = vadd.f32 %v1143, %v1220
      %v1243 = vadd.f32 %v1144, %v1220
      %v1244 = vadd.f32 %v1145, %v1220
      %v1245 = vadd.f32 %v1146, %v1220
      %v1246 = vadd.f32 %v1147, %v1220
      %v1247 = vadd.f32 %v1148, %v1220
      %v1248 = vadd.f32 %v1149, %v1220
      %v1249 = vadd.f32 %v1150, %v1220
      %v1250 = vadd.f32 %v1151, %v1220
      %v1251 = vadd.f32 %v1152, %v1220
      %v1252 = vadd.f32 %v1153, %v1220
      %v1253 = vadd.f32 %v1154, %v1220
      %v1254 = vadd.f32 %v1155, %v1220
      %v1255 = vadd.f32 %v1156, %v1220
      %v1256 = vadd.f32 %v1157, %v1220
      %v1257 = vadd.f32 %v1158, %v1220
      %v1258 = vadd.f32 %v1159, %v1220
      %v1259 = vadd.f32 %v1160, %v1220
      %v1260 = vadd.f32 %v1161, %v1220
      %v1261 = vadd.f32 %v1162, %v1220
      %v1262 = vadd.f32 %v1163, %v1220
      %v1263 = vadd.f32 %v1164, %v1220
      %v1264 = vadd.f32 %v1165, %v1220
      %v1265 = vadd.f32 %v1166, %v1220
      %v1266 = vadd.f32 %v1167, %v1220
      %v1267 = vadd.f32 %v1168, %v1220
      %v1268 = vadd.f32 %v1169, %v1220
      %v1269 = vadd.f32 %v1170, %v1220
      %v1270 = vadd.f32 %v1171, %v1220
      %v1271 = vadd.f32 %v1172, %v1220
      %v1272 = vadd.f32 %v1173, %v1220
      %v1273 = vadd.f32 %v1174, %v1220
      %v1274 = vadd.f32 %v1175, %v1220
      %v1275 = vadd.f32 %v1176, %v1220
      %v1276 = vadd.f32 %v1177, %v1220
      %v1277 = vadd.f32 %v1178, %v1220
      %v1278 = vadd.f32 %v1179, %v1220
      %v1279 = vadd.f32 %v1180, %v1220
      %v1280 = vadd.f32 %v1181, %v1220
      %v1281 = vadd.f32 %v1182, %v1220
      %v1282 = vadd.f32 %v1183, %v1220
      %v1283 = vadd.f32 %v1184, %v1220
      %v1284 = vadd.f32 %v1185, %v1220
      %v1285 = vadd.f32 %v1186, %v1220
      %v1286 = vadd.f32 %v1187, %v1220
      %v1287 = vadd.f32 %v1188, %v1220
      %v1288 = vadd.f32 %v1189, %v1220
      %v1289 = vadd.f32 %v1190, %v1220
      %v1290 = vadd.f32 %v1191, %v1220
      %v1291 = vadd.f32 %v1192, %v1220
      %v1292 = vadd.f32 %v1193, %v1220
      %v1293 = vadd.f32 %v1194, %v1220
      %v1294 = vadd.f32 %v1195, %v1220
      %v1295 = vadd.f32 %v1196, %v1220
      %v1296 = vadd.f32 %v1197, %v1220
      %v1297 = vadd.f32 %v1198, %v1220
      %v1298 = vadd.f32 %v1199, %v1220
      %v1299 = vadd.f32 %v1200, %v1220
      %v1300 = vadd.f32 %v1201, %v1220
      %v1301 = vadd.f32 %v1202, %v1220
      %v1302 = vadd.f32 %v1203, %v1220
      %v1303 = vadd.f32 %v1204, %v1220
      %v1304 = vadd.f32 %v1205, %v1220
      %v1305 = vadd.f32 %v1206, %v1220
      %v1306 = vadd.f32 %v1207, %v1220
      %v1307 = vadd.f32 %v1208, %v1220
      %v1308 = vadd.f32 %v1209, %v1220
      %v1309 = vadd.f32 %v1210, %v1220
      %v1310 = vadd.f32 %v1211, %v1220
      %v1311 = vadd.f32 %v1212, %v1220
      %v1312 = vadd.f32 %v1213, %v1220
      %v1313 = vadd.f32 %v1214, %v1220
      %v1314 = vmax.f32 %v1222, 0.0
      %v1315 = vmax.f32 %v1223, 0.0
      %v1316 = vmax.f32 %v1224, 0.0
      %v1317 = vmax.f32 %v1225, 0.0
      %v1318 = vmax.f32 %v1226, 0.0
      %v1319 = vmax.f32 %v1227, 0.0
      %v1320 = vmax.f32 %v1228, 0.0
      %v1321 = vmax.f32 %v1229, 0.0
      %v1322 = vmax.f32 %v1230, 0.0
      %v1323 = vmax.f32 %v1231, 0.0
      %v1324 = vmax.f32 %v1232, 0.0
      %v1325 = vmax.f32 %v1233, 0.0
      %v1326 = vmax.f32 %v1234, 0.0
      %v1327 = vmax.f32 %v1235, 0.0
      %v1328 = vmax.f32 %v1236, 0.0
      %v1329 = vmax.f32 %v1237, 0.0
      %v1330 = vmax.f32 %v1238, 0.0
      %v1331 = vmax.f32 %v1239, 0.0
      %v1332 = vmax.f32 %v1240, 0.0
      %v1333 = vmax.f32 %v1241, 0.0
      %v1334 = vmax.f32 %v1242, 0.0
      %v1335 = vmax.f32 %v1243, 0.0
      %v1336 = vmax.f32 %v1244, 0.0
      %v1337 = vmax.f32 %v1245, 0.0
      %v1338 = vmax.f32 %v1246, 0.0
      %v1339 = vmax.f32 %v1247, 0.0
      %v1340 = vmax.f32 %v1248, 0.0
      %v1341 = vmax.f32 %v1249, 0.0
      %v1342 = vmax.f32 %v1250, 0.0
      %v1343 = vmax.f32 %v1251, 0.0
      %v1344 = vmax.f32 %v1252, 0.0
      %v1345 = vmax.f32 %v1253, 0.0
      %v1346 = vmax.f32 %v1254, 0.0
      %v1347 = vmax.f32 %v1255, 0.0
      %v1348 = vmax.f32 %v1256, 0.0
      %v1349 = vmax.f32 %v1257, 0.0
      %v1350 = vmax.f32 %v1258, 0.0
      %v1351 = vmax.f32 %v1259, 0.0
      %v1352 = vmax.f32 %v1260, 0.0
      %v1353 = vmax.f32 %v1261, 0.0
      %v1354 = vmax.f32 %v1262, 0.0
      %v1355 = vmax.f32 %v1263, 0.0
      %v1356 = vmax.f32 %v1264, 0.0
      %v1357 = vmax.f32 %v1265, 0.0
      %v1358 = vmax.f32 %v1266, 0.0
      %v1359 = vmax.f32 %v1267, 0.0
      %v1360 = vmax.f32 %v1268, 0.0
      %v1361 = vmax.f32 %v1269, 0.0
      %v1362 = vmax.f32 %v1270, 0.0
      %v1363 = vmax.f32 %v1271, 0.0
      %v1364 = vmax.f32 %v1272, 0.0
      %v1365 = vmax.f32 %v1273, 0.0
      %v1366 = vmax.f32 %v1274, 0.0
      %v1367 = vmax.f32 %v1275, 0.0
      %v1368 = vmax.f32 %v1276, 0.0
      %v1369 = vmax.f32 %v1277, 0.0
      %v1370 = vmax.f32 %v1278, 0.0
      %v1371 = vmax.f32 %v1279, 0.0
      %v1372 = vmax.f32 %v1280, 0.0
      %v1373 = vmax.f32 %v1281, 0.0
      %v1374 = vmax.f32 %v1282, 0.0
      %v1375 = vmax.f32 %v1283, 0.0
      %v1376 = vmax.f32 %v1284, 0.0
      %v1377 = vmax.f32 %v1285, 0.0
      %v1378 = vmax.f32 %v1286, 0.0
      %v1379 = vmax.f32 %v1287, 0.0
      %v1380 = vmax.f32 %v1288, 0.0
      %v1381 = vmax.f32 %v1289, 0.0
      %v1382 = vmax.f32 %v1290, 0.0
      %v1383 = vmax.f32 %v1291, 0.0
      %v1384 = vmax.f32 %v1292, 0.0
      %v1385 = vmax.f32 %v1293, 0.0
      %v1386 = vmax.f32 %v1294, 0.0
      %v1387 = vmax.f32 %v1295, 0.0
      %v1388 = vmax.f32 %v1296, 0.0
      %v1389 = vmax.f32 %v1297, 0.0
      %v1390 = vmax.f32 %v1298, 0.0
      %v1391 = vmax.f32 %v1299, 0.0
      %v1392 = vmax.f32 %v1300, 0.0
      %v1393 = vmax.f32 %v1301, 0.0
      %v1394 = vmax.f32 %v1302, 0.0
      %v1395 = vmax.f32 %v1303, 0.0
      %v1396 = vmax.f32 %v1304, 0.0
      %v1397 = vmax.f32 %v1305, 0.0
      %v1398 = vmax.f32 %v1306, 0.0
      %v1399 = vmax.f32 %v1307, 0.0
      %v1400 = vmax.f32 %v1308, 0.0
      %v1401 = vmax.f32 %v1309, 0.0
      %v1402 = vmax.f32 %v1310, 0.0
      %v1403 = vmax.f32 %v1311, 0.0
      %v1404 = vmax.f32 %v1312, 0.0
      %v1405 = vmax.f32 %v1313, 0.0
      %v1406 = vld [vmem:[%s4] sm:$0xff]
      %v1407 = vld [vmem:[%s4 + $0x8] sm:$0xff]
      %v1408 = vld [vmem:[%s4 + $0x10] sm:$0xff]
      %v1409 = vld [vmem:[%s4 + $0x18] sm:$0xff]
      %v1410 = vld [vmem:[%s4 + $0x20] sm:$0xff]
      %v1411 = vld [vmem:[%s4 + $0x28] sm:$0xff]
      %v1412 = vld [vmem:[%s4 + $0x30] sm:$0xff]
      %v1413 = vld [vmem:[%s4 + $0x38] sm:$0xff]
      %v1414 = vld [vmem:[%s4 + $0x40] sm:$0xff]
      %v1415 = vld [vmem:[%s4 + $0x48] sm:$0xff]
      %v1416 = vld [vmem:[%s4 + $0x50] sm:$0xff]
      %v1417 = vld [vmem:[%s4 + $0x58] sm:$0xff]
      %v1418 = vld [vmem:[%s4 + $0x60] sm:$0xff]
      %v1419 = vld [vmem:[%s4 + $0x68] sm:$0xff]
      %v1420 = vld [vmem:[%s4 + $0x70] sm:$0xff]
      %v1421 = vld [vmem:[%s4 + $0x78] sm:$0xff]
      %v1422 = vld [vmem:[%s5] sm:$0x1]
      %v1424 = vlaneseq
      %v1425 = vshrl.u32 %v1424, 7
      %v1426 = vsub.s32 0, %v1425
      %v1427 = vrot.slane %v1422, %v1426
      %1429 = vmatprep.subr.mxu0 0.0
      %1430 = vmatpush1.msra.mxu0 %v1421
      %1431 = vmatprep.subr.mxu0 0.0
      %1432 = vmatpush1.msra.mxu0 %v1420
      %1433 = vmatprep.subr.mxu0 0.0
      %1434 = vmatpush1.msra.mxu0 %v1419
      %1435 = vmatprep.subr.mxu0 0.0
      %1436 = vmatpush1.msra.mxu0 %v1418
      %1437 = vmatprep.subr.mxu0 0.0
      %1438 = vmatpush1.msra.mxu0 %v1417
      %1439 = vmatprep.subr.mxu0 0.0
      %1440 = vmatpush1.msra.mxu0 %v1416
      %1441 = vmatprep.subr.mxu0 0.0
      %1442 = vmatpush1.msra.mxu0 %v1415
      %1443 = vmatprep.subr.mxu0 0.0
      %1444 = vmatpush1.msra.mxu0 %v1414
      %1445 = vmatprep.subr.mxu0 0.0
      %1446 = vmatpush1.msra.mxu0 %v1413
      %1447 = vmatprep.subr.mxu0 0.0
      %1448 = vmatpush1.msra.mxu0 %v1412
      %1449 = vmatprep.subr.mxu0 0.0
      %1450 = vmatpush1.msra.mxu0 %v1411
      %1451 = vmatprep.subr.mxu0 0.0
      %1452 = vmatpush1.msra.mxu0 %v1410
      %1453 = vmatprep.subr.mxu0 0.0
      %1454 = vmatpush1.msra.mxu0 %v1409
      %1455 = vmatprep.subr.mxu0 0.0
      %1456 = vmatpush1.msra.mxu0 %v1408
      %1457 = vmatprep.subr.mxu0 0.0
      %1458 = vmatpush1.msra.mxu0 %v1407
      %1459 = vmatprep.subr.mxu0 0.0
      %1460 = vmatpush1.msra.mxu0 %v1406
      %1461 = vmatprep.subr.mxu0 0.0
      %1462 = vmatpush2.msra.mxu0 0.0
      %1463 = vmatprep.subr.mxu0 0.0
      %1464 = vmatpush2.msra.mxu0 0.0
      %1465 = vmatprep.subr.mxu0 0.0
      %1466 = vmatpush2.msra.mxu0 0.0
      %1467 = vmatprep.subr.mxu0 0.0
      %1468 = vmatpush2.msra.mxu0 0.0
      %1469 = vmatprep.subr.mxu0 0.0
      %1470 = vmatpush2.msra.mxu0 0.0
      %1471 = vmatprep.subr.mxu0 0.0
      %1472 = vmatpush2.msra.mxu0 0.0
      %1473 = vmatprep.subr.mxu0 0.0
      %1474 = vmatpush2.msra.mxu0 0.0
      %1475 = vmatprep.subr.mxu0 0.0
      %1476 = vmatpush2.msra.mxu0 0.0
      %1477 = vmatprep.subr.mxu0 0.0
      %1478 = vmatpush2.msra.mxu0 0.0
      %1479 = vmatprep.subr.mxu0 0.0
      %1480 = vmatpush2.msra.mxu0 0.0
      %1481 = vmatprep.subr.mxu0 0.0
      %1482 = vmatpush2.msra.mxu0 0.0
      %1483 = vmatprep.subr.mxu0 0.0
      %1484 = vmatpush2.msra.mxu0 0.0
      %1485 = vmatprep.subr.mxu0 0.0
      %1486 = vmatpush2.msra.mxu0 0.0
      %1487 = vmatprep.subr.mxu0 0.0
      %1488 = vmatpush2.msra.mxu0 0.0
      %1489 = vmatprep.subr.mxu0 0.0
      %1490 = vmatpush2.msra.mxu0 0.0
      %1491 = vmatprep.subr.mxu0 0.0
      %1492 = vmatpush2.msra.mxu0 0.0
      %1493 = vmatprep.mubr.f32.mxu0 0.0
      %1494 = vmatmul.mubr.f32.gmra.mxu0 %v1314
      %v1495 = vpop.f32.mrf.mxu0
      %v1496 = vadd.f32 %v1427, %v1495
      %v1497 = vpop.f32.mrf.mxu0
      %1498 = vmatprep.mubr.f32.mxu0 0.0
      %1499 = vmatmul.mubr.f32.gmra.mxu0 %v1315
      %v1500 = vpop.f32.mrf.mxu0
      %v1501 = vadd.f32 %v1427, %v1500
      %v1502 = vpop.f32.mrf.mxu0
      %1503 = vmatprep.mubr.f32.mxu0 0.0
      %1504 = vmatmul.mubr.f32.gmra.mxu0 %v1316
      %v1505 = vpop.f32.mrf.mxu0
      %v1506 = vadd.f32 %v1427, %v1505
      %v1507 = vpop.f32.mrf.mxu0
      %1508 = vmatprep.mubr.f32.mxu0 0.0
      %1509 = vmatmul.mubr.f32.gmra.mxu0 %v1317
      %v1510 = vpop.f32.mrf.mxu0
      %v1511 = vadd.f32 %v1427, %v1510
      %v1512 = vpop.f32.mrf.mxu0
      %1513 = vmatprep.mubr.f32.mxu0 0.0
      %1514 = vmatmul.mubr.f32.gmra.mxu0 %v1318
      %v1515 = vpop.f32.mrf.mxu0
      %v1516 = vadd.f32 %v1427, %v1515
      %v1517 = vpop.f32.mrf.mxu0
      %1518 = vmatprep.mubr.f32.mxu0 0.0
      %1519 = vmatmul.mubr.f32.gmra.mxu0 %v1319
      %v1520 = vpop.f32.mrf.mxu0
      %v1521 = vadd.f32 %v1427, %v1520
      %v1522 = vpop.f32.mrf.mxu0
      %1523 = vmatprep.mubr.f32.mxu0 0.0
      %1524 = vmatmul.mubr.f32.gmra.mxu0 %v1320
      %v1525 = vpop.f32.mrf.mxu0
      %v1526 = vadd.f32 %v1427, %v1525
      %v1527 = vpop.f32.mrf.mxu0
      %1528 = vmatprep.mubr.f32.mxu0 0.0
      %1529 = vmatmul.mubr.f32.gmra.mxu0 %v1321
      %v1530 = vpop.f32.mrf.mxu0
      %v1531 = vadd.f32 %v1427, %v1530
      %v1532 = vpop.f32.mrf.mxu0
      %1533 = vmatprep.mubr.f32.mxu0 0.0
      %1534 = vmatmul.mubr.f32.gmra.mxu0 %v1322
      %v1535 = vpop.f32.mrf.mxu0
      %v1536 = vadd.f32 %v1427, %v1535
      %v1537 = vpop.f32.mrf.mxu0
      %1538 = vmatprep.mubr.f32.mxu0 0.0
      %1539 = vmatmul.mubr.f32.gmra.mxu0 %v1323
      %v1540 = vpop.f32.mrf.mxu0
      %v1541 = vadd.f32 %v1427, %v1540
      %v1542 = vpop.f32.mrf.mxu0
      %1543 = vmatprep.mubr.f32.mxu0 0.0
      %1544 = vmatmul.mubr.f32.gmra.mxu0 %v1324
      %v1545 = vpop.f32.mrf.mxu0
      %v1546 = vadd.f32 %v1427, %v1545
      %v1547 = vpop.f32.mrf.mxu0
      %1548 = vmatprep.mubr.f32.mxu0 0.0
      %1549 = vmatmul.mubr.f32.gmra.mxu0 %v1325
      %v1550 = vpop.f32.mrf.mxu0
      %v1551 = vadd.f32 %v1427, %v1550
      %v1552 = vpop.f32.mrf.mxu0
      %1553 = vmatprep.mubr.f32.mxu0 0.0
      %1554 = vmatmul.mubr.f32.gmra.mxu0 %v1326
      %v1555 = vpop.f32.mrf.mxu0
      %v1556 = vadd.f32 %v1427, %v1555
      %v1557 = vpop.f32.mrf.mxu0
      %1558 = vmatprep.mubr.f32.mxu0 0.0
      %1559 = vmatmul.mubr.f32.gmra.mxu0 %v1327
      %v1560 = vpop.f32.mrf.mxu0
      %v1561 = vadd.f32 %v1427, %v1560
      %v1562 = vpop.f32.mrf.mxu0
      %1563 = vmatprep.mubr.f32.mxu0 0.0
      %1564 = vmatmul.mubr.f32.gmra.mxu0 %v1328
      %v1565 = vpop.f32.mrf.mxu0
      %v1566 = vadd.f32 %v1427, %v1565
      %v1567 = vpop.f32.mrf.mxu0
      %1568 = vmatprep.mubr.f32.mxu0 0.0
      %1569 = vmatmul.mubr.f32.gmra.mxu0 %v1329
      %v1570 = vpop.f32.mrf.mxu0
      %v1571 = vadd.f32 %v1427, %v1570
      %v1572 = vpop.f32.mrf.mxu0
      %1573 = vmatprep.mubr.f32.mxu0 0.0
      %1574 = vmatmul.mubr.f32.gmra.mxu0 %v1330
      %v1575 = vpop.f32.mrf.mxu0
      %v1576 = vadd.f32 %v1427, %v1575
      %v1577 = vpop.f32.mrf.mxu0
      %1578 = vmatprep.mubr.f32.mxu0 0.0
      %1579 = vmatmul.mubr.f32.gmra.mxu0 %v1331
      %v1580 = vpop.f32.mrf.mxu0
      %v1581 = vadd.f32 %v1427, %v1580
      %v1582 = vpop.f32.mrf.mxu0
      %1583 = vmatprep.mubr.f32.mxu0 0.0
      %1584 = vmatmul.mubr.f32.gmra.mxu0 %v1332
      %v1585 = vpop.f32.mrf.mxu0
      %v1586 = vadd.f32 %v1427, %v1585
      %v1587 = vpop.f32.mrf.mxu0
      %1588 = vmatprep.mubr.f32.mxu0 0.0
      %1589 = vmatmul.mubr.f32.gmra.mxu0 %v1333
      %v1590 = vpop.f32.mrf.mxu0
      %v1591 = vadd.f32 %v1427, %v1590
      %v1592 = vpop.f32.mrf.mxu0
      %1593 = vmatprep.mubr.f32.mxu0 0.0
      %1594 = vmatmul.mubr.f32.gmra.mxu0 %v1334
      %v1595 = vpop.f32.mrf.mxu0
      %v1596 = vadd.f32 %v1427, %v1595
      %v1597 = vpop.f32.mrf.mxu0
      %1598 = vmatprep.mubr.f32.mxu0 0.0
      %1599 = vmatmul.mubr.f32.gmra.mxu0 %v1335
      %v1600 = vpop.f32.mrf.mxu0
      %v1601 = vadd.f32 %v1427, %v1600
      %v1602 = vpop.f32.mrf.mxu0
      %1603 = vmatprep.mubr.f32.mxu0 0.0
      %1604 = vmatmul.mubr.f32.gmra.mxu0 %v1336
      %v1605 = vpop.f32.mrf.mxu0
      %v1606 = vadd.f32 %v1427, %v1605
      %v1607 = vpop.f32.mrf.mxu0
      %1608 = vmatprep.mubr.f32.mxu0 0.0
      %1609 = vmatmul.mubr.f32.gmra.mxu0 %v1337
      %v1610 = vpop.f32.mrf.mxu0
      %v1611 = vadd.f32 %v1427, %v1610
      %v1612 = vpop.f32.mrf.mxu0
      %1613 = vmatprep.mubr.f32.mxu0 0.0
      %1614 = vmatmul.mubr.f32.gmra.mxu0 %v1338
      %v1615 = vpop.f32.mrf.mxu0
      %v1616 = vadd.f32 %v1427, %v1615
      %v1617 = vpop.f32.mrf.mxu0
      %1618 = vmatprep.mubr.f32.mxu0 0.0
      %1619 = vmatmul.mubr.f32.gmra.mxu0 %v1339
      %v1620 = vpop.f32.mrf.mxu0
      %v1621 = vadd.f32 %v1427, %v1620
      %v1622 = vpop.f32.mrf.mxu0
      %1623 = vmatprep.mubr.f32.mxu0 0.0
      %1624 = vmatmul.mubr.f32.gmra.mxu0 %v1340
      %v1625 = vpop.f32.mrf.mxu0
      %v1626 = vadd.f32 %v1427, %v1625
      %v1627 = vpop.f32.mrf.mxu0
      %1628 = vmatprep.mubr.f32.mxu0 0.0
      %1629 = vmatmul.mubr.f32.gmra.mxu0 %v1341
      %v1630 = vpop.f32.mrf.mxu0
      %v1631 = vadd.f32 %v1427, %v1630
      %v1632 = vpop.f32.mrf.mxu0
      %1633 = vmatprep.mubr.f32.mxu0 0.0
      %1634 = vmatmul.mubr.f32.gmra.mxu0 %v1342
      %v1635 = vpop.f32.mrf.mxu0
      %v1636 = vadd.f32 %v1427, %v1635
      %v1637 = vpop.f32.mrf.mxu0
      %1638 = vmatprep.mubr.f32.mxu0 0.0
      %1639 = vmatmul.mubr.f32.gmra.mxu0 %v1343
      %v1640 = vpop.f32.mrf.mxu0
      %v1641 = vadd.f32 %v1427, %v1640
      %v1642 = vpop.f32.mrf.mxu0
      %1643 = vmatprep.mubr.f32.mxu0 0.0
      %1644 = vmatmul.mubr.f32.gmra.mxu0 %v1344
      %v1645 = vpop.f32.mrf.mxu0
      %v1646 = vadd.f32 %v1427, %v1645
      %v1647 = vpop.f32.mrf.mxu0
      %1648 = vmatprep.mubr.f32.mxu0 0.0
      %1649 = vmatmul.mubr.f32.gmra.mxu0 %v1345
      %v1650 = vpop.f32.mrf.mxu0
      %v1651 = vadd.f32 %v1427, %v1650
      %v1652 = vpop.f32.mrf.mxu0
      %1653 = vmatprep.mubr.f32.mxu0 0.0
      %1654 = vmatmul.mubr.f32.gmra.mxu0 %v1346
      %v1655 = vpop.f32.mrf.mxu0
      %v1656 = vadd.f32 %v1427, %v1655
      %v1657 = vpop.f32.mrf.mxu0
      %1658 = vmatprep.mubr.f32.mxu0 0.0
      %1659 = vmatmul.mubr.f32.gmra.mxu0 %v1347
      %v1660 = vpop.f32.mrf.mxu0
      %v1661 = vadd.f32 %v1427, %v1660
      %v1662 = vpop.f32.mrf.mxu0
      %1663 = vmatprep.mubr.f32.mxu0 0.0
      %1664 = vmatmul.mubr.f32.gmra.mxu0 %v1348
      %v1665 = vpop.f32.mrf.mxu0
      %v1666 = vadd.f32 %v1427, %v1665
      %v1667 = vpop.f32.mrf.mxu0
      %1668 = vmatprep.mubr.f32.mxu0 0.0
      %1669 = vmatmul.mubr.f32.gmra.mxu0 %v1349
      %v1670 = vpop.f32.mrf.mxu0
      %v1671 = vadd.f32 %v1427, %v1670
      %v1672 = vpop.f32.mrf.mxu0
      %1673 = vmatprep.mubr.f32.mxu0 0.0
      %1674 = vmatmul.mubr.f32.gmra.mxu0 %v1350
      %v1675 = vpop.f32.mrf.mxu0
      %v1676 = vadd.f32 %v1427, %v1675
      %v1677 = vpop.f32.mrf.mxu0
      %1678 = vmatprep.mubr.f32.mxu0 0.0
      %1679 = vmatmul.mubr.f32.gmra.mxu0 %v1351
      %v1680 = vpop.f32.mrf.mxu0
      %v1681 = vadd.f32 %v1427, %v1680
      %v1682 = vpop.f32.mrf.mxu0
      %1683 = vmatprep.mubr.f32.mxu0 0.0
      %1684 = vmatmul.mubr.f32.gmra.mxu0 %v1352
      %v1685 = vpop.f32.mrf.mxu0
      %v1686 = vadd.f32 %v1427, %v1685
      %v1687 = vpop.f32.mrf.mxu0
      %1688 = vmatprep.mubr.f32.mxu0 0.0
      %1689 = vmatmul.mubr.f32.gmra.mxu0 %v1353
      %v1690 = vpop.f32.mrf.mxu0
      %v1691 = vadd.f32 %v1427, %v1690
      %v1692 = vpop.f32.mrf.mxu0
      %1693 = vmatprep.mubr.f32.mxu0 0.0
      %1694 = vmatmul.mubr.f32.gmra.mxu0 %v1354
      %v1695 = vpop.f32.mrf.mxu0
      %v1696 = vadd.f32 %v1427, %v1695
      %v1697 = vpop.f32.mrf.mxu0
      %1698 = vmatprep.mubr.f32.mxu0 0.0
      %1699 = vmatmul.mubr.f32.gmra.mxu0 %v1355
      %v1700 = vpop.f32.mrf.mxu0
      %v1701 = vadd.f32 %v1427, %v1700
      %v1702 = vpop.f32.mrf.mxu0
      %1703 = vmatprep.mubr.f32.mxu0 0.0
      %1704 = vmatmul.mubr.f32.gmra.mxu0 %v1356
      %v1705 = vpop.f32.mrf.mxu0
      %v1706 = vadd.f32 %v1427, %v1705
      %v1707 = vpop.f32.mrf.mxu0
      %1708 = vmatprep.mubr.f32.mxu0 0.0
      %1709 = vmatmul.mubr.f32.gmra.mxu0 %v1357
      %v1710 = vpop.f32.mrf.mxu0
      %v1711 = vadd.f32 %v1427, %v1710
      %v1712 = vpop.f32.mrf.mxu0
      %1713 = vmatprep.mubr.f32.mxu0 0.0
      %1714 = vmatmul.mubr.f32.gmra.mxu0 %v1358
      %v1715 = vpop.f32.mrf.mxu0
      %v1716 = vadd.f32 %v1427, %v1715
      %v1717 = vpop.f32.mrf.mxu0
      %1718 = vmatprep.mubr.f32.mxu0 0.0
      %1719 = vmatmul.mubr.f32.gmra.mxu0 %v1359
      %v1720 = vpop.f32.mrf.mxu0
      %v1721 = vadd.f32 %v1427, %v1720
      %v1722 = vpop.f32.mrf.mxu0
      %1723 = vmatprep.mubr.f32.mxu0 0.0
      %1724 = vmatmul.mubr.f32.gmra.mxu0 %v1360
      %v1725 = vpop.f32.mrf.mxu0
      %v1726 = vadd.f32 %v1427, %v1725
      %v1727 = vpop.f32.mrf.mxu0
      %1728 = vmatprep.mubr.f32.mxu0 0.0
      %1729 = vmatmul.mubr.f32.gmra.mxu0 %v1361
      %v1730 = vpop.f32.mrf.mxu0
      %v1731 = vadd.f32 %v1427, %v1730
      %v1732 = vpop.f32.mrf.mxu0
      %1733 = vmatprep.mubr.f32.mxu0 0.0
      %1734 = vmatmul.mubr.f32.gmra.mxu0 %v1362
      %v1735 = vpop.f32.mrf.mxu0
      %v1736 = vadd.f32 %v1427, %v1735
      %v1737 = vpop.f32.mrf.mxu0
      %1738 = vmatprep.mubr.f32.mxu0 0.0
      %1739 = vmatmul.mubr.f32.gmra.mxu0 %v1363
      %v1740 = vpop.f32.mrf.mxu0
      %v1741 = vadd.f32 %v1427, %v1740
      %v1742 = vpop.f32.mrf.mxu0
      %1743 = vmatprep.mubr.f32.mxu0 0.0
      %1744 = vmatmul.mubr.f32.gmra.mxu0 %v1364
      %v1745 = vpop.f32.mrf.mxu0
      %v1746 = vadd.f32 %v1427, %v1745
      %v1747 = vpop.f32.mrf.mxu0
      %1748 = vmatprep.mubr.f32.mxu0 0.0
      %1749 = vmatmul.mubr.f32.gmra.mxu0 %v1365
      %v1750 = vpop.f32.mrf.mxu0
      %v1751 = vadd.f32 %v1427, %v1750
      %v1752 = vpop.f32.mrf.mxu0
      %1753 = vmatprep.mubr.f32.mxu0 0.0
      %1754 = vmatmul.mubr.f32.gmra.mxu0 %v1366
      %v1755 = vpop.f32.mrf.mxu0
      %v1756 = vadd.f32 %v1427, %v1755
      %v1757 = vpop.f32.mrf.mxu0
      %1758 = vmatprep.mubr.f32.mxu0 0.0
      %1759 = vmatmul.mubr.f32.gmra.mxu0 %v1367
      %v1760 = vpop.f32.mrf.mxu0
      %v1761 = vadd.f32 %v1427, %v1760
      %v1762 = vpop.f32.mrf.mxu0
      %1763 = vmatprep.mubr.f32.mxu0 0.0
      %1764 = vmatmul.mubr.f32.gmra.mxu0 %v1368
      %v1765 = vpop.f32.mrf.mxu0
      %v1766 = vadd.f32 %v1427, %v1765
      %v1767 = vpop.f32.mrf.mxu0
      %1768 = vmatprep.mubr.f32.mxu0 0.0
      %1769 = vmatmul.mubr.f32.gmra.mxu0 %v1369
      %v1770 = vpop.f32.mrf.mxu0
      %v1771 = vadd.f32 %v1427, %v1770
      %v1772 = vpop.f32.mrf.mxu0
      %1773 = vmatprep.mubr.f32.mxu0 0.0
      %1774 = vmatmul.mubr.f32.gmra.mxu0 %v1370
      %v1775 = vpop.f32.mrf.mxu0
      %v1776 = vadd.f32 %v1427, %v1775
      %v1777 = vpop.f32.mrf.mxu0
      %1778 = vmatprep.mubr.f32.mxu0 0.0
      %1779 = vmatmul.mubr.f32.gmra.mxu0 %v1371
      %v1780 = vpop.f32.mrf.mxu0
      %v1781 = vadd.f32 %v1427, %v1780
      %v1782 = vpop.f32.mrf.mxu0
      %1783 = vmatprep.mubr.f32.mxu0 0.0
      %1784 = vmatmul.mubr.f32.gmra.mxu0 %v1372
      %v1785 = vpop.f32.mrf.mxu0
      %v1786 = vadd.f32 %v1427, %v1785
      %v1787 = vpop.f32.mrf.mxu0
      %1788 = vmatprep.mubr.f32.mxu0 0.0
      %1789 = vmatmul.mubr.f32.gmra.mxu0 %v1373
      %v1790 = vpop.f32.mrf.mxu0
      %v1791 = vadd.f32 %v1427, %v1790
      %v1792 = vpop.f32.mrf.mxu0
      %1793 = vmatprep.mubr.f32.mxu0 0.0
      %1794 = vmatmul.mubr.f32.gmra.mxu0 %v1374
      %v1795 = vpop.f32.mrf.mxu0
      %v1796 = vadd.f32 %v1427, %v1795
      %v1797 = vpop.f32.mrf.mxu0
      %1798 = vmatprep.mubr.f32.mxu0 0.0
      %1799 = vmatmul.mubr.f32.gmra.mxu0 %v1375
      %v1800 = vpop.f32.mrf.mxu0
      %v1801 = vadd.f32 %v1427, %v1800
      %v1802 = vpop.f32.mrf.mxu0
      %1803 = vmatprep.mubr.f32.mxu0 0.0
      %1804 = vmatmul.mubr.f32.gmra.mxu0 %v1376
      %v1805 = vpop.f32.mrf.mxu0
      %v1806 = vadd.f32 %v1427, %v1805
      %v1807 = vpop.f32.mrf.mxu0
      %1808 = vmatprep.mubr.f32.mxu0 0.0
      %1809 = vmatmul.mubr.f32.gmra.mxu0 %v1377
      %v1810 = vpop.f32.mrf.mxu0
      %v1811 = vadd.f32 %v1427, %v1810
      %v1812 = vpop.f32.mrf.mxu0
      %1813 = vmatprep.mubr.f32.mxu0 0.0
      %1814 = vmatmul.mubr.f32.gmra.mxu0 %v1378
      %v1815 = vpop.f32.mrf.mxu0
      %v1816 = vadd.f32 %v1427, %v1815
      %v1817 = vpop.f32.mrf.mxu0
      %1818 = vmatprep.mubr.f32.mxu0 0.0
      %1819 = vmatmul.mubr.f32.gmra.mxu0 %v1379
      %v1820 = vpop.f32.mrf.mxu0
      %v1821 = vadd.f32 %v1427, %v1820
      %v1822 = vpop.f32.mrf.mxu0
      %1823 = vmatprep.mubr.f32.mxu0 0.0
      %1824 = vmatmul.mubr.f32.gmra.mxu0 %v1380
      %v1825 = vpop.f32.mrf.mxu0
      %v1826 = vadd.f32 %v1427, %v1825
      %v1827 = vpop.f32.mrf.mxu0
      %1828 = vmatprep.mubr.f32.mxu0 0.0
      %1829 = vmatmul.mubr.f32.gmra.mxu0 %v1381
      %v1830 = vpop.f32.mrf.mxu0
      %v1831 = vadd.f32 %v1427, %v1830
      %v1832 = vpop.f32.mrf.mxu0
      %1833 = vmatprep.mubr.f32.mxu0 0.0
      %1834 = vmatmul.mubr.f32.gmra.mxu0 %v1382
      %v1835 = vpop.f32.mrf.mxu0
      %v1836 = vadd.f32 %v1427, %v1835
      %v1837 = vpop.f32.mrf.mxu0
      %1838 = vmatprep.mubr.f32.mxu0 0.0
      %1839 = vmatmul.mubr.f32.gmra.mxu0 %v1383
      %v1840 = vpop.f32.mrf.mxu0
      %v1841 = vadd.f32 %v1427, %v1840
      %v1842 = vpop.f32.mrf.mxu0
      %1843 = vmatprep.mubr.f32.mxu0 0.0
      %1844 = vmatmul.mubr.f32.gmra.mxu0 %v1384
      %v1845 = vpop.f32.mrf.mxu0
      %v1846 = vadd.f32 %v1427, %v1845
      %v1847 = vpop.f32.mrf.mxu0
      %1848 = vmatprep.mubr.f32.mxu0 0.0
      %1849 = vmatmul.mubr.f32.gmra.mxu0 %v1385
      %v1850 = vpop.f32.mrf.mxu0
      %v1851 = vadd.f32 %v1427, %v1850
      %v1852 = vpop.f32.mrf.mxu0
      %1853 = vmatprep.mubr.f32.mxu0 0.0
      %1854 = vmatmul.mubr.f32.gmra.mxu0 %v1386
      %v1855 = vpop.f32.mrf.mxu0
      %v1856 = vadd.f32 %v1427, %v1855
      %v1857 = vpop.f32.mrf.mxu0
      %1858 = vmatprep.mubr.f32.mxu0 0.0
      %1859 = vmatmul.mubr.f32.gmra.mxu0 %v1387
      %v1860 = vpop.f32.mrf.mxu0
      %v1861 = vadd.f32 %v1427, %v1860
      %v1862 = vpop.f32.mrf.mxu0
      %1863 = vmatprep.mubr.f32.mxu0 0.0
      %1864 = vmatmul.mubr.f32.gmra.mxu0 %v1388
      %v1865 = vpop.f32.mrf.mxu0
      %v1866 = vadd.f32 %v1427, %v1865
      %v1867 = vpop.f32.mrf.mxu0
      %1868 = vmatprep.mubr.f32.mxu0 0.0
      %1869 = vmatmul.mubr.f32.gmra.mxu0 %v1389
      %v1870 = vpop.f32.mrf.mxu0
      %v1871 = vadd.f32 %v1427, %v1870
      %v1872 = vpop.f32.mrf.mxu0
      %1873 = vmatprep.mubr.f32.mxu0 0.0
      %1874 = vmatmul.mubr.f32.gmra.mxu0 %v1390
      %v1875 = vpop.f32.mrf.mxu0
      %v1876 = vadd.f32 %v1427, %v1875
      %v1877 = vpop.f32.mrf.mxu0
      %1878 = vmatprep.mubr.f32.mxu0 0.0
      %1879 = vmatmul.mubr.f32.gmra.mxu0 %v1391
      %v1880 = vpop.f32.mrf.mxu0
      %v1881 = vadd.f32 %v1427, %v1880
      %v1882 = vpop.f32.mrf.mxu0
      %1883 = vmatprep.mubr.f32.mxu0 0.0
      %1884 = vmatmul.mubr.f32.gmra.mxu0 %v1392
      %v1885 = vpop.f32.mrf.mxu0
      %v1886 = vadd.f32 %v1427, %v1885
      %v1887 = vpop.f32.mrf.mxu0
      %1888 = vmatprep.mubr.f32.mxu0 0.0
      %1889 = vmatmul.mubr.f32.gmra.mxu0 %v1393
      %v1890 = vpop.f32.mrf.mxu0
      %v1891 = vadd.f32 %v1427, %v1890
      %v1892 = vpop.f32.mrf.mxu0
      %1893 = vmatprep.mubr.f32.mxu0 0.0
      %1894 = vmatmul.mubr.f32.gmra.mxu0 %v1394
      %v1895 = vpop.f32.mrf.mxu0
      %v1896 = vadd.f32 %v1427, %v1895
      %v1897 = vpop.f32.mrf.mxu0
      %1898 = vmatprep.mubr.f32.mxu0 0.0
      %1899 = vmatmul.mubr.f32.gmra.mxu0 %v1395
      %v1900 = vpop.f32.mrf.mxu0
      %v1901 = vadd.f32 %v1427, %v1900
      %v1902 = vpop.f32.mrf.mxu0
      %1903 = vmatprep.mubr.f32.mxu0 0.0
      %1904 = vmatmul.mubr.f32.gmra.mxu0 %v1396
      %v1905 = vpop.f32.mrf.mxu0
      %v1906 = vadd.f32 %v1427, %v1905
      %v1907 = vpop.f32.mrf.mxu0
      %1908 = vmatprep.mubr.f32.mxu0 0.0
      %1909 = vmatmul.mubr.f32.gmra.mxu0 %v1397
      %v1910 = vpop.f32.mrf.mxu0
      %v1911 = vadd.f32 %v1427, %v1910
      %v1912 = vpop.f32.mrf.mxu0
      %1913 = vmatprep.mubr.f32.mxu0 0.0
      %1914 = vmatmul.mubr.f32.gmra.mxu0 %v1398
      %v1915 = vpop.f32.mrf.mxu0
      %v1916 = vadd.f32 %v1427, %v1915
      %v1917 = vpop.f32.mrf.mxu0
      %1918 = vmatprep.mubr.f32.mxu0 0.0
      %1919 = vmatmul.mubr.f32.gmra.mxu0 %v1399
      %v1920 = vpop.f32.mrf.mxu0
      %v1921 = vadd.f32 %v1427, %v1920
      %v1922 = vpop.f32.mrf.mxu0
      %1923 = vmatprep.mubr.f32.mxu0 0.0
      %1924 = vmatmul.mubr.f32.gmra.mxu0 %v1400
      %v1925 = vpop.f32.mrf.mxu0
      %v1926 = vadd.f32 %v1427, %v1925
      %v1927 = vpop.f32.mrf.mxu0
      %1928 = vmatprep.mubr.f32.mxu0 0.0
      %1929 = vmatmul.mubr.f32.gmra.mxu0 %v1401
      %v1930 = vpop.f32.mrf.mxu0
      %v1931 = vadd.f32 %v1427, %v1930
      %v1932 = vpop.f32.mrf.mxu0
      %1933 = vmatprep.mubr.f32.mxu0 0.0
      %1934 = vmatmul.mubr.f32.gmra.mxu0 %v1402
      %v1935 = vpop.f32.mrf.mxu0
      %v1936 = vadd.f32 %v1427, %v1935
      %v1937 = vpop.f32.mrf.mxu0
      %1938 = vmatprep.mubr.f32.mxu0 0.0
      %1939 = vmatmul.mubr.f32.gmra.mxu0 %v1403
      %v1940 = vpop.f32.mrf.mxu0
      %v1941 = vadd.f32 %v1427, %v1940
      %v1942 = vpop.f32.mrf.mxu0
      %1943 = vmatprep.mubr.f32.mxu0 0.0
      %1944 = vmatmul.mubr.f32.gmra.mxu0 %v1404
      %v1945 = vpop.f32.mrf.mxu0
      %v1946 = vadd.f32 %v1427, %v1945
      %v1947 = vpop.f32.mrf.mxu0
      %1948 = vmatprep.mubr.f32.mxu0 0.0
      %1949 = vmatmul.mubr.f32.gmra.mxu0 %v1405
      %v1950 = vpop.f32.mrf.mxu0
      %v1951 = vadd.f32 %v1427, %v1950
      %v1952 = vpop.f32.mrf.mxu0
      %1953 = vdwg.mxu0
      %v1954 = vmul.f32 %v1496, %v1496
      %v1955 = vmul.f32 %v1501, %v1501
      %v1956 = vmul.f32 %v1506, %v1506
      %v1957 = vmul.f32 %v1511, %v1511
      %v1958 = vmul.f32 %v1516, %v1516
      %v1959 = vmul.f32 %v1521, %v1521
      %v1960 = vmul.f32 %v1526, %v1526
      %v1961 = vmul.f32 %v1531, %v1531
      %v1962 = vmul.f32 %v1536, %v1536
      %v1963 = vmul.f32 %v1541, %v1541
      %v1964 = vmul.f32 %v1546, %v1546
      %v1965 = vmul.f32 %v1551, %v1551
      %v1966 = vmul.f32 %v1556, %v1556
      %v1967 = vmul.f32 %v1561, %v1561
      %v1968 = vmul.f32 %v1566, %v1566
      %v1969 = vmul.f32 %v1571, %v1571
      %v1970 = vmul.f32 %v1576, %v1576
      %v1971 = vmul.f32 %v1581, %v1581
      %v1972 = vmul.f32 %v1586, %v1586
      %v1973 = vmul.f32 %v1591, %v1591
      %v1974 = vmul.f32 %v1596, %v1596
      %v1975 = vmul.f32 %v1601, %v1601
      %v1976 = vmul.f32 %v1606, %v1606
      %v1977 = vmul.f32 %v1611, %v1611
      %v1978 = vmul.f32 %v1616, %v1616
      %v1979 = vmul.f32 %v1621, %v1621
      %v1980 = vmul.f32 %v1626, %v1626
      %v1981 = vmul.f32 %v1631, %v1631
      %v1982 = vmul.f32 %v1636, %v1636
      %v1983 = vmul.f32 %v1641, %v1641
      %v1984 = vmul.f32 %v1646, %v1646
      %v1985 = vmul.f32 %v1651, %v1651
      %v1986 = vmul.f32 %v1656, %v1656
      %v1987 = vmul.f32 %v1661, %v1661
      %v1988 = vmul.f32 %v1666, %v1666
      %v1989 = vmul.f32 %v1671, %v1671
      %v1990 = vmul.f32 %v1676, %v1676
      %v1991 = vmul.f32 %v1681, %v1681
      %v1992 = vmul.f32 %v1686, %v1686
      %v1993 = vmul.f32 %v1691, %v1691
      %v1994 = vmul.f32 %v1696, %v1696
      %v1995 = vmul.f32 %v1701, %v1701
      %v1996 = vmul.f32 %v1706, %v1706
      %v1997 = vmul.f32 %v1711, %v1711
      %v1998 = vmul.f32 %v1716, %v1716
      %v1999 = vmul.f32 %v1721, %v1721
      %v2000 = vmul.f32 %v1726, %v1726
      %v2001 = vmul.f32 %v1731, %v1731
      %v2002 = vmul.f32 %v1736, %v1736
      %v2003 = vmul.f32 %v1741, %v1741
      %v2004 = vmul.f32 %v1746, %v1746
      %v2005 = vmul.f32 %v1751, %v1751
      %v2006 = vmul.f32 %v1756, %v1756
      %v2007 = vmul.f32 %v1761, %v1761
      %v2008 = vmul.f32 %v1766, %v1766
      %v2009 = vmul.f32 %v1771, %v1771
      %v2010 = vmul.f32 %v1776, %v1776
      %v2011 = vmul.f32 %v1781, %v1781
      %v2012 = vmul.f32 %v1786, %v1786
      %v2013 = vmul.f32 %v1791, %v1791
      %v2014 = vmul.f32 %v1796, %v1796
      %v2015 = vmul.f32 %v1801, %v1801
      %v2016 = vmul.f32 %v1806, %v1806
      %v2017 = vmul.f32 %v1811, %v1811
      %v2018 = vmul.f32 %v1816, %v1816
      %v2019 = vmul.f32 %v1821, %v1821
      %v2020 = vmul.f32 %v1826, %v1826
      %v2021 = vmul.f32 %v1831, %v1831
      %v2022 = vmul.f32 %v1836, %v1836
      %v2023 = vmul.f32 %v1841, %v1841
      %v2024 = vmul.f32 %v1846, %v1846
      %v2025 = vmul.f32 %v1851, %v1851
      %v2026 = vmul.f32 %v1856, %v1856
      %v2027 = vmul.f32 %v1861, %v1861
      %v2028 = vmul.f32 %v1866, %v1866
      %v2029 = vmul.f32 %v1871, %v1871
      %v2030 = vmul.f32 %v1876, %v1876
      %v2031 = vmul.f32 %v1881, %v1881
      %v2032 = vmul.f32 %v1886, %v1886
      %v2033 = vmul.f32 %v1891, %v1891
      %v2034 = vmul.f32 %v1896, %v1896
      %v2035 = vmul.f32 %v1901, %v1901
      %v2036 = vmul.f32 %v1906, %v1906
      %v2037 = vmul.f32 %v1911, %v1911
      %v2038 = vmul.f32 %v1916, %v1916
      %v2039 = vmul.f32 %v1921, %v1921
      %v2040 = vmul.f32 %v1926, %v1926
      %v2041 = vmul.f32 %v1931, %v1931
      %v2042 = vmul.f32 %v1936, %v1936
      %v2043 = vmul.f32 %v1941, %v1941
      %v2044 = vmul.f32 %v1946, %v1946
      %v2045 = vmul.f32 %v1951, %v1951
      %v2046 = vld [vmem:[%s6] sm:$0xff]
      %v2047 = vld [vmem:[%s6 + $0x8] sm:$0xff]
      %v2048 = vld [vmem:[%s6 + $0x10] sm:$0xff]
      %v2049 = vld [vmem:[%s6 + $0x18] sm:$0xff]
      %v2050 = vld [vmem:[%s6 + $0x20] sm:$0xff]
      %v2051 = vld [vmem:[%s6 + $0x28] sm:$0xff]
      %v2052 = vld [vmem:[%s6 + $0x30] sm:$0xff]
      %v2053 = vld [vmem:[%s6 + $0x38] sm:$0xff]
      %v2054 = vld [vmem:[%s6 + $0x40] sm:$0xff]
      %v2055 = vld [vmem:[%s6 + $0x48] sm:$0xff]
      %v2056 = vld [vmem:[%s6 + $0x50] sm:$0xff]
      %v2057 = vld [vmem:[%s6 + $0x58] sm:$0xff]
      %v2058 = vld [vmem:[%s6 + $0x60] sm:$0xff]
      %v2059 = vld [vmem:[%s6 + $0x68] sm:$0xff]
      %v2060 = vld [vmem:[%s6 + $0x70] sm:$0xff]
      %v2061 = vld [vmem:[%s6 + $0x78] sm:$0xff]
      %2062 = vmatprep.subr.mxu0 0.0
      %2063 = vmatpush1.msra.mxu0 %v2061
      %2064 = vmatprep.subr.mxu0 0.0
      %2065 = vmatpush1.msra.mxu0 %v2060
      %2066 = vmatprep.subr.mxu0 0.0
      %2067 = vmatpush1.msra.mxu0 %v2059
      %2068 = vmatprep.subr.mxu0 0.0
      %2069 = vmatpush1.msra.mxu0 %v2058
      %2070 = vmatprep.subr.mxu0 0.0
      %2071 = vmatpush1.msra.mxu0 %v2057
      %2072 = vmatprep.subr.mxu0 0.0
      %2073 = vmatpush1.msra.mxu0 %v2056
      %2074 = vmatprep.subr.mxu0 0.0
      %2075 = vmatpush1.msra.mxu0 %v2055
      %2076 = vmatprep.subr.mxu0 0.0
      %2077 = vmatpush1.msra.mxu0 %v2054
      %2078 = vmatprep.subr.mxu0 0.0
      %2079 = vmatpush1.msra.mxu0 %v2053
      %2080 = vmatprep.subr.mxu0 0.0
      %2081 = vmatpush1.msra.mxu0 %v2052
      %2082 = vmatprep.subr.mxu0 0.0
      %2083 = vmatpush1.msra.mxu0 %v2051
      %2084 = vmatprep.subr.mxu0 0.0
      %2085 = vmatpush1.msra.mxu0 %v2050
      %2086 = vmatprep.subr.mxu0 0.0
      %2087 = vmatpush1.msra.mxu0 %v2049
      %2088 = vmatprep.subr.mxu0 0.0
      %2089 = vmatpush1.msra.mxu0 %v2048
      %2090 = vmatprep.subr.mxu0 0.0
      %2091 = vmatpush1.msra.mxu0 %v2047
      %2092 = vmatprep.subr.mxu0 0.0
      %2093 = vmatpush1.msra.mxu0 %v2046
      %2094 = vmatprep.subr.mxu0 0.0
      %2095 = vmatpush2.msra.mxu0 0.0
      %2096 = vmatprep.subr.mxu0 0.0
      %2097 = vmatpush2.msra.mxu0 0.0
      %2098 = vmatprep.subr.mxu0 0.0
      %2099 = vmatpush2.msra.mxu0 0.0
      %2100 = vmatprep.subr.mxu0 0.0
      %2101 = vmatpush2.msra.mxu0 0.0
      %2102 = vmatprep.subr.mxu0 0.0
      %2103 = vmatpush2.msra.mxu0 0.0
      %2104 = vmatprep.subr.mxu0 0.0
      %2105 = vmatpush2.msra.mxu0 0.0
      %2106 = vmatprep.subr.mxu0 0.0
      %2107 = vmatpush2.msra.mxu0 0.0
      %2108 = vmatprep.subr.mxu0 0.0
      %2109 = vmatpush2.msra.mxu0 0.0
      %2110 = vmatprep.subr.mxu0 0.0
      %2111 = vmatpush2.msra.mxu0 0.0
      %2112 = vmatprep.subr.mxu0 0.0
      %2113 = vmatpush2.msra.mxu0 0.0
      %2114 = vmatprep.subr.mxu0 0.0
      %2115 = vmatpush2.msra.mxu0 0.0
      %2116 = vmatprep.subr.mxu0 0.0
      %2117 = vmatpush2.msra.mxu0 0.0
      %2118 = vmatprep.subr.mxu0 0.0
      %2119 = vmatpush2.msra.mxu0 0.0
      %2120 = vmatprep.subr.mxu0 0.0
      %2121 = vmatpush2.msra.mxu0 0.0
      %2122 = vmatprep.subr.mxu0 0.0
      %2123 = vmatpush2.msra.mxu0 0.0
      %2124 = vmatprep.subr.mxu0 0.0
      %2125 = vmatpush2.msra.mxu0 0.0
      %2126 = vmatprep.mubr.f32.mxu0 0.0
      %2127 = vmatmul.mubr.f32.gmra.mxu0 %v1954
      %v2128 = vpop.f32.mrf.mxu0
      %v2129 = vadd.f32 0.0, %v2128
      %v2130 = vpop.f32.mrf.mxu0
      %2131 = vmatprep.mubr.f32.mxu0 0.0
      %2132 = vmatmul.mubr.f32.gmra.mxu0 %v1955
      %v2133 = vpop.f32.mrf.mxu0
      %v2134 = vadd.f32 0.0, %v2133
      %v2135 = vpop.f32.mrf.mxu0
      %2136 = vmatprep.mubr.f32.mxu0 0.0
      %2137 = vmatmul.mubr.f32.gmra.mxu0 %v1956
      %v2138 = vpop.f32.mrf.mxu0
      %v2139 = vadd.f32 0.0, %v2138
      %v2140 = vpop.f32.mrf.mxu0
      %2141 = vmatprep.mubr.f32.mxu0 0.0
      %2142 = vmatmul.mubr.f32.gmra.mxu0 %v1957
      %v2143 = vpop.f32.mrf.mxu0
      %v2144 = vadd.f32 0.0, %v2143
      %v2145 = vpop.f32.mrf.mxu0
      %2146 = vmatprep.mubr.f32.mxu0 0.0
      %2147 = vmatmul.mubr.f32.gmra.mxu0 %v1958
      %v2148 = vpop.f32.mrf.mxu0
      %v2149 = vadd.f32 0.0, %v2148
      %v2150 = vpop.f32.mrf.mxu0
      %2151 = vmatprep.mubr.f32.mxu0 0.0
      %2152 = vmatmul.mubr.f32.gmra.mxu0 %v1959
      %v2153 = vpop.f32.mrf.mxu0
      %v2154 = vadd.f32 0.0, %v2153
      %v2155 = vpop.f32.mrf.mxu0
      %2156 = vmatprep.mubr.f32.mxu0 0.0
      %2157 = vmatmul.mubr.f32.gmra.mxu0 %v1960
      %v2158 = vpop.f32.mrf.mxu0
      %v2159 = vadd.f32 0.0, %v2158
      %v2160 = vpop.f32.mrf.mxu0
      %2161 = vmatprep.mubr.f32.mxu0 0.0
      %2162 = vmatmul.mubr.f32.gmra.mxu0 %v1961
      %v2163 = vpop.f32.mrf.mxu0
      %v2164 = vadd.f32 0.0, %v2163
      %v2165 = vpop.f32.mrf.mxu0
      %2166 = vmatprep.mubr.f32.mxu0 0.0
      %2167 = vmatmul.mubr.f32.gmra.mxu0 %v1962
      %v2168 = vpop.f32.mrf.mxu0
      %v2169 = vadd.f32 0.0, %v2168
      %v2170 = vpop.f32.mrf.mxu0
      %2171 = vmatprep.mubr.f32.mxu0 0.0
      %2172 = vmatmul.mubr.f32.gmra.mxu0 %v1963
      %v2173 = vpop.f32.mrf.mxu0
      %v2174 = vadd.f32 0.0, %v2173
      %v2175 = vpop.f32.mrf.mxu0
      %2176 = vmatprep.mubr.f32.mxu0 0.0
      %2177 = vmatmul.mubr.f32.gmra.mxu0 %v1964
      %v2178 = vpop.f32.mrf.mxu0
      %v2179 = vadd.f32 0.0, %v2178
      %v2180 = vpop.f32.mrf.mxu0
      %2181 = vmatprep.mubr.f32.mxu0 0.0
      %2182 = vmatmul.mubr.f32.gmra.mxu0 %v1965
      %v2183 = vpop.f32.mrf.mxu0
      %v2184 = vadd.f32 0.0, %v2183
      %v2185 = vpop.f32.mrf.mxu0
      %2186 = vmatprep.mubr.f32.mxu0 0.0
      %2187 = vmatmul.mubr.f32.gmra.mxu0 %v1966
      %v2188 = vpop.f32.mrf.mxu0
      %v2189 = vadd.f32 0.0, %v2188
      %v2190 = vpop.f32.mrf.mxu0
      %2191 = vmatprep.mubr.f32.mxu0 0.0
      %2192 = vmatmul.mubr.f32.gmra.mxu0 %v1967
      %v2193 = vpop.f32.mrf.mxu0
      %v2194 = vadd.f32 0.0, %v2193
      %v2195 = vpop.f32.mrf.mxu0
      %2196 = vmatprep.mubr.f32.mxu0 0.0
      %2197 = vmatmul.mubr.f32.gmra.mxu0 %v1968
      %v2198 = vpop.f32.mrf.mxu0
      %v2199 = vadd.f32 0.0, %v2198
      %v2200 = vpop.f32.mrf.mxu0
      %2201 = vmatprep.mubr.f32.mxu0 0.0
      %2202 = vmatmul.mubr.f32.gmra.mxu0 %v1969
      %v2203 = vpop.f32.mrf.mxu0
      %v2204 = vadd.f32 0.0, %v2203
      %v2205 = vpop.f32.mrf.mxu0
      %2206 = vmatprep.mubr.f32.mxu0 0.0
      %2207 = vmatmul.mubr.f32.gmra.mxu0 %v1970
      %v2208 = vpop.f32.mrf.mxu0
      %v2209 = vadd.f32 0.0, %v2208
      %v2210 = vpop.f32.mrf.mxu0
      %2211 = vmatprep.mubr.f32.mxu0 0.0
      %2212 = vmatmul.mubr.f32.gmra.mxu0 %v1971
      %v2213 = vpop.f32.mrf.mxu0
      %v2214 = vadd.f32 0.0, %v2213
      %v2215 = vpop.f32.mrf.mxu0
      %2216 = vmatprep.mubr.f32.mxu0 0.0
      %2217 = vmatmul.mubr.f32.gmra.mxu0 %v1972
      %v2218 = vpop.f32.mrf.mxu0
      %v2219 = vadd.f32 0.0, %v2218
      %v2220 = vpop.f32.mrf.mxu0
      %2221 = vmatprep.mubr.f32.mxu0 0.0
      %2222 = vmatmul.mubr.f32.gmra.mxu0 %v1973
      %v2223 = vpop.f32.mrf.mxu0
      %v2224 = vadd.f32 0.0, %v2223
      %v2225 = vpop.f32.mrf.mxu0
      %2226 = vmatprep.mubr.f32.mxu0 0.0
      %2227 = vmatmul.mubr.f32.gmra.mxu0 %v1974
      %v2228 = vpop.f32.mrf.mxu0
      %v2229 = vadd.f32 0.0, %v2228
      %v2230 = vpop.f32.mrf.mxu0
      %2231 = vmatprep.mubr.f32.mxu0 0.0
      %2232 = vmatmul.mubr.f32.gmra.mxu0 %v1975
      %v2233 = vpop.f32.mrf.mxu0
      %v2234 = vadd.f32 0.0, %v2233
      %v2235 = vpop.f32.mrf.mxu0
      %2236 = vmatprep.mubr.f32.mxu0 0.0
      %2237 = vmatmul.mubr.f32.gmra.mxu0 %v1976
      %v2238 = vpop.f32.mrf.mxu0
      %v2239 = vadd.f32 0.0, %v2238
      %v2240 = vpop.f32.mrf.mxu0
      %2241 = vmatprep.mubr.f32.mxu0 0.0
      %2242 = vmatmul.mubr.f32.gmra.mxu0 %v1977
      %v2243 = vpop.f32.mrf.mxu0
      %v2244 = vadd.f32 0.0, %v2243
      %v2245 = vpop.f32.mrf.mxu0
      %2246 = vmatprep.mubr.f32.mxu0 0.0
      %2247 = vmatmul.mubr.f32.gmra.mxu0 %v1978
      %v2248 = vpop.f32.mrf.mxu0
      %v2249 = vadd.f32 0.0, %v2248
      %v2250 = vpop.f32.mrf.mxu0
      %2251 = vmatprep.mubr.f32.mxu0 0.0
      %2252 = vmatmul.mubr.f32.gmra.mxu0 %v1979
      %v2253 = vpop.f32.mrf.mxu0
      %v2254 = vadd.f32 0.0, %v2253
      %v2255 = vpop.f32.mrf.mxu0
      %2256 = vmatprep.mubr.f32.mxu0 0.0
      %2257 = vmatmul.mubr.f32.gmra.mxu0 %v1980
      %v2258 = vpop.f32.mrf.mxu0
      %v2259 = vadd.f32 0.0, %v2258
      %v2260 = vpop.f32.mrf.mxu0
      %2261 = vmatprep.mubr.f32.mxu0 0.0
      %2262 = vmatmul.mubr.f32.gmra.mxu0 %v1981
      %v2263 = vpop.f32.mrf.mxu0
      %v2264 = vadd.f32 0.0, %v2263
      %v2265 = vpop.f32.mrf.mxu0
      %2266 = vmatprep.mubr.f32.mxu0 0.0
      %2267 = vmatmul.mubr.f32.gmra.mxu0 %v1982
      %v2268 = vpop.f32.mrf.mxu0
      %v2269 = vadd.f32 0.0, %v2268
      %v2270 = vpop.f32.mrf.mxu0
      %2271 = vmatprep.mubr.f32.mxu0 0.0
      %2272 = vmatmul.mubr.f32.gmra.mxu0 %v1983
      %v2273 = vpop.f32.mrf.mxu0
      %v2274 = vadd.f32 0.0, %v2273
      %v2275 = vpop.f32.mrf.mxu0
      %2276 = vmatprep.mubr.f32.mxu0 0.0
      %2277 = vmatmul.mubr.f32.gmra.mxu0 %v1984
      %v2278 = vpop.f32.mrf.mxu0
      %v2279 = vadd.f32 0.0, %v2278
      %v2280 = vpop.f32.mrf.mxu0
      %2281 = vmatprep.mubr.f32.mxu0 0.0
      %2282 = vmatmul.mubr.f32.gmra.mxu0 %v1985
      %v2283 = vpop.f32.mrf.mxu0
      %v2284 = vadd.f32 0.0, %v2283
      %v2285 = vpop.f32.mrf.mxu0
      %2286 = vmatprep.mubr.f32.mxu0 0.0
      %2287 = vmatmul.mubr.f32.gmra.mxu0 %v1986
      %v2288 = vpop.f32.mrf.mxu0
      %v2289 = vadd.f32 0.0, %v2288
      %v2290 = vpop.f32.mrf.mxu0
      %2291 = vmatprep.mubr.f32.mxu0 0.0
      %2292 = vmatmul.mubr.f32.gmra.mxu0 %v1987
      %v2293 = vpop.f32.mrf.mxu0
      %v2294 = vadd.f32 0.0, %v2293
      %v2295 = vpop.f32.mrf.mxu0
      %2296 = vmatprep.mubr.f32.mxu0 0.0
      %2297 = vmatmul.mubr.f32.gmra.mxu0 %v1988
      %v2298 = vpop.f32.mrf.mxu0
      %v2299 = vadd.f32 0.0, %v2298
      %v2300 = vpop.f32.mrf.mxu0
      %2301 = vmatprep.mubr.f32.mxu0 0.0
      %2302 = vmatmul.mubr.f32.gmra.mxu0 %v1989
      %v2303 = vpop.f32.mrf.mxu0
      %v2304 = vadd.f32 0.0, %v2303
      %v2305 = vpop.f32.mrf.mxu0
      %2306 = vmatprep.mubr.f32.mxu0 0.0
      %2307 = vmatmul.mubr.f32.gmra.mxu0 %v1990
      %v2308 = vpop.f32.mrf.mxu0
      %v2309 = vadd.f32 0.0, %v2308
      %v2310 = vpop.f32.mrf.mxu0
      %2311 = vmatprep.mubr.f32.mxu0 0.0
      %2312 = vmatmul.mubr.f32.gmra.mxu0 %v1991
      %v2313 = vpop.f32.mrf.mxu0
      %v2314 = vadd.f32 0.0, %v2313
      %v2315 = vpop.f32.mrf.mxu0
      %2316 = vmatprep.mubr.f32.mxu0 0.0
      %2317 = vmatmul.mubr.f32.gmra.mxu0 %v1992
      %v2318 = vpop.f32.mrf.mxu0
      %v2319 = vadd.f32 0.0, %v2318
      %v2320 = vpop.f32.mrf.mxu0
      %2321 = vmatprep.mubr.f32.mxu0 0.0
      %2322 = vmatmul.mubr.f32.gmra.mxu0 %v1993
      %v2323 = vpop.f32.mrf.mxu0
      %v2324 = vadd.f32 0.0, %v2323
      %v2325 = vpop.f32.mrf.mxu0
      %2326 = vmatprep.mubr.f32.mxu0 0.0
      %2327 = vmatmul.mubr.f32.gmra.mxu0 %v1994
      %v2328 = vpop.f32.mrf.mxu0
      %v2329 = vadd.f32 0.0, %v2328
      %v2330 = vpop.f32.mrf.mxu0
      %2331 = vmatprep.mubr.f32.mxu0 0.0
      %2332 = vmatmul.mubr.f32.gmra.mxu0 %v1995
      %v2333 = vpop.f32.mrf.mxu0
      %v2334 = vadd.f32 0.0, %v2333
      %v2335 = vpop.f32.mrf.mxu0
      %2336 = vmatprep.mubr.f32.mxu0 0.0
      %2337 = vmatmul.mubr.f32.gmra.mxu0 %v1996
      %v2338 = vpop.f32.mrf.mxu0
      %v2339 = vadd.f32 0.0, %v2338
      %v2340 = vpop.f32.mrf.mxu0
      %2341 = vmatprep.mubr.f32.mxu0 0.0
      %2342 = vmatmul.mubr.f32.gmra.mxu0 %v1997
      %v2343 = vpop.f32.mrf.mxu0
      %v2344 = vadd.f32 0.0, %v2343
      %v2345 = vpop.f32.mrf.mxu0
      %2346 = vmatprep.mubr.f32.mxu0 0.0
      %2347 = vmatmul.mubr.f32.gmra.mxu0 %v1998
      %v2348 = vpop.f32.mrf.mxu0
      %v2349 = vadd.f32 0.0, %v2348
      %v2350 = vpop.f32.mrf.mxu0
      %2351 = vmatprep.mubr.f32.mxu0 0.0
      %2352 = vmatmul.mubr.f32.gmra.mxu0 %v1999
      %v2353 = vpop.f32.mrf.mxu0
      %v2354 = vadd.f32 0.0, %v2353
      %v2355 = vpop.f32.mrf.mxu0
      %2356 = vmatprep.mubr.f32.mxu0 0.0
      %2357 = vmatmul.mubr.f32.gmra.mxu0 %v2000
      %v2358 = vpop.f32.mrf.mxu0
      %v2359 = vadd.f32 0.0, %v2358
      %v2360 = vpop.f32.mrf.mxu0
      %2361 = vmatprep.mubr.f32.mxu0 0.0
      %2362 = vmatmul.mubr.f32.gmra.mxu0 %v2001
      %v2363 = vpop.f32.mrf.mxu0
      %v2364 = vadd.f32 0.0, %v2363
      %v2365 = vpop.f32.mrf.mxu0
      %2366 = vmatprep.mubr.f32.mxu0 0.0
      %2367 = vmatmul.mubr.f32.gmra.mxu0 %v2002
      %v2368 = vpop.f32.mrf.mxu0
      %v2369 = vadd.f32 0.0, %v2368
      %v2370 = vpop.f32.mrf.mxu0
      %2371 = vmatprep.mubr.f32.mxu0 0.0
      %2372 = vmatmul.mubr.f32.gmra.mxu0 %v2003
      %v2373 = vpop.f32.mrf.mxu0
      %v2374 = vadd.f32 0.0, %v2373
      %v2375 = vpop.f32.mrf.mxu0
      %2376 = vmatprep.mubr.f32.mxu0 0.0
      %2377 = vmatmul.mubr.f32.gmra.mxu0 %v2004
      %v2378 = vpop.f32.mrf.mxu0
      %v2379 = vadd.f32 0.0, %v2378
      %v2380 = vpop.f32.mrf.mxu0
      %2381 = vmatprep.mubr.f32.mxu0 0.0
      %2382 = vmatmul.mubr.f32.gmra.mxu0 %v2005
      %v2383 = vpop.f32.mrf.mxu0
      %v2384 = vadd.f32 0.0, %v2383
      %v2385 = vpop.f32.mrf.mxu0
      %2386 = vmatprep.mubr.f32.mxu0 0.0
      %2387 = vmatmul.mubr.f32.gmra.mxu0 %v2006
      %v2388 = vpop.f32.mrf.mxu0
      %v2389 = vadd.f32 0.0, %v2388
      %v2390 = vpop.f32.mrf.mxu0
      %2391 = vmatprep.mubr.f32.mxu0 0.0
      %2392 = vmatmul.mubr.f32.gmra.mxu0 %v2007
      %v2393 = vpop.f32.mrf.mxu0
      %v2394 = vadd.f32 0.0, %v2393
      %v2395 = vpop.f32.mrf.mxu0
      %2396 = vmatprep.mubr.f32.mxu0 0.0
      %2397 = vmatmul.mubr.f32.gmra.mxu0 %v2008
      %v2398 = vpop.f32.mrf.mxu0
      %v2399 = vadd.f32 0.0, %v2398
      %v2400 = vpop.f32.mrf.mxu0
      %2401 = vmatprep.mubr.f32.mxu0 0.0
      %2402 = vmatmul.mubr.f32.gmra.mxu0 %v2009
      %v2403 = vpop.f32.mrf.mxu0
      %v2404 = vadd.f32 0.0, %v2403
      %v2405 = vpop.f32.mrf.mxu0
      %2406 = vmatprep.mubr.f32.mxu0 0.0
      %2407 = vmatmul.mubr.f32.gmra.mxu0 %v2010
      %v2408 = vpop.f32.mrf.mxu0
      %v2409 = vadd.f32 0.0, %v2408
      %v2410 = vpop.f32.mrf.mxu0
      %2411 = vmatprep.mubr.f32.mxu0 0.0
      %2412 = vmatmul.mubr.f32.gmra.mxu0 %v2011
      %v2413 = vpop.f32.mrf.mxu0
      %v2414 = vadd.f32 0.0, %v2413
      %v2415 = vpop.f32.mrf.mxu0
      %2416 = vmatprep.mubr.f32.mxu0 0.0
      %2417 = vmatmul.mubr.f32.gmra.mxu0 %v2012
      %v2418 = vpop.f32.mrf.mxu0
      %v2419 = vadd.f32 0.0, %v2418
      %v2420 = vpop.f32.mrf.mxu0
      %2421 = vmatprep.mubr.f32.mxu0 0.0
      %2422 = vmatmul.mubr.f32.gmra.mxu0 %v2013
      %v2423 = vpop.f32.mrf.mxu0
      %v2424 = vadd.f32 0.0, %v2423
      %v2425 = vpop.f32.mrf.mxu0
      %2426 = vmatprep.mubr.f32.mxu0 0.0
      %2427 = vmatmul.mubr.f32.gmra.mxu0 %v2014
      %v2428 = vpop.f32.mrf.mxu0
      %v2429 = vadd.f32 0.0, %v2428
      %v2430 = vpop.f32.mrf.mxu0
      %2431 = vmatprep.mubr.f32.mxu0 0.0
      %2432 = vmatmul.mubr.f32.gmra.mxu0 %v2015
      %v2433 = vpop.f32.mrf.mxu0
      %v2434 = vadd.f32 0.0, %v2433
      %v2435 = vpop.f32.mrf.mxu0
      %2436 = vmatprep.mubr.f32.mxu0 0.0
      %2437 = vmatmul.mubr.f32.gmra.mxu0 %v2016
      %v2438 = vpop.f32.mrf.mxu0
      %v2439 = vadd.f32 0.0, %v2438
      %v2440 = vpop.f32.mrf.mxu0
      %2441 = vmatprep.mubr.f32.mxu0 0.0
      %2442 = vmatmul.mubr.f32.gmra.mxu0 %v2017
      %v2443 = vpop.f32.mrf.mxu0
      %v2444 = vadd.f32 0.0, %v2443
      %v2445 = vpop.f32.mrf.mxu0
      %2446 = vmatprep.mubr.f32.mxu0 0.0
      %2447 = vmatmul.mubr.f32.gmra.mxu0 %v2018
      %v2448 = vpop.f32.mrf.mxu0
      %v2449 = vadd.f32 0.0, %v2448
      %v2450 = vpop.f32.mrf.mxu0
      %2451 = vmatprep.mubr.f32.mxu0 0.0
      %2452 = vmatmul.mubr.f32.gmra.mxu0 %v2019
      %v2453 = vpop.f32.mrf.mxu0
      %v2454 = vadd.f32 0.0, %v2453
      %v2455 = vpop.f32.mrf.mxu0
      %2456 = vmatprep.mubr.f32.mxu0 0.0
      %2457 = vmatmul.mubr.f32.gmra.mxu0 %v2020
      %v2458 = vpop.f32.mrf.mxu0
      %v2459 = vadd.f32 0.0, %v2458
      %v2460 = vpop.f32.mrf.mxu0
      %2461 = vmatprep.mubr.f32.mxu0 0.0
      %2462 = vmatmul.mubr.f32.gmra.mxu0 %v2021
      %v2463 = vpop.f32.mrf.mxu0
      %v2464 = vadd.f32 0.0, %v2463
      %v2465 = vpop.f32.mrf.mxu0
      %2466 = vmatprep.mubr.f32.mxu0 0.0
      %2467 = vmatmul.mubr.f32.gmra.mxu0 %v2022
      %v2468 = vpop.f32.mrf.mxu0
      %v2469 = vadd.f32 0.0, %v2468
      %v2470 = vpop.f32.mrf.mxu0
      %2471 = vmatprep.mubr.f32.mxu0 0.0
      %2472 = vmatmul.mubr.f32.gmra.mxu0 %v2023
      %v2473 = vpop.f32.mrf.mxu0
      %v2474 = vadd.f32 0.0, %v2473
      %v2475 = vpop.f32.mrf.mxu0
      %2476 = vmatprep.mubr.f32.mxu0 0.0
      %2477 = vmatmul.mubr.f32.gmra.mxu0 %v2024
      %v2478 = vpop.f32.mrf.mxu0
      %v2479 = vadd.f32 0.0, %v2478
      %v2480 = vpop.f32.mrf.mxu0
      %2481 = vmatprep.mubr.f32.mxu0 0.0
      %2482 = vmatmul.mubr.f32.gmra.mxu0 %v2025
      %v2483 = vpop.f32.mrf.mxu0
      %v2484 = vadd.f32 0.0, %v2483
      %v2485 = vpop.f32.mrf.mxu0
      %2486 = vmatprep.mubr.f32.mxu0 0.0
      %2487 = vmatmul.mubr.f32.gmra.mxu0 %v2026
      %v2488 = vpop.f32.mrf.mxu0
      %v2489 = vadd.f32 0.0, %v2488
      %v2490 = vpop.f32.mrf.mxu0
      %2491 = vmatprep.mubr.f32.mxu0 0.0
      %2492 = vmatmul.mubr.f32.gmra.mxu0 %v2027
      %v2493 = vpop.f32.mrf.mxu0
      %v2494 = vadd.f32 0.0, %v2493
      %v2495 = vpop.f32.mrf.mxu0
      %2496 = vmatprep.mubr.f32.mxu0 0.0
      %2497 = vmatmul.mubr.f32.gmra.mxu0 %v2028
      %v2498 = vpop.f32.mrf.mxu0
      %v2499 = vadd.f32 0.0, %v2498
      %v2500 = vpop.f32.mrf.mxu0
      %2501 = vmatprep.mubr.f32.mxu0 0.0
      %2502 = vmatmul.mubr.f32.gmra.mxu0 %v2029
      %v2503 = vpop.f32.mrf.mxu0
      %v2504 = vadd.f32 0.0, %v2503
      %v2505 = vpop.f32.mrf.mxu0
      %2506 = vmatprep.mubr.f32.mxu0 0.0
      %2507 = vmatmul.mubr.f32.gmra.mxu0 %v2030
      %v2508 = vpop.f32.mrf.mxu0
      %v2509 = vadd.f32 0.0, %v2508
      %v2510 = vpop.f32.mrf.mxu0
      %2511 = vmatprep.mubr.f32.mxu0 0.0
      %2512 = vmatmul.mubr.f32.gmra.mxu0 %v2031
      %v2513 = vpop.f32.mrf.mxu0
      %v2514 = vadd.f32 0.0, %v2513
      %v2515 = vpop.f32.mrf.mxu0
      %2516 = vmatprep.mubr.f32.mxu0 0.0
      %2517 = vmatmul.mubr.f32.gmra.mxu0 %v2032
      %v2518 = vpop.f32.mrf.mxu0
      %v2519 = vadd.f32 0.0, %v2518
      %v2520 = vpop.f32.mrf.mxu0
      %2521 = vmatprep.mubr.f32.mxu0 0.0
      %2522 = vmatmul.mubr.f32.gmra.mxu0 %v2033
      %v2523 = vpop.f32.mrf.mxu0
      %v2524 = vadd.f32 0.0, %v2523
      %v2525 = vpop.f32.mrf.mxu0
      %2526 = vmatprep.mubr.f32.mxu0 0.0
      %2527 = vmatmul.mubr.f32.gmra.mxu0 %v2034
      %v2528 = vpop.f32.mrf.mxu0
      %v2529 = vadd.f32 0.0, %v2528
      %v2530 = vpop.f32.mrf.mxu0
      %2531 = vmatprep.mubr.f32.mxu0 0.0
      %2532 = vmatmul.mubr.f32.gmra.mxu0 %v2035
      %v2533 = vpop.f32.mrf.mxu0
      %v2534 = vadd.f32 0.0, %v2533
      %v2535 = vpop.f32.mrf.mxu0
      %2536 = vmatprep.mubr.f32.mxu0 0.0
      %2537 = vmatmul.mubr.f32.gmra.mxu0 %v2036
      %v2538 = vpop.f32.mrf.mxu0
      %v2539 = vadd.f32 0.0, %v2538
      %v2540 = vpop.f32.mrf.mxu0
      %2541 = vmatprep.mubr.f32.mxu0 0.0
      %2542 = vmatmul.mubr.f32.gmra.mxu0 %v2037
      %v2543 = vpop.f32.mrf.mxu0
      %v2544 = vadd.f32 0.0, %v2543
      %v2545 = vpop.f32.mrf.mxu0
      %2546 = vmatprep.mubr.f32.mxu0 0.0
      %2547 = vmatmul.mubr.f32.gmra.mxu0 %v2038
      %v2548 = vpop.f32.mrf.mxu0
      %v2549 = vadd.f32 0.0, %v2548
      %v2550 = vpop.f32.mrf.mxu0
      %2551 = vmatprep.mubr.f32.mxu0 0.0
      %2552 = vmatmul.mubr.f32.gmra.mxu0 %v2039
      %v2553 = vpop.f32.mrf.mxu0
      %v2554 = vadd.f32 0.0, %v2553
      %v2555 = vpop.f32.mrf.mxu0
      %2556 = vmatprep.mubr.f32.mxu0 0.0
      %2557 = vmatmul.mubr.f32.gmra.mxu0 %v2040
      %v2558 = vpop.f32.mrf.mxu0
      %v2559 = vadd.f32 0.0, %v2558
      %v2560 = vpop.f32.mrf.mxu0
      %2561 = vmatprep.mubr.f32.mxu0 0.0
      %2562 = vmatmul.mubr.f32.gmra.mxu0 %v2041
      %v2563 = vpop.f32.mrf.mxu0
      %v2564 = vadd.f32 0.0, %v2563
      %v2565 = vpop.f32.mrf.mxu0
      %2566 = vmatprep.mubr.f32.mxu0 0.0
      %2567 = vmatmul.mubr.f32.gmra.mxu0 %v2042
      %v2568 = vpop.f32.mrf.mxu0
      %v2569 = vadd.f32 0.0, %v2568
      %v2570 = vpop.f32.mrf.mxu0
      %2571 = vmatprep.mubr.f32.mxu0 0.0
      %2572 = vmatmul.mubr.f32.gmra.mxu0 %v2043
      %v2573 = vpop.f32.mrf.mxu0
      %v2574 = vadd.f32 0.0, %v2573
      %v2575 = vpop.f32.mrf.mxu0
      %2576 = vmatprep.mubr.f32.mxu0 0.0
      %2577 = vmatmul.mubr.f32.gmra.mxu0 %v2044
      %v2578 = vpop.f32.mrf.mxu0
      %v2579 = vadd.f32 0.0, %v2578
      %v2580 = vpop.f32.mrf.mxu0
      %2581 = vmatprep.mubr.f32.mxu0 0.0
      %2582 = vmatmul.mubr.f32.gmra.mxu0 %v2045
      %v2583 = vpop.f32.mrf.mxu0
      %v2584 = vadd.f32 0.0, %v2583
      %v2585 = vpop.f32.mrf.mxu0
      %2586 = vdwg.mxu0
      %v2587 = vmax.f32 %v2129, 1e-24
      %v2588 = vmax.f32 %v2134, 1e-24
      %v2589 = vmax.f32 %v2139, 1e-24
      %v2590 = vmax.f32 %v2144, 1e-24
      %v2591 = vmax.f32 %v2149, 1e-24
      %v2592 = vmax.f32 %v2154, 1e-24
      %v2593 = vmax.f32 %v2159, 1e-24
      %v2594 = vmax.f32 %v2164, 1e-24
      %v2595 = vmax.f32 %v2169, 1e-24
      %v2596 = vmax.f32 %v2174, 1e-24
      %v2597 = vmax.f32 %v2179, 1e-24
      %v2598 = vmax.f32 %v2184, 1e-24
      %v2599 = vmax.f32 %v2189, 1e-24
      %v2600 = vmax.f32 %v2194, 1e-24
      %v2601 = vmax.f32 %v2199, 1e-24
      %v2602 = vmax.f32 %v2204, 1e-24
      %v2603 = vmax.f32 %v2209, 1e-24
      %v2604 = vmax.f32 %v2214, 1e-24
      %v2605 = vmax.f32 %v2219, 1e-24
      %v2606 = vmax.f32 %v2224, 1e-24
      %v2607 = vmax.f32 %v2229, 1e-24
      %v2608 = vmax.f32 %v2234, 1e-24
      %v2609 = vmax.f32 %v2239, 1e-24
      %v2610 = vmax.f32 %v2244, 1e-24
      %v2611 = vmax.f32 %v2249, 1e-24
      %v2612 = vmax.f32 %v2254, 1e-24
      %v2613 = vmax.f32 %v2259, 1e-24
      %v2614 = vmax.f32 %v2264, 1e-24
      %v2615 = vmax.f32 %v2269, 1e-24
      %v2616 = vmax.f32 %v2274, 1e-24
      %v2617 = vmax.f32 %v2279, 1e-24
      %v2618 = vmax.f32 %v2284, 1e-24
      %v2619 = vmax.f32 %v2289, 1e-24
      %v2620 = vmax.f32 %v2294, 1e-24
      %v2621 = vmax.f32 %v2299, 1e-24
      %v2622 = vmax.f32 %v2304, 1e-24
      %v2623 = vmax.f32 %v2309, 1e-24
      %v2624 = vmax.f32 %v2314, 1e-24
      %v2625 = vmax.f32 %v2319, 1e-24
      %v2626 = vmax.f32 %v2324, 1e-24
      %v2627 = vmax.f32 %v2329, 1e-24
      %v2628 = vmax.f32 %v2334, 1e-24
      %v2629 = vmax.f32 %v2339, 1e-24
      %v2630 = vmax.f32 %v2344, 1e-24
      %v2631 = vmax.f32 %v2349, 1e-24
      %v2632 = vmax.f32 %v2354, 1e-24
      %v2633 = vmax.f32 %v2359, 1e-24
      %v2634 = vmax.f32 %v2364, 1e-24
      %v2635 = vmax.f32 %v2369, 1e-24
      %v2636 = vmax.f32 %v2374, 1e-24
      %v2637 = vmax.f32 %v2379, 1e-24
      %v2638 = vmax.f32 %v2384, 1e-24
      %v2639 = vmax.f32 %v2389, 1e-24
      %v2640 = vmax.f32 %v2394, 1e-24
      %v2641 = vmax.f32 %v2399, 1e-24
      %v2642 = vmax.f32 %v2404, 1e-24
      %v2643 = vmax.f32 %v2409, 1e-24
      %v2644 = vmax.f32 %v2414, 1e-24
      %v2645 = vmax.f32 %v2419, 1e-24
      %v2646 = vmax.f32 %v2424, 1e-24
      %v2647 = vmax.f32 %v2429, 1e-24
      %v2648 = vmax.f32 %v2434, 1e-24
      %v2649 = vmax.f32 %v2439, 1e-24
      %v2650 = vmax.f32 %v2444, 1e-24
      %v2651 = vmax.f32 %v2449, 1e-24
      %v2652 = vmax.f32 %v2454, 1e-24
      %v2653 = vmax.f32 %v2459, 1e-24
      %v2654 = vmax.f32 %v2464, 1e-24
      %v2655 = vmax.f32 %v2469, 1e-24
      %v2656 = vmax.f32 %v2474, 1e-24
      %v2657 = vmax.f32 %v2479, 1e-24
      %v2658 = vmax.f32 %v2484, 1e-24
      %v2659 = vmax.f32 %v2489, 1e-24
      %v2660 = vmax.f32 %v2494, 1e-24
      %v2661 = vmax.f32 %v2499, 1e-24
      %v2662 = vmax.f32 %v2504, 1e-24
      %v2663 = vmax.f32 %v2509, 1e-24
      %v2664 = vmax.f32 %v2514, 1e-24
      %v2665 = vmax.f32 %v2519, 1e-24
      %v2666 = vmax.f32 %v2524, 1e-24
      %v2667 = vmax.f32 %v2529, 1e-24
      %v2668 = vmax.f32 %v2534, 1e-24
      %v2669 = vmax.f32 %v2539, 1e-24
      %v2670 = vmax.f32 %v2544, 1e-24
      %v2671 = vmax.f32 %v2549, 1e-24
      %v2672 = vmax.f32 %v2554, 1e-24
      %v2673 = vmax.f32 %v2559, 1e-24
      %v2674 = vmax.f32 %v2564, 1e-24
      %v2675 = vmax.f32 %v2569, 1e-24
      %v2676 = vmax.f32 %v2574, 1e-24
      %v2677 = vmax.f32 %v2579, 1e-24
      %v2678 = vmax.f32 %v2584, 1e-24
      %v2679 = vrsqrt.pop %v2587
      %v2680 = vrsqrt.pop %v2588
      %v2681 = vrsqrt.pop %v2589
      %v2682 = vrsqrt.pop %v2590
      %v2683 = vrsqrt.pop %v2591
      %v2684 = vrsqrt.pop %v2592
      %v2685 = vrsqrt.pop %v2593
      %v2686 = vrsqrt.pop %v2594
      %v2687 = vrsqrt.pop %v2595
      %v2688 = vrsqrt.pop %v2596
      %v2689 = vrsqrt.pop %v2597
      %v2690 = vrsqrt.pop %v2598
      %v2691 = vrsqrt.pop %v2599
      %v2692 = vrsqrt.pop %v2600
      %v2693 = vrsqrt.pop %v2601
      %v2694 = vrsqrt.pop %v2602
      %v2695 = vrsqrt.pop %v2603
      %v2696 = vrsqrt.pop %v2604
      %v2697 = vrsqrt.pop %v2605
      %v2698 = vrsqrt.pop %v2606
      %v2699 = vrsqrt.pop %v2607
      %v2700 = vrsqrt.pop %v2608
      %v2701 = vrsqrt.pop %v2609
      %v2702 = vrsqrt.pop %v2610
      %v2703 = vrsqrt.pop %v2611
      %v2704 = vrsqrt.pop %v2612
      %v2705 = vrsqrt.pop %v2613
      %v2706 = vrsqrt.pop %v2614
      %v2707 = vrsqrt.pop %v2615
      %v2708 = vrsqrt.pop %v2616
      %v2709 = vrsqrt.pop %v2617
      %v2710 = vrsqrt.pop %v2618
      %v2711 = vrsqrt.pop %v2619
      %v2712 = vrsqrt.pop %v2620
      %v2713 = vrsqrt.pop %v2621
      %v2714 = vrsqrt.pop %v2622
      %v2715 = vrsqrt.pop %v2623
      %v2716 = vrsqrt.pop %v2624
      %v2717 = vrsqrt.pop %v2625
      %v2718 = vrsqrt.pop %v2626
      %v2719 = vrsqrt.pop %v2627
      %v2720 = vrsqrt.pop %v2628
      %v2721 = vrsqrt.pop %v2629
      %v2722 = vrsqrt.pop %v2630
      %v2723 = vrsqrt.pop %v2631
      %v2724 = vrsqrt.pop %v2632
      %v2725 = vrsqrt.pop %v2633
      %v2726 = vrsqrt.pop %v2634
      %v2727 = vrsqrt.pop %v2635
      %v2728 = vrsqrt.pop %v2636
      %v2729 = vrsqrt.pop %v2637
      %v2730 = vrsqrt.pop %v2638
      %v2731 = vrsqrt.pop %v2639
      %v2732 = vrsqrt.pop %v2640
      %v2733 = vrsqrt.pop %v2641
      %v2734 = vrsqrt.pop %v2642
      %v2735 = vrsqrt.pop %v2643
      %v2736 = vrsqrt.pop %v2644
      %v2737 = vrsqrt.pop %v2645
      %v2738 = vrsqrt.pop %v2646
      %v2739 = vrsqrt.pop %v2647
      %v2740 = vrsqrt.pop %v2648
      %v2741 = vrsqrt.pop %v2649
      %v2742 = vrsqrt.pop %v2650
      %v2743 = vrsqrt.pop %v2651
      %v2744 = vrsqrt.pop %v2652
      %v2745 = vrsqrt.pop %v2653
      %v2746 = vrsqrt.pop %v2654
      %v2747 = vrsqrt.pop %v2655
      %v2748 = vrsqrt.pop %v2656
      %v2749 = vrsqrt.pop %v2657
      %v2750 = vrsqrt.pop %v2658
      %v2751 = vrsqrt.pop %v2659
      %v2752 = vrsqrt.pop %v2660
      %v2753 = vrsqrt.pop %v2661
      %v2754 = vrsqrt.pop %v2662
      %v2755 = vrsqrt.pop %v2663
      %v2756 = vrsqrt.pop %v2664
      %v2757 = vrsqrt.pop %v2665
      %v2758 = vrsqrt.pop %v2666
      %v2759 = vrsqrt.pop %v2667
      %v2760 = vrsqrt.pop %v2668
      %v2761 = vrsqrt.pop %v2669
      %v2762 = vrsqrt.pop %v2670
      %v2763 = vrsqrt.pop %v2671
      %v2764 = vrsqrt.pop %v2672
      %v2765 = vrsqrt.pop %v2673
      %v2766 = vrsqrt.pop %v2674
      %v2767 = vrsqrt.pop %v2675
      %v2768 = vrsqrt.pop %v2676
      %v2769 = vrsqrt.pop %v2677
      %v2770 = vrsqrt.pop %v2678
      %v2771 = vmul.f32 %v1496, %v2679
      %v2772 = vmul.f32 %v1501, %v2680
      %v2773 = vmul.f32 %v1506, %v2681
      %v2774 = vmul.f32 %v1511, %v2682
      %v2775 = vmul.f32 %v1516, %v2683
      %v2776 = vmul.f32 %v1521, %v2684
      %v2777 = vmul.f32 %v1526, %v2685
      %v2778 = vmul.f32 %v1531, %v2686
      %v2779 = vmul.f32 %v1536, %v2687
      %v2780 = vmul.f32 %v1541, %v2688
      %v2781 = vmul.f32 %v1546, %v2689
      %v2782 = vmul.f32 %v1551, %v2690
      %v2783 = vmul.f32 %v1556, %v2691
      %v2784 = vmul.f32 %v1561, %v2692
      %v2785 = vmul.f32 %v1566, %v2693
      %v2786 = vmul.f32 %v1571, %v2694
      %v2787 = vmul.f32 %v1576, %v2695
      %v2788 = vmul.f32 %v1581, %v2696
      %v2789 = vmul.f32 %v1586, %v2697
      %v2790 = vmul.f32 %v1591, %v2698
      %v2791 = vmul.f32 %v1596, %v2699
      %v2792 = vmul.f32 %v1601, %v2700
      %v2793 = vmul.f32 %v1606, %v2701
      %v2794 = vmul.f32 %v1611, %v2702
      %v2795 = vmul.f32 %v1616, %v2703
      %v2796 = vmul.f32 %v1621, %v2704
      %v2797 = vmul.f32 %v1626, %v2705
      %v2798 = vmul.f32 %v1631, %v2706
      %v2799 = vmul.f32 %v1636, %v2707
      %v2800 = vmul.f32 %v1641, %v2708
      %v2801 = vmul.f32 %v1646, %v2709
      %v2802 = vmul.f32 %v1651, %v2710
      %v2803 = vmul.f32 %v1656, %v2711
      %v2804 = vmul.f32 %v1661, %v2712
      %v2805 = vmul.f32 %v1666, %v2713
      %v2806 = vmul.f32 %v1671, %v2714
      %v2807 = vmul.f32 %v1676, %v2715
      %v2808 = vmul.f32 %v1681, %v2716
      %v2809 = vmul.f32 %v1686, %v2717
      %v2810 = vmul.f32 %v1691, %v2718
      %v2811 = vmul.f32 %v1696, %v2719
      %v2812 = vmul.f32 %v1701, %v2720
      %v2813 = vmul.f32 %v1706, %v2721
      %v2814 = vmul.f32 %v1711, %v2722
      %v2815 = vmul.f32 %v1716, %v2723
      %v2816 = vmul.f32 %v1721, %v2724
      %v2817 = vmul.f32 %v1726, %v2725
      %v2818 = vmul.f32 %v1731, %v2726
      %v2819 = vmul.f32 %v1736, %v2727
      %v2820 = vmul.f32 %v1741, %v2728
      %v2821 = vmul.f32 %v1746, %v2729
      %v2822 = vmul.f32 %v1751, %v2730
      %v2823 = vmul.f32 %v1756, %v2731
      %v2824 = vmul.f32 %v1761, %v2732
      %v2825 = vmul.f32 %v1766, %v2733
      %v2826 = vmul.f32 %v1771, %v2734
      %v2827 = vmul.f32 %v1776, %v2735
      %v2828 = vmul.f32 %v1781, %v2736
      %v2829 = vmul.f32 %v1786, %v2737
      %v2830 = vmul.f32 %v1791, %v2738
      %v2831 = vmul.f32 %v1796, %v2739
      %v2832 = vmul.f32 %v1801, %v2740
      %v2833 = vmul.f32 %v1806, %v2741
      %v2834 = vmul.f32 %v1811, %v2742
      %v2835 = vmul.f32 %v1816, %v2743
      %v2836 = vmul.f32 %v1821, %v2744
      %v2837 = vmul.f32 %v1826, %v2745
      %v2838 = vmul.f32 %v1831, %v2746
      %v2839 = vmul.f32 %v1836, %v2747
      %v2840 = vmul.f32 %v1841, %v2748
      %v2841 = vmul.f32 %v1846, %v2749
      %v2842 = vmul.f32 %v1851, %v2750
      %v2843 = vmul.f32 %v1856, %v2751
      %v2844 = vmul.f32 %v1861, %v2752
      %v2845 = vmul.f32 %v1866, %v2753
      %v2846 = vmul.f32 %v1871, %v2754
      %v2847 = vmul.f32 %v1876, %v2755
      %v2848 = vmul.f32 %v1881, %v2756
      %v2849 = vmul.f32 %v1886, %v2757
      %v2850 = vmul.f32 %v1891, %v2758
      %v2851 = vmul.f32 %v1896, %v2759
      %v2852 = vmul.f32 %v1901, %v2760
      %v2853 = vmul.f32 %v1906, %v2761
      %v2854 = vmul.f32 %v1911, %v2762
      %v2855 = vmul.f32 %v1916, %v2763
      %v2856 = vmul.f32 %v1921, %v2764
      %v2857 = vmul.f32 %v1926, %v2765
      %v2858 = vmul.f32 %v1931, %v2766
      %v2859 = vmul.f32 %v1936, %v2767
      %v2860 = vmul.f32 %v1941, %v2768
      %v2861 = vmul.f32 %v1946, %v2769
      %v2862 = vmul.f32 %v1951, %v2770
      %2863 = vst [vmem:[%s280] sm:$0xff] %v2771
      %2864 = vst [vmem:[%s280 + $0x8] sm:$0xff] %v2772
      %2865 = vst [vmem:[%s280 + $0x10] sm:$0xff] %v2773
      %2866 = vst [vmem:[%s280 + $0x18] sm:$0xff] %v2774
      %2867 = vst [vmem:[%s280 + $0x20] sm:$0xff] %v2775
      %2868 = vst [vmem:[%s280 + $0x28] sm:$0xff] %v2776
      %2869 = vst [vmem:[%s280 + $0x30] sm:$0xff] %v2777
      %2870 = vst [vmem:[%s280 + $0x38] sm:$0xff] %v2778
      %2871 = vst [vmem:[%s280 + $0x40] sm:$0xff] %v2779
      %2872 = vst [vmem:[%s280 + $0x48] sm:$0xff] %v2780
      %2873 = vst [vmem:[%s280 + $0x50] sm:$0xff] %v2781
      %2874 = vst [vmem:[%s280 + $0x58] sm:$0xff] %v2782
      %2875 = vst [vmem:[%s280 + $0x60] sm:$0xff] %v2783
      %2876 = vst [vmem:[%s280 + $0x68] sm:$0xff] %v2784
      %2877 = vst [vmem:[%s280 + $0x70] sm:$0xff] %v2785
      %2878 = vst [vmem:[%s280 + $0x78] sm:$0xff] %v2786
      %2879 = vst [vmem:[%s280 + $0x80] sm:$0xff] %v2787
      %2880 = vst [vmem:[%s280 + $0x88] sm:$0xff] %v2788
      %2881 = vst [vmem:[%s280 + $0x90] sm:$0xff] %v2789
      %2882 = vst [vmem:[%s280 + $0x98] sm:$0xff] %v2790
      %2883 = vst [vmem:[%s280 + $0xa0] sm:$0xff] %v2791
      %2884 = vst [vmem:[%s280 + $0xa8] sm:$0xff] %v2792
      %2885 = vst [vmem:[%s280 + $0xb0] sm:$0xff] %v2793
      %2886 = vst [vmem:[%s280 + $0xb8] sm:$0xff] %v2794
      %2887 = vst [vmem:[%s280 + $0xc0] sm:$0xff] %v2795
      %2888 = vst [vmem:[%s280 + $0xc8] sm:$0xff] %v2796
      %2889 = vst [vmem:[%s280 + $0xd0] sm:$0xff] %v2797
      %2890 = vst [vmem:[%s280 + $0xd8] sm:$0xff] %v2798
      %2891 = vst [vmem:[%s280 + $0xe0] sm:$0xff] %v2799
      %2892 = vst [vmem:[%s280 + $0xe8] sm:$0xff] %v2800
      %2893 = vst [vmem:[%s280 + $0xf0] sm:$0xff] %v2801
      %2894 = vst [vmem:[%s280 + $0xf8] sm:$0xff] %v2802
      %2895 = vst [vmem:[%s280 + $0x100] sm:$0xff] %v2803
      %2896 = vst [vmem:[%s280 + $0x108] sm:$0xff] %v2804
      %2897 = vst [vmem:[%s280 + $0x110] sm:$0xff] %v2805
      %2898 = vst [vmem:[%s280 + $0x118] sm:$0xff] %v2806
      %2899 = vst [vmem:[%s280 + $0x120] sm:$0xff] %v2807
      %2900 = vst [vmem:[%s280 + $0x128] sm:$0xff] %v2808
      %2901 = vst [vmem:[%s280 + $0x130] sm:$0xff] %v2809
      %2902 = vst [vmem:[%s280 + $0x138] sm:$0xff] %v2810
      %2903 = vst [vmem:[%s280 + $0x140] sm:$0xff] %v2811
      %2904 = vst [vmem:[%s280 + $0x148] sm:$0xff] %v2812
      %2905 = vst [vmem:[%s280 + $0x150] sm:$0xff] %v2813
      %2906 = vst [vmem:[%s280 + $0x158] sm:$0xff] %v2814
      %2907 = vst [vmem:[%s280 + $0x160] sm:$0xff] %v2815
      %2908 = vst [vmem:[%s280 + $0x168] sm:$0xff] %v2816
      %2909 = vst [vmem:[%s280 + $0x170] sm:$0xff] %v2817
      %2910 = vst [vmem:[%s280 + $0x178] sm:$0xff] %v2818
      %2911 = vst [vmem:[%s280 + $0x180] sm:$0xff] %v2819
      %2912 = vst [vmem:[%s280 + $0x188] sm:$0xff] %v2820
      %2913 = vst [vmem:[%s280 + $0x190] sm:$0xff] %v2821
      %2914 = vst [vmem:[%s280 + $0x198] sm:$0xff] %v2822
      %2915 = vst [vmem:[%s280 + $0x1a0] sm:$0xff] %v2823
      %2916 = vst [vmem:[%s280 + $0x1a8] sm:$0xff] %v2824
      %2917 = vst [vmem:[%s280 + $0x1b0] sm:$0xff] %v2825
      %2918 = vst [vmem:[%s280 + $0x1b8] sm:$0xff] %v2826
      %2919 = vst [vmem:[%s280 + $0x1c0] sm:$0xff] %v2827
      %2920 = vst [vmem:[%s280 + $0x1c8] sm:$0xff] %v2828
      %2921 = vst [vmem:[%s280 + $0x1d0] sm:$0xff] %v2829
      %2922 = vst [vmem:[%s280 + $0x1d8] sm:$0xff] %v2830
      %2923 = vst [vmem:[%s280 + $0x1e0] sm:$0xff] %v2831
      %2924 = vst [vmem:[%s280 + $0x1e8] sm:$0xff] %v2832
      %2925 = vst [vmem:[%s280 + $0x1f0] sm:$0xff] %v2833
      %2926 = vst [vmem:[%s280 + $0x1f8] sm:$0xff] %v2834
      %2927 = vst [vmem:[%s280 + $0x200] sm:$0xff] %v2835
      %2928 = vst [vmem:[%s280 + $0x208] sm:$0xff] %v2836
      %2929 = vst [vmem:[%s280 + $0x210] sm:$0xff] %v2837
      %2930 = vst [vmem:[%s280 + $0x218] sm:$0xff] %v2838
      %2931 = vst [vmem:[%s280 + $0x220] sm:$0xff] %v2839
      %2932 = vst [vmem:[%s280 + $0x228] sm:$0xff] %v2840
      %2933 = vst [vmem:[%s280 + $0x230] sm:$0xff] %v2841
      %2934 = vst [vmem:[%s280 + $0x238] sm:$0xff] %v2842
      %2935 = vst [vmem:[%s280 + $0x240] sm:$0xff] %v2843
      %2936 = vst [vmem:[%s280 + $0x248] sm:$0xff] %v2844
      %2937 = vst [vmem:[%s280 + $0x250] sm:$0xff] %v2845
      %2938 = vst [vmem:[%s280 + $0x258] sm:$0xff] %v2846
      %2939 = vst [vmem:[%s280 + $0x260] sm:$0xff] %v2847
      %2940 = vst [vmem:[%s280 + $0x268] sm:$0xff] %v2848
      %2941 = vst [vmem:[%s280 + $0x270] sm:$0xff] %v2849
      %2942 = vst [vmem:[%s280 + $0x278] sm:$0xff] %v2850
      %2943 = vst [vmem:[%s280 + $0x280] sm:$0xff] %v2851
      %2944 = vst [vmem:[%s280 + $0x288] sm:$0xff] %v2852
      %2945 = vst [vmem:[%s280 + $0x290] sm:$0xff] %v2853
      %2946 = vst [vmem:[%s280 + $0x298] sm:$0xff] %v2854
      %2947 = vst [vmem:[%s280 + $0x2a0] sm:$0xff] %v2855
      %2948 = vst [vmem:[%s280 + $0x2a8] sm:$0xff] %v2856
      %2949 = vst [vmem:[%s280 + $0x2b0] sm:$0xff] %v2857
      %2950 = vst [vmem:[%s280 + $0x2b8] sm:$0xff] %v2858
      %2951 = vst [vmem:[%s280 + $0x2c0] sm:$0xff] %v2859
      %2952 = vst [vmem:[%s280 + $0x2c8] sm:$0xff] %v2860
      %2953 = vst [vmem:[%s280 + $0x2d0] sm:$0xff] %v2861
      %2954 = vst [vmem:[%s280 + $0x2d8] sm:$0xff] %v2862
      %s2955 = smul.u32 92, %s18
      %p2956 = scmp.lt.s32.totalorder %s2955, 275
      %s2957 = scalar_select %p2956, %s2955, 275
      %s2958 = smul.addr %s2957, 8
      %s2959 = scalar_lea.vmem %s7, %s2958
      // Predicated region
      $region49: #{projection_head_forward.5} parent=47 // pred_check
        %p2960 = pneg %p188
      $region50: #{projection_head_forward.5} parent=47 // pred_check_branch
        %2962 = sbr.rel (%p2960) target = $region52
      $region51: #{projection_head_forward.5} parent=47 // pred_region
        %s2963 = smul.u32 92, %s18
      $region52: #{projection_head_forward.5} parent=47 // pred_fallthru
        _
    $region48: #{projection_head_forward.5} parent=5 // pred_fallthru
      _
    %p2964 = scmp.le.s32.totalorder 2, %s13
    // Predicated region
    $region53: #{projection_head_forward.5} parent=5 // pred_check
      %p2965 = pneg %p2964
    $region54: #{projection_head_forward.5} parent=5 // pred_check_branch
      %2967 = sbr.rel (%p2965) target = $region56
    $region55: #{projection_head_forward.5} parent=5 // pred_region
      %s2968 = ssub.s32 %s13, 2
      // Predicated region
      $region57: #{projection_head_forward.5} parent=55 // pred_check
        %p2969 = pneg %p194
      $region58: #{projection_head_forward.5} parent=55 // pred_check_branch
        %2971 = sbr.rel (%p2969) target = $region60
      $region59: #{projection_head_forward.5} parent=55 // pred_region
        %s2972 = smul.u32 92, %s19
        %p2973 = scmp.lt.s32.totalorder %s2972, 275
        %s2974 = scalar_select %p2973, %s2972, 275
        %s2975 = smul.addr %s2974, 8
        %s2976 = scalar_lea.vmem %s7, %s2975
      $region60: #{projection_head_forward.5} parent=55 // pred_fallthru
        _
    $region56: #{projection_head_forward.5} parent=5 // pred_fallthru
      _
  $region6: #{projection_head_forward.5} parent=0 // loop_footer
    %s17 = sadd.s32 1, %s13
  $region7: #{projection_head_forward.5} parent=0 // loop_footer_branch
    %12 = sbr.rel target = $region3
  $region8: #{projection_head_forward.5} parent=0 // loop_exit
    _

</llo_original>
